<compile_context>
chip_gen: v5e
topology: v5e:2x2
jax: 0.10.0
libtpu: 0.0.40
codegen_flags: <defaults>
</compile_context>

<pallas_src>
import functools

import jax
import jax.numpy as jnp
from jax import lax
from jax.experimental import pallas as pl
from jax.experimental.pallas import tpu as pltpu
import numpy as np


def _bottleneck_kernel(x_ref, w1_ref, b1_ref, w2_ref, b2_ref, w3_ref, b3_ref,
                       out_ref, h1_ref, *, row_block):
    """One grid step = one row strip of one image.

    x_ref  : (H, W, Cin)   bf16  full image, resident across the strip axis
    w1_ref : (Cin, C)      bf16  1x1 conv1 (BN1 scale folded in)
    w2_ref : (9*C, C)      bf16  3x3 conv2 packed for im2col (BN2 folded in)
    w3_ref : (C, Cin)      bf16  1x1 conv3 (BN3 scale folded in)
    b*_ref : (1, C*)       f32   folded BN biases
    out_ref: (TH, W, Cin)  bf16  output row strip
    h1_ref : (TH+2, W, C)  bf16  VMEM scratch holding conv1 output (+halo)
    """
    TH = row_block
    H, W, Cin = x_ref.shape
    C = w1_ref.shape[1]

    s = pl.program_id(1)
    S = pl.num_programs(1)
    row0 = pl.multiple_of(s * TH, TH)
    top_i = jnp.maximum(row0 - 1, 0)
    bot_i = jnp.minimum(row0 + TH, H - 1)

    # Extended row strip (+/-1 halo rows), assembled directly in bf16.
    x_mid = x_ref[pl.ds(row0, TH)]                       # (TH, W, Cin) bf16
    x_top = x_ref[pl.ds(top_i, 1)]                       # (1,  W, Cin)
    x_bot = x_ref[pl.ds(bot_i, 1)]                       # (1,  W, Cin)
    x_ext = jnp.concatenate([x_top, x_mid, x_bot], axis=0)   # (TH+2, W, Cin)

    # ---- conv1 (1x1) + folded-BN bias + relu -------------------------------
    a = x_ext.reshape((TH + 2) * W, Cin)
    h1 = jnp.dot(a, w1_ref[...], preferred_element_type=jnp.float32)
    h1 = jnp.maximum(h1 + b1_ref[...], 0.0)
    h1_ref[...] = h1.reshape(TH + 2, W, C).astype(jnp.bfloat16)

    # Halo rows outside the image must act as conv2's zero padding: zero only
    # the two boundary rows (replaces the old full-tensor iota/where mask).
    @pl.when(s == 0)
    def _():
        h1_ref[0] = jnp.zeros((W, C), jnp.bfloat16)

    @pl.when(s == S - 1)
    def _():
        h1_ref[TH + 1] = jnp.zeros((W, C), jnp.bfloat16)

    # ---- conv2 (3x3, stride 1, pad 1): single im2col matmul, K = 9*C -------
    # TODO(synk): consider pltpu.roll-based dx taps or 9 accumulating K=C dots
    # if a bundle dump shows the vst slot saturating during the im2col build.
    h1v = h1_ref[...]                                     # (TH+2, W, C) bf16
    zcol = jnp.zeros((TH + 2, 1, C), jnp.bfloat16)
    h1p = jnp.concatenate([zcol, h1v, zcol], axis=1)      # (TH+2, W+2, C)
    taps = [h1p[dy:dy + TH, dx:dx + W, :]
            for dy in range(3) for dx in range(3)]
    im2col = jnp.concatenate(taps, axis=-1).reshape(TH * W, 9 * C)
    h2 = jnp.dot(im2col, w2_ref[...], preferred_element_type=jnp.float32)
    h2 = jnp.maximum(h2 + b2_ref[...], 0.0)               # (TH*W, C) f32

    # ---- conv3 (1x1) + bias + residual (f32) + relu ------------------------
    h3 = jnp.dot(h2.astype(jnp.bfloat16), w3_ref[...],
                 preferred_element_type=jnp.float32) + b3_ref[...]
    res = x_mid.reshape(TH * W, Cin).astype(jnp.float32)
    out = jnp.maximum(h3 + res, 0.0)
    out_ref[...] = out.reshape(TH, W, Cin).astype(out_ref.dtype)


def _pick_row_block(H, cap=32):
    """Largest divisor of H that is <= cap.

    Big strips amortize the ~0.35us/step pipeline overhead and the +/-1 halo
    conv1 recompute; the cap bounds per-step VMEM (use ~28 on v7x's 64 MiB,
    up to 56 on v5e/v6e for 56x56 maps)."""
    th = 1
    for d in range(1, min(H, cap) + 1):
        if H % d == 0:
            th = d
    return th


def bottleneck_pallas(x_nhwc, params, *, row_block=None, row_block_cap=32,
                      vmem_limit_bytes=64 * 1024 * 1024):
    """Fused Bottleneck forward (stride=1, downsample=None).

    x_nhwc : (N, H, W, Cin_p) activations, NHWC, channel-padded to the lane
             multiple used by `params` (ideally already bf16).
    Returns NHWC, channel-padded, bf16.
    """
    w1, b1, w2, b2, w3, b3 = params
    Cin_p, C_p = w1.shape
    N, H, W, Cx = x_nhwc.shape
    assert Cx == Cin_p, "input must be channel-padded to match packed weights"
    # TODO(synk): pad + mask W for 14x14 / 7x7 feature maps (keep reshapes
    # view-only); for now require a sublane-aligned width.
    assert W % 8 == 0, "W must be a multiple of 8"
    x = x_nhwc.astype(jnp.bfloat16)

    TH = row_block if row_block is not None else _pick_row_block(H, row_block_cap)
    assert H % TH == 0, "row_block must divide H"
    S = H // TH

    # Advisory cost estimate so XLA schedules neighbors around this
    # memory-bound custom call.
    flops = 2 * N * H * W * (Cin_p * C_p + 9 * C_p * C_p + C_p * Cin_p)
    weight_bytes = sum(int(a.size) * a.dtype.itemsize
                       for a in (w1, b1, w2, b2, w3, b3))
    bytes_accessed = 2 * N * H * W * Cin_p * 2 + weight_bytes   # bf16 in+out
    cost = pl.CostEstimate(flops=flops, transcendentals=0,
                           bytes_accessed=bytes_accessed)

    kernel = functools.partial(_bottleneck_kernel, row_block=TH)
    img_spec = pl.BlockSpec((None, H, W, Cin_p), lambda n, s: (n, 0, 0, 0))
    out_spec = pl.BlockSpec((None, TH, W, Cin_p), lambda n, s: (n, s, 0, 0))
    wshapes = [w1.shape, b1.shape, w2.shape, b2.shape, w3.shape, b3.shape]

    def build(single_buffer_weights):
        if single_buffer_weights:
            # Weights/biases never change across the grid; single-buffering
            # them frees VMEM (matters for layer4-sized weights on v7x/v5e).
            wspecs = [pl.BlockSpec(shp, lambda n, s: (0, 0),
                                   pipeline_mode=pl.Buffered(1))
                      for shp in wshapes]
        else:
            wspecs = [pl.BlockSpec(shp, lambda n, s: (0, 0)) for shp in wshapes]
        return pl.pallas_call(
            kernel,
            out_shape=jax.ShapeDtypeStruct((N, H, W, Cin_p), jnp.bfloat16),
            grid_spec=pltpu.PrefetchScalarGridSpec(
                num_scalar_prefetch=0,
                grid=(N, S),
                in_specs=[img_spec] + wspecs,
                out_specs=out_spec,
                scratch_shapes=[pltpu.VMEM((TH + 2, W, C_p), jnp.bfloat16)]),
            compiler_params=pltpu.CompilerParams(
                # Strips recompute their own halo -> both axes independent;
                # lets v7x shard rows across its 2 TensorCores at small batch.
                dimension_semantics=("parallel", "parallel"),
                vmem_limit_bytes=vmem_limit_bytes),
            cost_estimate=cost,
        )

    try:
        return jax.block_until_ready(build(True)(x, w1, b1, w2, b2, w3, b3))
    except Exception:
        # pipeline_mode=pl.Buffered(1) not supported by this JAX build:
        # fall back to default double-buffered weight blocks.  Any genuine
        # kernel error re-raises from the second build.
        return build(False)(x, w1, b1, w2, b2, w3, b3)


# ---------------------------------------------------------------------------
# Parameter construction / packing and pure-JAX reference.
# ---------------------------------------------------------------------------
def fold_bn(gamma, beta, mean, var, eps=1e-5):
    scale = gamma / jnp.sqrt(var + eps)
    bias = beta - mean * scale
    return scale, bias


def _round_up(n, m=128):
    return ((n + m - 1) // m) * m


def make_params(key, inplanes, planes):
    ks = jax.random.split(key, 6)
    conv1_w = 0.1 * jax.random.normal(ks[0], (planes, inplanes, 1, 1), jnp.float32)
    conv2_w = 0.1 * jax.random.normal(ks[1], (planes, planes, 3, 3), jnp.float32)
    conv3_w = 0.1 * jax.random.normal(ks[2], (planes * 4, planes, 1, 1), jnp.float32)

    def bn_params(k, c):
        k1, k2, k3, k4 = jax.random.split(k, 4)
        gamma = 1.0 + 0.1 * jax.random.normal(k1, (c,), jnp.float32)
        beta = 0.1 * jax.random.normal(k2, (c,), jnp.float32)
        mean = 0.1 * jax.random.normal(k3, (c,), jnp.float32)
        var = 1.0 + 0.1 * jax.random.uniform(k4, (c,), jnp.float32)
        return gamma, beta, mean, var

    bn1 = bn_params(ks[3], planes)
    bn2 = bn_params(ks[4], planes)
    bn3 = bn_params(ks[5], planes * 4)
    return conv1_w, conv2_w, conv3_w, bn1, bn2, bn3


def pack_for_kernel(conv1_w, conv2_w, conv3_w, bn1, bn2, bn3):
    """Fold BN scales into conv weights, pad channels to lane multiples, bf16."""
    C = conv1_w.shape[0]            # planes
    Cin = conv1_w.shape[1]          # inplanes
    Cout = conv3_w.shape[0]         # 4 * planes
    assert Cout == Cin, "downsample=None requires inplanes == 4*planes"

    s1, b1 = fold_bn(*bn1)
    s2, b2 = fold_bn(*bn2)
    s3, b3 = fold_bn(*bn3)

    w1 = jnp.transpose(conv1_w[:, :, 0, 0], (1, 0)) * s1[None, :]       # (Cin, C)
    w2 = (jnp.transpose(conv2_w, (2, 3, 1, 0)).reshape(9, C, C)
          * s2[None, None, :])                                          # (9, C, C)
    w3 = jnp.transpose(conv3_w[:, :, 0, 0], (1, 0)) * s3[None, :]       # (C, Cout)

    Cin_p, C_p = _round_up(Cin), _round_up(C)
    w1p = jnp.zeros((Cin_p, C_p), jnp.float32).at[:Cin, :C].set(w1)
    w2p = jnp.zeros((9, C_p, C_p), jnp.float32).at[:, :C, :C].set(w2)
    w2p = w2p.reshape(9 * C_p, C_p)
    w3p = jnp.zeros((C_p, Cin_p), jnp.float32).at[:C, :Cout].set(w3)

    b1p = jnp.zeros((1, C_p), jnp.float32).at[0, :C].set(b1)
    b2p = jnp.zeros((1, C_p), jnp.float32).at[0, :C].set(b2)
    b3p = jnp.zeros((1, Cin_p), jnp.float32).at[0, :Cout].set(b3)

    return (w1p.astype(jnp.bfloat16), b1p,
            w2p.astype(jnp.bfloat16), b2p,
            w3p.astype(jnp.bfloat16), b3p)


def reference_forward(x, conv1_w, conv2_w, conv3_w, bn1, bn2, bn3):
    """Pure-JAX (XLA) NCHW f32 reference of the Bottleneck forward (eval BN)."""
    dn = ('NCHW', 'OIHW', 'NCHW')

    def bn_apply(y, p):
        s, b = fold_bn(*p)
        return y * s[None, :, None, None] + b[None, :, None, None]

    out = lax.conv_general_dilated(x, conv1_w, (1, 1), 'VALID', dimension_numbers=dn)
    out = jnp.maximum(bn_apply(out, bn1), 0.0)
    out = lax.conv_general_dilated(out, conv2_w, (1, 1), ((1, 1), (1, 1)),
                                   dimension_numbers=dn)
    out = jnp.maximum(bn_apply(out, bn2), 0.0)
    out = lax.conv_general_dilated(out, conv3_w, (1, 1), 'VALID', dimension_numbers=dn)
    out = bn_apply(out, bn3)
    return jnp.maximum(out + x, 0.0)


if __name__ == "__main__":
    key = jax.random.PRNGKey(0)
    k_x, k_p = jax.random.split(key)

    planes = 8
    inplanes = planes * 4          # downsample=None requires inplanes == planes*4
    N, H, W = 2, 16, 16

    x_nchw = jax.random.normal(k_x, (N, inplanes, H, W), jnp.float32)   # NCHW
    conv1_w, conv2_w, conv3_w, bn1, bn2, bn3 = make_params(k_p, inplanes, planes)
    kernel_params = pack_for_kernel(conv1_w, conv2_w, conv3_w, bn1, bn2, bn3)
    Cin_p = kernel_params[0].shape[0]

    # Kernel-side layout: NHWC, channel-padded, bf16.  In a real model the
    # whole backbone stays in this layout, so these conversions are
    # test-harness-only, not part of the kernel path.
    x_k = jnp.transpose(x_nchw, (0, 2, 3, 1))
    x_k = jnp.pad(x_k, ((0, 0), (0, 0), (0, 0), (0, Cin_p - inplanes)))
    x_k = x_k.astype(jnp.bfloat16)

    out_k = jax.block_until_ready(bottleneck_pallas(x_k, kernel_params))
    out = jnp.transpose(out_k[..., :inplanes].astype(jnp.float32), (0, 3, 1, 2))

    # Reference computed on the same bf16-quantized input the kernel sees.
    x_ref_in = jnp.transpose(x_k[..., :inplanes].astype(jnp.float32), (0, 3, 1, 2))
    ref = jax.block_until_ready(
        reference_forward(x_ref_in, conv1_w, conv2_w, conv3_w, bn1, bn2, bn3))

    # bf16 activations/weights (f32 accumulation) vs f32 reference.
    np.testing.assert_allclose(np.asarray(out), np.asarray(ref),
                               rtol=3e-2, atol=3e-2)
    print("KERNEL_OK")
</pallas_src>

<mosaic_0001>
module attributes {stable_mosaic.version = 11 : i64} {
  func.func @_bottleneck_kernel(%arg0: i32, %arg1: i32, %arg2: memref<1x16x16x128xbf16, #tpu.memory_space<vmem>>, %arg3: memref<128x128xbf16, #tpu.memory_space<vmem>>, %arg4: memref<1x128xf32, #tpu.memory_space<vmem>>, %arg5: memref<1152x128xbf16, #tpu.memory_space<vmem>>, %arg6: memref<1x128xf32, #tpu.memory_space<vmem>>, %arg7: memref<128x128xbf16, #tpu.memory_space<vmem>>, %arg8: memref<1x128xf32, #tpu.memory_space<vmem>>, %arg9: memref<1x16x16x128xbf16, #tpu.memory_space<vmem>>, %arg10: memref<18x16x128xbf16, #tpu.memory_space<vmem>>) attributes {dimension_semantics = [#tpu.dimension_semantics<parallel>, #tpu.dimension_semantics<parallel>], iteration_bounds = array<i64: 2, 1>, scalar_prefetch = 0 : i64, scratch_operands = 1 : i64, tpu.core_type = #tpu.core_type<tc>, window_params = [{transform_indices = @transform_0, window_bounds = array<i64: 1, 16, 16, 128>}, {pipeline_mode = #tpu.pipeline_mode<synchronous>, transform_indices = @transform_1, window_bounds = array<i64: 128, 128>}, {pipeline_mode = #tpu.pipeline_mode<synchronous>, transform_indices = @transform_2, window_bounds = array<i64: 1, 128>}, {pipeline_mode = #tpu.pipeline_mode<synchronous>, transform_indices = @transform_3, window_bounds = array<i64: 1152, 128>}, {pipeline_mode = #tpu.pipeline_mode<synchronous>, transform_indices = @transform_4, window_bounds = array<i64: 1, 128>}, {pipeline_mode = #tpu.pipeline_mode<synchronous>, transform_indices = @transform_5, window_bounds = array<i64: 128, 128>}, {pipeline_mode = #tpu.pipeline_mode<synchronous>, transform_indices = @transform_6, window_bounds = array<i64: 1, 128>}, {transform_indices = @transform_7, window_bounds = array<i64: 1, 16, 16, 128>}]} {
    %c16_i32 = arith.constant 16 : i32
    %0 = arith.muli %arg1, %c16_i32 : i32
    %1 = tpu.assume_multiple %0, 16 : i32
    %c1_i32 = arith.constant 1 : i32
    %2 = arith.subi %1, %c1_i32 : i32
    %c0_i32 = arith.constant 0 : i32
    %3 = arith.maxsi %2, %c0_i32 : i32
    %c16_i32_0 = arith.constant 16 : i32
    %4 = arith.addi %1, %c16_i32_0 : i32
    %c15_i32 = arith.constant 15 : i32
    %5 = arith.minsi %4, %c15_i32 : i32
    %c0 = arith.constant 0 : index
    %6 = arith.index_cast %1 : i32 to index
    %c0_1 = arith.constant 0 : index
    %c0_2 = arith.constant 0 : index
    %7 = vector.load %arg2[%c0, %6, %c0_1, %c0_2] : memref<1x16x16x128xbf16, #tpu.memory_space<vmem>>, vector<1x16x16x128xbf16>
    %8 = vector.shape_cast %7 : vector<1x16x16x128xbf16> to vector<16x16x128xbf16>
    %c0_3 = arith.constant 0 : index
    %9 = arith.index_cast %3 : i32 to index
    %c0_4 = arith.constant 0 : index
    %c0_5 = arith.constant 0 : index
    %10 = vector.load %arg2[%c0_3, %9, %c0_4, %c0_5] : memref<1x16x16x128xbf16, #tpu.memory_space<vmem>>, vector<1x1x16x128xbf16>
    %11 = vector.shape_cast %10 : vector<1x1x16x128xbf16> to vector<1x16x128xbf16>
    %c0_6 = arith.constant 0 : index
    %12 = arith.index_cast %5 : i32 to index
    %c0_7 = arith.constant 0 : index
    %c0_8 = arith.constant 0 : index
    %13 = vector.load %arg2[%c0_6, %12, %c0_7, %c0_8] : memref<1x16x16x128xbf16, #tpu.memory_space<vmem>>, vector<1x1x16x128xbf16>
    %14 = vector.shape_cast %13 : vector<1x1x16x128xbf16> to vector<1x16x128xbf16>
    %15 = tpu.concatenate %11, %8, %14 in 0 : vector<1x16x128xbf16>, vector<16x16x128xbf16>, vector<1x16x128xbf16> -> vector<18x16x128xbf16>
    %16 = vector.shape_cast %15 : vector<18x16x128xbf16> to vector<288x128xbf16>
    %c0_9 = arith.constant 0 : index
    %c0_10 = arith.constant 0 : index
    %17 = vector.load %arg3[%c0_9, %c0_10] : memref<128x128xbf16, #tpu.memory_space<vmem>>, vector<128x128xbf16>
    %cst = arith.constant dense<0.000000e+00> : vector<288x128xf32>
    %18 = tpu.matmul %16, %17, %cst {dimension_numbers = #tpu.dot_dimension_numbers<[1], [0], [0], [1], [0, 0, 1, 1], [], []>} : vector<288x128xbf16>, vector<128x128xbf16>, vector<288x128xf32> -> vector<288x128xf32>
    %c0_11 = arith.constant 0 : index
    %c0_12 = arith.constant 0 : index
    %19 = vector.load %arg4[%c0_11, %c0_12] : memref<1x128xf32, #tpu.memory_space<vmem>>, vector<1x128xf32>
    %20 = vector.broadcast %19 : vector<1x128xf32> to vector<288x128xf32>
    %21 = arith.addf %18, %20 : vector<288x128xf32>
    %cst_13 = arith.constant 0.000000e+00 : f32
    %22 = vector.broadcast %cst_13 : f32 to vector<288x128xf32>
    %23 = arith.maximumf %21, %22 : vector<288x128xf32>
    %24 = vector.shape_cast %23 : vector<288x128xf32> to vector<18x16x128xf32>
    %25 = arith.truncf %24 : vector<18x16x128xf32> to vector<18x16x128xbf16>
    %c0_14 = arith.constant 0 : index
    %c0_15 = arith.constant 0 : index
    %c0_16 = arith.constant 0 : index
    %26 = vector.load %arg10[%c0_14, %c0_15, %c0_16] : memref<18x16x128xbf16, #tpu.memory_space<vmem>>, vector<18x16x128xbf16>
    tpu.vector_store %arg10[%c0_14, %c0_15, %c0_16], %25 {strides = array<i32>} : memref<18x16x128xbf16, #tpu.memory_space<vmem>>, vector<18x16x128xbf16>,
    %c0_i32_17 = arith.constant 0 : i32
    %27 = arith.cmpi eq, %arg1, %c0_i32_17 : i32
    %28 = arith.extui %27 : i1 to i32
    %c0_i32_18 = arith.constant 0 : i32
    %29 = arith.cmpi ne, %28, %c0_i32_18 : i32
    scf.if %29 {
      %cst_41 = arith.constant 0.000000e+00 : bf16
      %70 = vector.broadcast %cst_41 : bf16 to vector<16x128xbf16>
      %c0_42 = arith.constant 0 : index
      %c0_43 = arith.constant 0 : index
      %c0_44 = arith.constant 0 : index
      %71 = vector.load %arg10[%c0_42, %c0_43, %c0_44] : memref<18x16x128xbf16, #tpu.memory_space<vmem>>, vector<1x16x128xbf16>
      %72 = vector.shape_cast %71 : vector<1x16x128xbf16> to vector<16x128xbf16>
      %73 = vector.shape_cast %70 : vector<16x128xbf16> to vector<1x16x128xbf16>
      tpu.vector_store %arg10[%c0_42, %c0_43, %c0_44], %73 {strides = array<i32>} : memref<18x16x128xbf16, #tpu.memory_space<vmem>>, vector<1x16x128xbf16>,
    } else {
    }
    %c0_i32_19 = arith.constant 0 : i32
    %30 = arith.cmpi eq, %arg1, %c0_i32_19 : i32
    %31 = arith.extui %30 : i1 to i32
    %c0_i32_20 = arith.constant 0 : i32
    %32 = arith.cmpi ne, %31, %c0_i32_20 : i32
    scf.if %32 {
      %cst_41 = arith.constant 0.000000e+00 : bf16
      %70 = vector.broadcast %cst_41 : bf16 to vector<16x128xbf16>
      %c17 = arith.constant 17 : index
      %c0_42 = arith.constant 0 : index
      %c0_43 = arith.constant 0 : index
      %71 = vector.load %arg10[%c17, %c0_42, %c0_43] : memref<18x16x128xbf16, #tpu.memory_space<vmem>>, vector<1x16x128xbf16>
      %72 = vector.shape_cast %71 : vector<1x16x128xbf16> to vector<16x128xbf16>
      %73 = vector.shape_cast %70 : vector<16x128xbf16> to vector<1x16x128xbf16>
      tpu.vector_store %arg10[%c17, %c0_42, %c0_43], %73 {strides = array<i32>} : memref<18x16x128xbf16, #tpu.memory_space<vmem>>, vector<1x16x128xbf16>,
    } else {
    }
    %c0_21 = arith.constant 0 : index
    %c0_22 = arith.constant 0 : index
    %c0_23 = arith.constant 0 : index
    %33 = vector.load %arg10[%c0_21, %c0_22, %c0_23] : memref<18x16x128xbf16, #tpu.memory_space<vmem>>, vector<18x16x128xbf16>
    %cst_24 = arith.constant 0.000000e+00 : bf16
    %34 = vector.broadcast %cst_24 : bf16 to vector<18x1x128xbf16>
    %35 = tpu.concatenate %34, %33, %34 in 1 : vector<18x1x128xbf16>, vector<18x16x128xbf16>, vector<18x1x128xbf16> -> vector<18x18x128xbf16>
    %36 = vector.extract_strided_slice %35 {offsets = [0, 0, 0], sizes = [16, 16, 128], strides = [1, 1, 1]} : vector<18x18x128xbf16> to vector<16x16x128xbf16>
    %37 = vector.extract_strided_slice %35 {offsets = [0, 1, 0], sizes = [16, 16, 128], strides = [1, 1, 1]} : vector<18x18x128xbf16> to vector<16x16x128xbf16>
    %38 = vector.extract_strided_slice %35 {offsets = [0, 2, 0], sizes = [16, 16, 128], strides = [1, 1, 1]} : vector<18x18x128xbf16> to vector<16x16x128xbf16>
    %39 = vector.extract_strided_slice %35 {offsets = [1, 0, 0], sizes = [16, 16, 128], strides = [1, 1, 1]} : vector<18x18x128xbf16> to vector<16x16x128xbf16>
    %40 = vector.extract_strided_slice %35 {offsets = [1, 1, 0], sizes = [16, 16, 128], strides = [1, 1, 1]} : vector<18x18x128xbf16> to vector<16x16x128xbf16>
    %41 = vector.extract_strided_slice %35 {offsets = [1, 2, 0], sizes = [16, 16, 128], strides = [1, 1, 1]} : vector<18x18x128xbf16> to vector<16x16x128xbf16>
    %42 = vector.extract_strided_slice %35 {offsets = [2, 0, 0], sizes = [16, 16, 128], strides = [1, 1, 1]} : vector<18x18x128xbf16> to vector<16x16x128xbf16>
    %43 = vector.extract_strided_slice %35 {offsets = [2, 1, 0], sizes = [16, 16, 128], strides = [1, 1, 1]} : vector<18x18x128xbf16> to vector<16x16x128xbf16>
    %44 = vector.extract_strided_slice %35 {offsets = [2, 2, 0], sizes = [16, 16, 128], strides = [1, 1, 1]} : vector<18x18x128xbf16> to vector<16x16x128xbf16>
    %45 = tpu.concatenate %36, %37, %38, %39, %40, %41, %42, %43, %44 in 2 : vector<16x16x128xbf16>, vector<16x16x128xbf16>, vector<16x16x128xbf16>, vector<16x16x128xbf16>, vector<16x16x128xbf16>, vector<16x16x128xbf16>, vector<16x16x128xbf16>, vector<16x16x128xbf16>, vector<16x16x128xbf16> -> vector<16x16x1152xbf16>
    %46 = vector.shape_cast %45 : vector<16x16x1152xbf16> to vector<256x1152xbf16>
    %c0_25 = arith.constant 0 : index
    %c0_26 = arith.constant 0 : index
    %47 = vector.load %arg5[%c0_25, %c0_26] : memref<1152x128xbf16, #tpu.memory_space<vmem>>, vector<1152x128xbf16>
    %cst_27 = arith.constant dense<0.000000e+00> : vector<256x128xf32>
    %48 = tpu.matmul %46, %47, %cst_27 {dimension_numbers = #tpu.dot_dimension_numbers<[1], [0], [0], [1], [0, 0, 1, 1], [], []>} : vector<256x1152xbf16>, vector<1152x128xbf16>, vector<256x128xf32> -> vector<256x128xf32>
    %c0_28 = arith.constant 0 : index
    %c0_29 = arith.constant 0 : index
    %49 = vector.load %arg6[%c0_28, %c0_29] : memref<1x128xf32, #tpu.memory_space<vmem>>, vector<1x128xf32>
    %50 = vector.broadcast %49 : vector<1x128xf32> to vector<256x128xf32>
    %51 = arith.addf %48, %50 : vector<256x128xf32>
    %cst_30 = arith.constant 0.000000e+00 : f32
    %52 = vector.broadcast %cst_30 : f32 to vector<256x128xf32>
    %53 = arith.maximumf %51, %52 : vector<256x128xf32>
    %54 = arith.truncf %53 : vector<256x128xf32> to vector<256x128xbf16>
    %c0_31 = arith.constant 0 : index
    %c0_32 = arith.constant 0 : index
    %55 = vector.load %arg7[%c0_31, %c0_32] : memref<128x128xbf16, #tpu.memory_space<vmem>>, vector<128x128xbf16>
    %cst_33 = arith.constant dense<0.000000e+00> : vector<256x128xf32>
    %56 = tpu.matmul %54, %55, %cst_33 {dimension_numbers = #tpu.dot_dimension_numbers<[1], [0], [0], [1], [0, 0, 1, 1], [], []>} : vector<256x128xbf16>, vector<128x128xbf16>, vector<256x128xf32> -> vector<256x128xf32>
    %c0_34 = arith.constant 0 : index
    %c0_35 = arith.constant 0 : index
    %57 = vector.load %arg8[%c0_34, %c0_35] : memref<1x128xf32, #tpu.memory_space<vmem>>, vector<1x128xf32>
    %58 = vector.broadcast %57 : vector<1x128xf32> to vector<256x128xf32>
    %59 = arith.addf %56, %58 : vector<256x128xf32>
    %60 = vector.shape_cast %8 : vector<16x16x128xbf16> to vector<256x128xbf16>
    %61 = arith.extf %60 : vector<256x128xbf16> to vector<256x128xf32>
    %62 = arith.addf %59, %61 : vector<256x128xf32>
    %cst_36 = arith.constant 0.000000e+00 : f32
    %63 = vector.broadcast %cst_36 : f32 to vector<256x128xf32>
    %64 = arith.maximumf %62, %63 : vector<256x128xf32>
    %65 = vector.shape_cast %64 : vector<256x128xf32> to vector<16x16x128xf32>
    %66 = arith.truncf %65 : vector<16x16x128xf32> to vector<16x16x128xbf16>
    %c0_37 = arith.constant 0 : index
    %c0_38 = arith.constant 0 : index
    %c0_39 = arith.constant 0 : index
    %c0_40 = arith.constant 0 : index
    %67 = vector.load %arg9[%c0_37, %c0_38, %c0_39, %c0_40] : memref<1x16x16x128xbf16, #tpu.memory_space<vmem>>, vector<1x16x16x128xbf16>
    %68 = vector.shape_cast %67 : vector<1x16x16x128xbf16> to vector<16x16x128xbf16>
    %69 = vector.shape_cast %66 : vector<16x16x128xbf16> to vector<1x16x16x128xbf16>
    tpu.vector_store %arg9[%c0_37, %c0_38, %c0_39, %c0_40], %69 {strides = array<i32>} : memref<1x16x16x128xbf16, #tpu.memory_space<vmem>>, vector<1x16x16x128xbf16>,
    return
  }
  func.func @transform_0(%arg0: i32, %arg1: i32) -> (i32, i32, i32, i32) {
    %c0_i32 = arith.constant 0 : i32
    %c0_i32_0 = arith.constant 0 : i32
    %c0_i32_1 = arith.constant 0 : i32
    %c0_i32_2 = arith.constant 0 : i32
    return %arg0, %c0_i32, %c0_i32_0, %c0_i32_1 : i32, i32, i32, i32
  }
  func.func @transform_1(%arg0: i32, %arg1: i32) -> (i32, i32) {
    %c0_i32 = arith.constant 0 : i32
    %c0_i32_0 = arith.constant 0 : i32
    %c0_i32_1 = arith.constant 0 : i32
    return %c0_i32, %c0_i32_0 : i32, i32
  }
  func.func @transform_2(%arg0: i32, %arg1: i32) -> (i32, i32) {
    %c0_i32 = arith.constant 0 : i32
    %c0_i32_0 = arith.constant 0 : i32
    %c0_i32_1 = arith.constant 0 : i32
    return %c0_i32, %c0_i32_0 : i32, i32
  }
  func.func @transform_3(%arg0: i32, %arg1: i32) -> (i32, i32) {
    %c0_i32 = arith.constant 0 : i32
    %c0_i32_0 = arith.constant 0 : i32
    %c0_i32_1 = arith.constant 0 : i32
    return %c0_i32, %c0_i32_0 : i32, i32
  }
  func.func @transform_4(%arg0: i32, %arg1: i32) -> (i32, i32) {
    %c0_i32 = arith.constant 0 : i32
    %c0_i32_0 = arith.constant 0 : i32
    %c0_i32_1 = arith.constant 0 : i32
    return %c0_i32, %c0_i32_0 : i32, i32
  }
  func.func @transform_5(%arg0: i32, %arg1: i32) -> (i32, i32) {
    %c0_i32 = arith.constant 0 : i32
    %c0_i32_0 = arith.constant 0 : i32
    %c0_i32_1 = arith.constant 0 : i32
    return %c0_i32, %c0_i32_0 : i32, i32
  }
  func.func @transform_6(%arg0: i32, %arg1: i32) -> (i32, i32) {
    %c0_i32 = arith.constant 0 : i32
    %c0_i32_0 = arith.constant 0 : i32
    %c0_i32_1 = arith.constant 0 : i32
    return %c0_i32, %c0_i32_0 : i32, i32
  }
  func.func @transform_7(%arg0: i32, %arg1: i32) -> (i32, i32, i32, i32) {
    %c0_i32 = arith.constant 0 : i32
    %c0_i32_0 = arith.constant 0 : i32
    %c0_i32_1 = arith.constant 0 : i32
    return %arg0, %arg1, %c0_i32, %c0_i32_0 : i32, i32, i32, i32
  }
}

module attributes {stable_mosaic.version = 11 : i64} {
  func.func @_bottleneck_kernel(%arg0: i32, %arg1: i32, %arg2: memref<1x16x16x128xbf16, #tpu.memory_space<vmem>>, %arg3: memref<128x128xbf16, #tpu.memory_space<vmem>>, %arg4: memref<1x128xf32, #tpu.memory_space<vmem>>, %arg5: memref<1152x128xbf16, #tpu.memory_space<vmem>>, %arg6: memref<1x128xf32, #tpu.memory_space<vmem>>, %arg7: memref<128x128xbf16, #tpu.memory_space<vmem>>, %arg8: memref<1x128xf32, #tpu.memory_space<vmem>>, %arg9: memref<1x16x16x128xbf16, #tpu.memory_space<vmem>>, %arg10: memref<18x16x128xbf16, #tpu.memory_space<vmem>>) attributes {dimension_semantics = [#tpu.dimension_semantics<parallel>, #tpu.dimension_semantics<parallel>], iteration_bounds = array<i64: 2, 1>, scalar_prefetch = 0 : i64, scratch_operands = 1 : i64, tpu.core_type = #tpu.core_type<tc>, window_params = [{transform_indices = @transform_0, window_bounds = array<i64: 1, 16, 16, 128>}, {pipeline_mode = #tpu.pipeline_mode<synchronous>, transform_indices = @transform_1, window_bounds = array<i64: 128, 128>}, {pipeline_mode = #tpu.pipeline_mode<synchronous>, transform_indices = @transform_2, window_bounds = array<i64: 1, 128>}, {pipeline_mode = #tpu.pipeline_mode<synchronous>, transform_indices = @transform_3, window_bounds = array<i64: 1152, 128>}, {pipeline_mode = #tpu.pipeline_mode<synchronous>, transform_indices = @transform_4, window_bounds = array<i64: 1, 128>}, {pipeline_mode = #tpu.pipeline_mode<synchronous>, transform_indices = @transform_5, window_bounds = array<i64: 128, 128>}, {pipeline_mode = #tpu.pipeline_mode<synchronous>, transform_indices = @transform_6, window_bounds = array<i64: 1, 128>}, {transform_indices = @transform_7, window_bounds = array<i64: 1, 16, 16, 128>}]} {
    %c16_i32 = arith.constant 16 : i32
    %0 = arith.muli %arg1, %c16_i32 : i32
    %1 = tpu.assume_multiple %0, 16 : i32
    %c1_i32 = arith.constant 1 : i32
    %2 = arith.subi %1, %c1_i32 : i32
    %c0_i32 = arith.constant 0 : i32
    %3 = arith.maxsi %2, %c0_i32 : i32
    %c16_i32_0 = arith.constant 16 : i32
    %4 = arith.addi %1, %c16_i32_0 : i32
    %c15_i32 = arith.constant 15 : i32
    %5 = arith.minsi %4, %c15_i32 : i32
    %c0 = arith.constant 0 : index
    %6 = arith.index_cast %1 : i32 to index
    %c0_1 = arith.constant 0 : index
    %c0_2 = arith.constant 0 : index
    %7 = vector.load %arg2[%c0, %6, %c0_1, %c0_2] : memref<1x16x16x128xbf16, #tpu.memory_space<vmem>>, vector<1x16x16x128xbf16>
    %8 = vector.shape_cast %7 : vector<1x16x16x128xbf16> to vector<16x16x128xbf16>
    %c0_3 = arith.constant 0 : index
    %9 = arith.index_cast %3 : i32 to index
    %c0_4 = arith.constant 0 : index
    %c0_5 = arith.constant 0 : index
    %10 = vector.load %arg2[%c0_3, %9, %c0_4, %c0_5] : memref<1x16x16x128xbf16, #tpu.memory_space<vmem>>, vector<1x1x16x128xbf16>
    %11 = vector.shape_cast %10 : vector<1x1x16x128xbf16> to vector<1x16x128xbf16>
    %c0_6 = arith.constant 0 : index
    %12 = arith.index_cast %5 : i32 to index
    %c0_7 = arith.constant 0 : index
    %c0_8 = arith.constant 0 : index
    %13 = vector.load %arg2[%c0_6, %12, %c0_7, %c0_8] : memref<1x16x16x128xbf16, #tpu.memory_space<vmem>>, vector<1x1x16x128xbf16>
    %14 = vector.shape_cast %13 : vector<1x1x16x128xbf16> to vector<1x16x128xbf16>
    %15 = tpu.concatenate %11, %8, %14 in 0 : vector<1x16x128xbf16>, vector<16x16x128xbf16>, vector<1x16x128xbf16> -> vector<18x16x128xbf16>
    %16 = vector.shape_cast %15 : vector<18x16x128xbf16> to vector<288x128xbf16>
    %c0_9 = arith.constant 0 : index
    %c0_10 = arith.constant 0 : index
    %17 = vector.load %arg3[%c0_9, %c0_10] : memref<128x128xbf16, #tpu.memory_space<vmem>>, vector<128x128xbf16>
    %cst = arith.constant dense<0.000000e+00> : vector<288x128xf32>
    %18 = tpu.matmul %16, %17, %cst {dimension_numbers = #tpu.dot_dimension_numbers<[1], [0], [0], [1], [0, 0, 1, 1], [], []>} : vector<288x128xbf16>, vector<128x128xbf16>, vector<288x128xf32> -> vector<288x128xf32>
    %c0_11 = arith.constant 0 : index
    %c0_12 = arith.constant 0 : index
    %19 = vector.load %arg4[%c0_11, %c0_12] : memref<1x128xf32, #tpu.memory_space<vmem>>, vector<1x128xf32>
    %20 = vector.broadcast %19 : vector<1x128xf32> to vector<288x128xf32>
    %21 = arith.addf %18, %20 : vector<288x128xf32>
    %cst_13 = arith.constant 0.000000e+00 : f32
    %22 = vector.broadcast %cst_13 : f32 to vector<288x128xf32>
    %23 = arith.maximumf %21, %22 : vector<288x128xf32>
    %24 = vector.shape_cast %23 : vector<288x128xf32> to vector<18x16x128xf32>
    %25 = arith.truncf %24 : vector<18x16x128xf32> to vector<18x16x128xbf16>
    %c0_14 = arith.constant 0 : index
    %c0_15 = arith.constant 0 : index
    %c0_16 = arith.constant 0 : index
    %26 = vector.load %arg10[%c0_14, %c0_15, %c0_16] : memref<18x16x128xbf16, #tpu.memory_space<vmem>>, vector<18x16x128xbf16>
    tpu.vector_store %arg10[%c0_14, %c0_15, %c0_16], %25 {strides = array<i32>} : memref<18x16x128xbf16, #tpu.memory_space<vmem>>, vector<18x16x128xbf16>,
    %c0_i32_17 = arith.constant 0 : i32
    %27 = arith.cmpi eq, %arg1, %c0_i32_17 : i32
    %28 = arith.extui %27 : i1 to i32
    %c0_i32_18 = arith.constant 0 : i32
    %29 = arith.cmpi ne, %28, %c0_i32_18 : i32
    scf.if %29 {
      %cst_41 = arith.constant 0.000000e+00 : bf16
      %70 = vector.broadcast %cst_41 : bf16 to vector<16x128xbf16>
      %c0_42 = arith.constant 0 : index
      %c0_43 = arith.constant 0 : index
      %c0_44 = arith.constant 0 : index
      %71 = vector.load %arg10[%c0_42, %c0_43, %c0_44] : memref<18x16x128xbf16, #tpu.memory_space<vmem>>, vector<1x16x128xbf16>
      %72 = vector.shape_cast %71 : vector<1x16x128xbf16> to vector<16x128xbf16>
      %73 = vector.shape_cast %70 : vector<16x128xbf16> to vector<1x16x128xbf16>
      tpu.vector_store %arg10[%c0_42, %c0_43, %c0_44], %73 {strides = array<i32>} : memref<18x16x128xbf16, #tpu.memory_space<vmem>>, vector<1x16x128xbf16>,
    } else {
    }
    %c0_i32_19 = arith.constant 0 : i32
    %30 = arith.cmpi eq, %arg1, %c0_i32_19 : i32
    %31 = arith.extui %30 : i1 to i32
    %c0_i32_20 = arith.constant 0 : i32
    %32 = arith.cmpi ne, %31, %c0_i32_20 : i32
    scf.if %32 {
      %cst_41 = arith.constant 0.000000e+00 : bf16
      %70 = vector.broadcast %cst_41 : bf16 to vector<16x128xbf16>
      %c17 = arith.constant 17 : index
      %c0_42 = arith.constant 0 : index
      %c0_43 = arith.constant 0 : index
      %71 = vector.load %arg10[%c17, %c0_42, %c0_43] : memref<18x16x128xbf16, #tpu.memory_space<vmem>>, vector<1x16x128xbf16>
      %72 = vector.shape_cast %71 : vector<1x16x128xbf16> to vector<16x128xbf16>
      %73 = vector.shape_cast %70 : vector<16x128xbf16> to vector<1x16x128xbf16>
      tpu.vector_store %arg10[%c17, %c0_42, %c0_43], %73 {strides = array<i32>} : memref<18x16x128xbf16, #tpu.memory_space<vmem>>, vector<1x16x128xbf16>,
    } else {
    }
    %c0_21 = arith.constant 0 : index
    %c0_22 = arith.constant 0 : index
    %c0_23 = arith.constant 0 : index
    %33 = vector.load %arg10[%c0_21, %c0_22, %c0_23] : memref<18x16x128xbf16, #tpu.memory_space<vmem>>, vector<18x16x128xbf16>
    %cst_24 = arith.constant 0.000000e+00 : bf16
    %34 = vector.broadcast %cst_24 : bf16 to vector<18x1x128xbf16>
    %35 = tpu.concatenate %34, %33, %34 in 1 : vector<18x1x128xbf16>, vector<18x16x128xbf16>, vector<18x1x128xbf16> -> vector<18x18x128xbf16>
    %36 = vector.extract_strided_slice %35 {offsets = [0, 0, 0], sizes = [16, 16, 128], strides = [1, 1, 1]} : vector<18x18x128xbf16> to vector<16x16x128xbf16>
    %37 = vector.extract_strided_slice %35 {offsets = [0, 1, 0], sizes = [16, 16, 128], strides = [1, 1, 1]} : vector<18x18x128xbf16> to vector<16x16x128xbf16>
    %38 = vector.extract_strided_slice %35 {offsets = [0, 2, 0], sizes = [16, 16, 128], strides = [1, 1, 1]} : vector<18x18x128xbf16> to vector<16x16x128xbf16>
    %39 = vector.extract_strided_slice %35 {offsets = [1, 0, 0], sizes = [16, 16, 128], strides = [1, 1, 1]} : vector<18x18x128xbf16> to vector<16x16x128xbf16>
    %40 = vector.extract_strided_slice %35 {offsets = [1, 1, 0], sizes = [16, 16, 128], strides = [1, 1, 1]} : vector<18x18x128xbf16> to vector<16x16x128xbf16>
    %41 = vector.extract_strided_slice %35 {offsets = [1, 2, 0], sizes = [16, 16, 128], strides = [1, 1, 1]} : vector<18x18x128xbf16> to vector<16x16x128xbf16>
    %42 = vector.extract_strided_slice %35 {offsets = [2, 0, 0], sizes = [16, 16, 128], strides = [1, 1, 1]} : vector<18x18x128xbf16> to vector<16x16x128xbf16>
    %43 = vector.extract_strided_slice %35 {offsets = [2, 1, 0], sizes = [16, 16, 128], strides = [1, 1, 1]} : vector<18x18x128xbf16> to vector<16x16x128xbf16>
    %44 = vector.extract_strided_slice %35 {offsets = [2, 2, 0], sizes = [16, 16, 128], strides = [1, 1, 1]} : vector<18x18x128xbf16> to vector<16x16x128xbf16>
    %45 = tpu.concatenate %36, %37, %38, %39, %40, %41, %42, %43, %44 in 2 : vector<16x16x128xbf16>, vector<16x16x128xbf16>, vector<16x16x128xbf16>, vector<16x16x128xbf16>, vector<16x16x128xbf16>, vector<16x16x128xbf16>, vector<16x16x128xbf16>, vector<16x16x128xbf16>, vector<16x16x128xbf16> -> vector<16x16x1152xbf16>
    %46 = vector.shape_cast %45 : vector<16x16x1152xbf16> to vector<256x1152xbf16>
    %c0_25 = arith.constant 0 : index
    %c0_26 = arith.constant 0 : index
    %47 = vector.load %arg5[%c0_25, %c0_26] : memref<1152x128xbf16, #tpu.memory_space<vmem>>, vector<1152x128xbf16>
    %cst_27 = arith.constant dense<0.000000e+00> : vector<256x128xf32>
    %48 = tpu.matmul %46, %47, %cst_27 {dimension_numbers = #tpu.dot_dimension_numbers<[1], [0], [0], [1], [0, 0, 1, 1], [], []>} : vector<256x1152xbf16>, vector<1152x128xbf16>, vector<256x128xf32> -> vector<256x128xf32>
    %c0_28 = arith.constant 0 : index
    %c0_29 = arith.constant 0 : index
    %49 = vector.load %arg6[%c0_28, %c0_29] : memref<1x128xf32, #tpu.memory_space<vmem>>, vector<1x128xf32>
    %50 = vector.broadcast %49 : vector<1x128xf32> to vector<256x128xf32>
    %51 = arith.addf %48, %50 : vector<256x128xf32>
    %cst_30 = arith.constant 0.000000e+00 : f32
    %52 = vector.broadcast %cst_30 : f32 to vector<256x128xf32>
    %53 = arith.maximumf %51, %52 : vector<256x128xf32>
    %54 = arith.truncf %53 : vector<256x128xf32> to vector<256x128xbf16>
    %c0_31 = arith.constant 0 : index
    %c0_32 = arith.constant 0 : index
    %55 = vector.load %arg7[%c0_31, %c0_32] : memref<128x128xbf16, #tpu.memory_space<vmem>>, vector<128x128xbf16>
    %cst_33 = arith.constant dense<0.000000e+00> : vector<256x128xf32>
    %56 = tpu.matmul %54, %55, %cst_33 {dimension_numbers = #tpu.dot_dimension_numbers<[1], [0], [0], [1], [0, 0, 1, 1], [], []>} : vector<256x128xbf16>, vector<128x128xbf16>, vector<256x128xf32> -> vector<256x128xf32>
    %c0_34 = arith.constant 0 : index
    %c0_35 = arith.constant 0 : index
    %57 = vector.load %arg8[%c0_34, %c0_35] : memref<1x128xf32, #tpu.memory_space<vmem>>, vector<1x128xf32>
    %58 = vector.broadcast %57 : vector<1x128xf32> to vector<256x128xf32>
    %59 = arith.addf %56, %58 : vector<256x128xf32>
    %60 = vector.shape_cast %8 : vector<16x16x128xbf16> to vector<256x128xbf16>
    %61 = arith.extf %60 : vector<256x128xbf16> to vector<256x128xf32>
    %62 = arith.addf %59, %61 : vector<256x128xf32>
    %cst_36 = arith.constant 0.000000e+00 : f32
    %63 = vector.broadcast %cst_36 : f32 to vector<256x128xf32>
    %64 = arith.maximumf %62, %63 : vector<256x128xf32>
    %65 = vector.shape_cast %64 : vector<256x128xf32> to vector<16x16x128xf32>
    %66 = arith.truncf %65 : vector<16x16x128xf32> to vector<16x16x128xbf16>
    %c0_37 = arith.constant 0 : index
    %c0_38 = arith.constant 0 : index
    %c0_39 = arith.constant 0 : index
    %c0_40 = arith.constant 0 : index
    %67 = vector.load %arg9[%c0_37, %c0_38, %c0_39, %c0_40] : memref<1x16x16x128xbf16, #tpu.memory_space<vmem>>, vector<1x16x16x128xbf16>
    %68 = vector.shape_cast %67 : vector<1x16x16x128xbf16> to vector<16x16x128xbf16>
    %69 = vector.shape_cast %66 : vector<16x16x128xbf16> to vector<1x16x16x128xbf16>
    tpu.vector_store %arg9[%c0_37, %c0_38, %c0_39, %c0_40], %69 {strides = array<i32>} : memref<1x16x16x128xbf16, #tpu.memory_space<vmem>>, vector<1x16x16x128xbf16>,
    return
  }
  func.func @transform_0(%arg0: i32, %arg1: i32) -> (i32, i32, i32, i32) {
    %c0_i32 = arith.constant 0 : i32
    %c0_i32_0 = arith.constant 0 : i32
    %c0_i32_1 = arith.constant 0 : i32
    %c0_i32_2 = arith.constant 0 : i32
    return %arg0, %c0_i32, %c0_i32_0, %c0_i32_1 : i32, i32, i32, i32
  }
  func.func @transform_1(%arg0: i32, %arg1: i32) -> (i32, i32) {
    %c0_i32 = arith.constant 0 : i32
    %c0_i32_0 = arith.constant 0 : i32
    %c0_i32_1 = arith.constant 0 : i32
    return %c0_i32, %c0_i32_0 : i32, i32
  }
  func.func @transform_2(%arg0: i32, %arg1: i32) -> (i32, i32) {
    %c0_i32 = arith.constant 0 : i32
    %c0_i32_0 = arith.constant 0 : i32
    %c0_i32_1 = arith.constant 0 : i32
    return %c0_i32, %c0_i32_0 : i32, i32
  }
  func.func @transform_3(%arg0: i32, %arg1: i32) -> (i32, i32) {
    %c0_i32 = arith.constant 0 : i32
    %c0_i32_0 = arith.constant 0 : i32
    %c0_i32_1 = arith.constant 0 : i32
    return %c0_i32, %c0_i32_0 : i32, i32
  }
  func.func @transform_4(%arg0: i32, %arg1: i32) -> (i32, i32) {
    %c0_i32 = arith.constant 0 : i32
    %c0_i32_0 = arith.constant 0 : i32
    %c0_i32_1 = arith.constant 0 : i32
    return %c0_i32, %c0_i32_0 : i32, i32
  }
  func.func @transform_5(%arg0: i32, %arg1: i32) -> (i32, i32) {
    %c0_i32 = arith.constant 0 : i32
    %c0_i32_0 = arith.constant 0 : i32
    %c0_i32_1 = arith.constant 0 : i32
    return %c0_i32, %c0_i32_0 : i32, i32
  }
  func.func @transform_6(%arg0: i32, %arg1: i32) -> (i32, i32) {
    %c0_i32 = arith.constant 0 : i32
    %c0_i32_0 = arith.constant 0 : i32
    %c0_i32_1 = arith.constant 0 : i32
    return %c0_i32, %c0_i32_0 : i32, i32
  }
  func.func @transform_7(%arg0: i32, %arg1: i32) -> (i32, i32, i32, i32) {
    %c0_i32 = arith.constant 0 : i32
    %c0_i32_0 = arith.constant 0 : i32
    %c0_i32_1 = arith.constant 0 : i32
    return %arg0, %arg1, %c0_i32, %c0_i32_0 : i32, i32, i32, i32
  }
}

</mosaic_0001>

<llo_original>
// kernel: tpu_custom_call.1
$region0: #{tpu_custom_call.1}
  #allocation0 [shape = 'u32[]', space=smem, size = 0x4, offset = 0x4, fixed_abs, tag = 'smem constant byte address 0x4 - core index']
  #allocation1 [shape = 'u32[72,128]{1,0:T(1,128)}', space=vmem, size = 0x9000, scoped, tag = 'internal scratch']
  #allocation2 [shape = 'bf16[18,16,128]{2,1,0:T(8,128)(2,1)}', space=vmem, size = 0x12000, scoped, tag = 'scratch operand']
  %s0 = inlined_call_operand.hbm [shape: bf16[2,16,16,128], index: 0, kind: input, shape index: {}]
  %s1 = inlined_call_operand.hbm [shape: bf16[128,128], index: 1, kind: input, shape index: {}]
  %s2 = inlined_call_operand.vmem [shape: f32[1,128], index: 2, kind: input, shape index: {}]
  %s3 = inlined_call_operand.hbm [shape: bf16[1152,128], index: 3, kind: input, shape index: {}]
  %s4 = inlined_call_operand.vmem [shape: f32[1,128], index: 4, kind: input, shape index: {}]
  %s5 = inlined_call_operand.hbm [shape: bf16[128,128], index: 5, kind: input, shape index: {}]
  %s6 = inlined_call_operand.vmem [shape: f32[1,128], index: 6, kind: input, shape index: {}]
  %s7 = inlined_call_operand.hbm [shape: bf16[2,16,16,128], index: 7, kind: output, shape index: {}]
  %s8 = sld [smem:[#allocation0]]
  $region81: #{tpu_custom_call.1} parent=0
    _
  %s10 = ssub.s32 1, %s8
  %s11 = scalar_select 0, %s10, %s8
  $region1: #{tpu_custom_call.1} parent=0
    #allocation3 [shape = 'u8[131072]{0}', space=vmem, size = 0x20000, scoped, tag = 'input window, operand 0']
    #allocation4 [shape = 's32[2]{0}', space=sflag, size = 0x8, scoped, tag = 'scoped memory for tpu_custom_call.1']
    #allocation5 [shape = 's32[2]{0}', space=sflag, size = 0x8, scoped, tag = 'scoped memory for tpu_custom_call.1']
    #allocation6 [shape = 'u8[32768]{0}', space=vmem, size = 0x8000, scoped, tag = 'input window, operand 1, single buffered']
    #allocation7 [shape = 's32[1]{0}', space=sflag, size = 0x4, scoped, tag = 'scoped memory for tpu_custom_call.1']
    #allocation8 [shape = 'u8[294912]{0}', space=vmem, size = 0x48000, scoped, tag = 'input window, operand 3, single buffered']
    #allocation9 [shape = 'u8[32768]{0}', space=vmem, size = 0x8000, scoped, tag = 'input window, operand 5, single buffered']
    #allocation10 [shape = 's32[1]{0}', space=sflag, size = 0x4, scoped, tag = 'scoped memory for tpu_custom_call.1']
    #allocation11 [shape = 'u8[131072]{0}', space=vmem, size = 0x20000, scoped, tag = 'output window, operand 0']
    %12 = vsyncpa [#allocation4], 0
    %s13 = scalar_lea.sflag [#allocation4], 1
    %14 = vsyncpa %s13, 0
    %15 = vsyncpa [#allocation7], 0
    %16 = vsyncpa [#allocation10], 0
    %17 = vsyncpa [#allocation5], 0
    %s18 = scalar_lea.sflag [#allocation5], 1
    %19 = vsyncpa %s18, 0
    loop: start=0, step=1, limit=4
    $region2: #{tpu_custom_call.1} parent=1 // loop_pre_header
      _
    $region3: #{tpu_custom_call.1} parent=1 // loop_header
      %s21 = sphi 0, %s25
      %p22 = scmp.ge.s32.totalorder %s21, 4
      %s28 = sphi 0, %s40
      %s29 = sphi 0, %s36
      %s30 = sphi 0, %s28
      %s31 = sphi 0, %s29
      %s32 = sphi 0, %s30
      %s33 = sphi 0, %s31
      %s43 = sphi 0, %s45
      %s46 = sphi 0, %s43
      %s47 = sphi 0, %s46
      %s63 = sphi 0, %s47
      %s67 = sphi 0, %s67
      %s69 = sphi 0, %s67
      %s70 = sphi 0, %s69
      %s84 = sphi 0, %s70
      %s88 = sphi 0, %s88
      %s90 = sphi 0, %s88
      %s91 = sphi 0, %s90
      %s105 = sphi 0, %s91
      %s109 = sphi 0, %s109
      %s111 = sphi 0, %s109
      %s112 = sphi 0, %s111
      %s126 = sphi 0, %s112
      %s130 = sphi 0, %s130
      %s132 = sphi 0, %s130
      %s133 = sphi 0, %s132
      %s147 = sphi 0, %s133
      %s151 = sphi 0, %s151
      %s153 = sphi 0, %s151
      %s154 = sphi 0, %s153
      %s168 = sphi 0, %s154
      %s172 = sphi 0, %s172
      %s174 = sphi 0, %s172
      %s175 = sphi 0, %s174
      %s189 = sphi 0, %s175
      %s197 = sphi 0, %s199
      %s200 = sphi 0, %s197
      %s201 = sphi 0, %s200
      %s217 = sphi 0, %s201
    $region4: #{tpu_custom_call.1} parent=1 // loop_header_branch
      %24 = sbr.rel (%p22) target = $region8
    $region5: #{tpu_custom_call.1} parent=1 // loop_body
      %s26 = ssub.s32 %s21, 1
      %s27 = ssub.s32 %s21, 2
      %s34 = sadd.s32 1, %s29
      %p35 = scmp.ge.s32.totalorder %s34, 1
      %s36 = scalar_select %p35, 0, %s34
      %s37 = sadd.s32 1, %s28
      %s38 = scalar_select %p35, %s37, %s28
      %p39 = scmp.ge.s32.totalorder %s38, 2
      %s40 = scalar_select %p39, 0, %s38
      %s41 = ssub.s32 %s28, %s40
      %p42 = scmp.eq.s32.totalorder %s41, 0
      %s44 = sadd.s32 %s43, 1
      %s45 = scalar_select %p42, %s43, %s44
      %p48 = pneg %p42
      %p49 = scmp.eq.s32.totalorder %s21, 1
      %p50 = por %p48, %p49
      %p51 = scmp.ne.s32.totalorder %s43, %s46
      %p52 = scmp.eq.s32.totalorder %s21, 0
      %p53 = por %p51, %p52
      %p54 = scmp.ne.s32.totalorder %s43, %s46
      %p55 = scmp.eq.s32.totalorder %s26, 1
      %p56 = por %p54, %p55
      %p57 = scmp.ne.s32.totalorder %s46, %s47
      %p58 = scmp.eq.s32.totalorder %s26, 0
      %p59 = por %p57, %p58
      %p60 = scmp.ne.s32.totalorder %s46, %s47
      %p61 = scmp.eq.s32.totalorder %s27, 1
      %p62 = por %p60, %p61
      %p64 = scmp.ne.s32.totalorder %s47, %s63
      %p65 = scmp.eq.s32.totalorder %s27, 0
      %p66 = por %p64, %p65
      %s68 = sadd.s32 %s67, 1
      %p71 = scmp.eq.s32.totalorder %s21, 1
      %p72 = scmp.ne.s32.totalorder %s67, %s69
      %p73 = scmp.eq.s32.totalorder %s21, 0
      %p74 = por %p72, %p73
      %p75 = scmp.ne.s32.totalorder %s67, %s69
      %p76 = scmp.eq.s32.totalorder %s26, 1
      %p77 = por %p75, %p76
      %p78 = scmp.ne.s32.totalorder %s69, %s70
      %p79 = scmp.eq.s32.totalorder %s26, 0
      %p80 = por %p78, %p79
      %p81 = scmp.ne.s32.totalorder %s69, %s70
      %p82 = scmp.eq.s32.totalorder %s27, 1
      %p83 = por %p81, %p82
      %p85 = scmp.ne.s32.totalorder %s70, %s84
      %p86 = scmp.eq.s32.totalorder %s27, 0
      %p87 = por %p85, %p86
      %s89 = sadd.s32 %s88, 1
      %p92 = scmp.eq.s32.totalorder %s21, 1
      %p93 = scmp.ne.s32.totalorder %s88, %s90
      %p94 = scmp.eq.s32.totalorder %s21, 0
      %p95 = por %p93, %p94
      %p96 = scmp.ne.s32.totalorder %s88, %s90
      %p97 = scmp.eq.s32.totalorder %s26, 1
      %p98 = por %p96, %p97
      %p99 = scmp.ne.s32.totalorder %s90, %s91
      %p100 = scmp.eq.s32.totalorder %s26, 0
      %p101 = por %p99, %p100
      %p102 = scmp.ne.s32.totalorder %s90, %s91
      %p103 = scmp.eq.s32.totalorder %s27, 1
      %p104 = por %p102, %p103
      %p106 = scmp.ne.s32.totalorder %s91, %s105
      %p107 = scmp.eq.s32.totalorder %s27, 0
      %p108 = por %p106, %p107
      %s110 = sadd.s32 %s109, 1
      %p113 = scmp.eq.s32.totalorder %s21, 1
      %p114 = scmp.ne.s32.totalorder %s109, %s111
      %p115 = scmp.eq.s32.totalorder %s21, 0
      %p116 = por %p114, %p115
      %p117 = scmp.ne.s32.totalorder %s109, %s111
      %p118 = scmp.eq.s32.totalorder %s26, 1
      %p119 = por %p117, %p118
      %p120 = scmp.ne.s32.totalorder %s111, %s112
      %p121 = scmp.eq.s32.totalorder %s26, 0
      %p122 = por %p120, %p121
      %p123 = scmp.ne.s32.totalorder %s111, %s112
      %p124 = scmp.eq.s32.totalorder %s27, 1
      %p125 = por %p123, %p124
      %p127 = scmp.ne.s32.totalorder %s112, %s126
      %p128 = scmp.eq.s32.totalorder %s27, 0
      %p129 = por %p127, %p128
      %s131 = sadd.s32 %s130, 1
      %p134 = scmp.eq.s32.totalorder %s21, 1
      %p135 = scmp.ne.s32.totalorder %s130, %s132
      %p136 = scmp.eq.s32.totalorder %s21, 0
      %p137 = por %p135, %p136
      %p138 = scmp.ne.s32.totalorder %s130, %s132
      %p139 = scmp.eq.s32.totalorder %s26, 1
      %p140 = por %p138, %p139
      %p141 = scmp.ne.s32.totalorder %s132, %s133
      %p142 = scmp.eq.s32.totalorder %s26, 0
      %p143 = por %p141, %p142
      %p144 = scmp.ne.s32.totalorder %s132, %s133
      %p145 = scmp.eq.s32.totalorder %s27, 1
      %p146 = por %p144, %p145
      %p148 = scmp.ne.s32.totalorder %s133, %s147
      %p149 = scmp.eq.s32.totalorder %s27, 0
      %p150 = por %p148, %p149
      %s152 = sadd.s32 %s151, 1
      %p155 = scmp.eq.s32.totalorder %s21, 1
      %p156 = scmp.ne.s32.totalorder %s151, %s153
      %p157 = scmp.eq.s32.totalorder %s21, 0
      %p158 = por %p156, %p157
      %p159 = scmp.ne.s32.totalorder %s151, %s153
      %p160 = scmp.eq.s32.totalorder %s26, 1
      %p161 = por %p159, %p160
      %p162 = scmp.ne.s32.totalorder %s153, %s154
      %p163 = scmp.eq.s32.totalorder %s26, 0
      %p164 = por %p162, %p163
      %p165 = scmp.ne.s32.totalorder %s153, %s154
      %p166 = scmp.eq.s32.totalorder %s27, 1
      %p167 = por %p165, %p166
      %p169 = scmp.ne.s32.totalorder %s154, %s168
      %p170 = scmp.eq.s32.totalorder %s27, 0
      %p171 = por %p169, %p170
      %s173 = sadd.s32 %s172, 1
      %p176 = scmp.eq.s32.totalorder %s21, 1
      %p177 = scmp.ne.s32.totalorder %s172, %s174
      %p178 = scmp.eq.s32.totalorder %s21, 0
      %p179 = por %p177, %p178
      %p180 = scmp.ne.s32.totalorder %s172, %s174
      %p181 = scmp.eq.s32.totalorder %s26, 1
      %p182 = por %p180, %p181
      %p183 = scmp.ne.s32.totalorder %s174, %s175
      %p184 = scmp.eq.s32.totalorder %s26, 0
      %p185 = por %p183, %p184
      %p186 = scmp.ne.s32.totalorder %s174, %s175
      %p187 = scmp.eq.s32.totalorder %s27, 1
      %p188 = por %p186, %p187
      %p190 = scmp.ne.s32.totalorder %s175, %s189
      %p191 = scmp.eq.s32.totalorder %s27, 0
      %p192 = por %p190, %p191
      %s193 = ssub.s32 %s28, %s40
      %s194 = ssub.s32 %s29, %s36
      %s195 = sor.u32 %s193, %s194
      %p196 = scmp.eq.s32.totalorder %s195, 0
      %s198 = sadd.s32 %s197, 1
      %s199 = scalar_select %p196, %s197, %s198
      %p202 = pneg %p196
      %p203 = scmp.eq.s32.totalorder %s21, 1
      %p204 = por %p202, %p203
      %p205 = scmp.ne.s32.totalorder %s197, %s200
      %p206 = scmp.eq.s32.totalorder %s21, 0
      %p207 = por %p205, %p206
      %p208 = scmp.ne.s32.totalorder %s197, %s200
      %p209 = scmp.eq.s32.totalorder %s26, 1
      %p210 = por %p208, %p209
      %p211 = scmp.ne.s32.totalorder %s200, %s201
      %p212 = scmp.eq.s32.totalorder %s26, 0
      %p213 = por %p211, %p212
      %p214 = scmp.ne.s32.totalorder %s200, %s201
      %p215 = scmp.eq.s32.totalorder %s27, 1
      %p216 = por %p214, %p215
      %p218 = scmp.ne.s32.totalorder %s201, %s217
      %p219 = scmp.eq.s32.totalorder %s27, 0
      %p220 = por %p218, %p219
      %p221 = scmp.le.s32.totalorder 1, %s21
      %p222 = scmp.lt.s32.totalorder %s21, 3
      %p223 = pnand %p221, %p222
      %p224 = pneg %p223
      // Predicated region
      $region9: #{tpu_custom_call.1} parent=5 // pred_check
        _
      $region10: #{tpu_custom_call.1} parent=5 // pred_check_branch
        %226 = sbr.rel (%p223) target = $region12
      $region11: #{tpu_custom_call.1} parent=5 // pred_region
        %s227 = ssub.s32 %s21, 1
        // Predicated region
        $region13: #{tpu_custom_call.1} parent=11 // pred_check
          %p228 = pneg %p80
        $region14: #{tpu_custom_call.1} parent=11 // pred_check_branch
          %230 = sbr.rel (%p228) target = $region16
        $region15: #{tpu_custom_call.1} parent=11 // pred_region
          %232 = vsyncadd [#allocation7], 0
          %s233 = sshll.u32 %s1, 4
          %s234 = int_to_ptr.hbm [resolvable:$true] %s233
          %s235 = sshll.u32 [#allocation6], 4
          %s236 = int_to_ptr.vmem [resolvable:$true] %s235
          %241 = dma.hbm_to_vmem [thread:$0]  %s234, 1024, %s236, [#allocation7], 64, 64, 4
        $region16: #{tpu_custom_call.1} parent=11 // pred_fallthru
          _
        // Predicated region
        $region17: #{tpu_custom_call.1} parent=11 // pred_check
          %p242 = pneg %p101
        $region18: #{tpu_custom_call.1} parent=11 // pred_check_branch
          %244 = sbr.rel (%p242) target = $region20
        $region19: #{tpu_custom_call.1} parent=11 // pred_region
          _
        $region20: #{tpu_custom_call.1} parent=11 // pred_fallthru
          _
        // Predicated region
        $region21: #{tpu_custom_call.1} parent=11 // pred_check
          %p245 = pneg %p122
        $region22: #{tpu_custom_call.1} parent=11 // pred_check_branch
          %247 = sbr.rel (%p245) target = $region24
        $region23: #{tpu_custom_call.1} parent=11 // pred_region
          %249 = vsyncadd [#allocation7], 0
          %s250 = sshll.u32 %s3, 4
          %s251 = int_to_ptr.hbm [resolvable:$true] %s250
          %s252 = sshll.u32 [#allocation8], 4
          %s253 = int_to_ptr.vmem [resolvable:$true] %s252
          %258 = dma.hbm_to_vmem [thread:$0]  %s251, 9216, %s253, [#allocation7], 64, 64, 4
        $region24: #{tpu_custom_call.1} parent=11 // pred_fallthru
          _
        // Predicated region
        $region25: #{tpu_custom_call.1} parent=11 // pred_check
          %p259 = pneg %p143
        $region26: #{tpu_custom_call.1} parent=11 // pred_check_branch
          %261 = sbr.rel (%p259) target = $region28
        $region27: #{tpu_custom_call.1} parent=11 // pred_region
          _
        $region28: #{tpu_custom_call.1} parent=11 // pred_fallthru
          _
        // Predicated region
        $region29: #{tpu_custom_call.1} parent=11 // pred_check
          %p262 = pneg %p164
        $region30: #{tpu_custom_call.1} parent=11 // pred_check_branch
          %264 = sbr.rel (%p262) target = $region32
        $region31: #{tpu_custom_call.1} parent=11 // pred_region
          %266 = vsyncadd [#allocation10], 0
          %s267 = sshll.u32 %s5, 4
          %s268 = int_to_ptr.hbm [resolvable:$true] %s267
          %s269 = sshll.u32 [#allocation9], 4
          %s270 = int_to_ptr.vmem [resolvable:$true] %s269
          %275 = dma.hbm_to_vmem [thread:$0]  %s268, 1024, %s270, [#allocation10], 64, 64, 4
        $region32: #{tpu_custom_call.1} parent=11 // pred_fallthru
          _
        // Predicated region
        $region33: #{tpu_custom_call.1} parent=11 // pred_check
          %p276 = pneg %p185
        $region34: #{tpu_custom_call.1} parent=11 // pred_check_branch
          %278 = sbr.rel (%p276) target = $region36
        $region35: #{tpu_custom_call.1} parent=11 // pred_region
          _
        $region36: #{tpu_custom_call.1} parent=11 // pred_fallthru
          _
      $region12: #{tpu_custom_call.1} parent=5 // pred_fallthru
        _
      %p279 = scmp.lt.s32.totalorder %s21, 2
      // Predicated region
      $region37: #{tpu_custom_call.1} parent=5 // pred_check
        %p280 = pneg %p279
      $region38: #{tpu_custom_call.1} parent=5 // pred_check_branch
        %282 = sbr.rel (%p280) target = $region40
      $region39: #{tpu_custom_call.1} parent=5 // pred_region
        // Predicated region
        $region41: #{tpu_custom_call.1} parent=39 // pred_check
          %p283 = pneg %p53
        $region42: #{tpu_custom_call.1} parent=39 // pred_check_branch
          %285 = sbr.rel (%p283) target = $region44
        $region43: #{tpu_custom_call.1} parent=39 // pred_region
          %s286 = sand.u32 %s43, 1
          %s287 = scalar_lea.sflag [#allocation4], %s286
          %s288 = sand.u32 %s43, 1
          %s289 = smul.addr %s288, 128
          %s290 = scalar_lea.vmem [#allocation3], %s289
          %292 = vsyncadd %s287, 0
          %s293 = smul.addr %s28, 32
          %s294 = smul.addr %s293, 4
          %s295 = scalar_lea.hbm %s0, %s294
          %s296 = sshll.u32 %s295, 4
          %s297 = int_to_ptr.hbm [resolvable:$true] %s296
          %s298 = sshll.u32 %s290, 4
          %s299 = int_to_ptr.vmem [resolvable:$true] %s298
          %304 = dma.hbm_to_vmem [thread:$0]  %s297, 2048, %s299, %s287, 64, 64, 4
        $region44: #{tpu_custom_call.1} parent=39 // pred_fallthru
          _
      $region40: #{tpu_custom_call.1} parent=5 // pred_fallthru
        _
      %p305 = scmp.le.s32.totalorder 1, %s21
      %p306 = scmp.lt.s32.totalorder %s21, 3
      %p307 = pnand %p305, %p306
      %p308 = pneg %p307
      // Predicated region
      $region45: #{tpu_custom_call.1} parent=5 // pred_check
        _
      $region46: #{tpu_custom_call.1} parent=5 // pred_check_branch
        %310 = sbr.rel (%p307) target = $region48
      $region47: #{tpu_custom_call.1} parent=5 // pred_region
        %s311 = ssub.s32 %s21, 1
        %s312 = sand.u32 %s46, 1
        %s313 = scalar_lea.sflag [#allocation4], %s312
        %s314 = sand.u32 %s46, 1
        %s315 = smul.addr %s314, 128
        %s316 = scalar_lea.vmem [#allocation3], %s315
        // Predicated region
        $region49: #{tpu_custom_call.1} parent=47 // pred_check
          %p317 = pneg %p59
        $region50: #{tpu_custom_call.1} parent=47 // pred_check_branch
          %319 = sbr.rel (%p317) target = $region52
        $region51: #{tpu_custom_call.1} parent=47 // pred_region
          %321 = dma.done %s313, 2048
        $region52: #{tpu_custom_call.1} parent=47 // pred_fallthru
          _
        // Predicated region
        $region53: #{tpu_custom_call.1} parent=47 // pred_check
          %p322 = pneg %p80
        $region54: #{tpu_custom_call.1} parent=47 // pred_check_branch
          %324 = sbr.rel (%p322) target = $region56
        $region55: #{tpu_custom_call.1} parent=47 // pred_region
          %326 = dma.done [#allocation7], 1024
        $region56: #{tpu_custom_call.1} parent=47 // pred_fallthru
          _
        // Predicated region
        $region57: #{tpu_custom_call.1} parent=47 // pred_check
          %p327 = pneg %p122
        $region58: #{tpu_custom_call.1} parent=47 // pred_check_branch
          %329 = sbr.rel (%p327) target = $region60
        $region59: #{tpu_custom_call.1} parent=47 // pred_region
          %331 = dma.done [#allocation7], 9216
        $region60: #{tpu_custom_call.1} parent=47 // pred_fallthru
          _
        // Predicated region
        $region61: #{tpu_custom_call.1} parent=47 // pred_check
          %p332 = pneg %p164
        $region62: #{tpu_custom_call.1} parent=47 // pred_check_branch
          %334 = sbr.rel (%p332) target = $region64
        $region63: #{tpu_custom_call.1} parent=47 // pred_region
          %336 = dma.done [#allocation10], 1024
        $region64: #{tpu_custom_call.1} parent=47 // pred_fallthru
          _
        %s337 = sand.u32 %s46, 1
        %s338 = scalar_lea.sflag [#allocation4], %s337
        %s339 = sand.u32 %s46, 1
        %s340 = smul.addr %s339, 128
        %s341 = scalar_lea.vmem [#allocation3], %s340
        %p342 = pneg %p59
        %p343 = pneg %p56
        %p344 = pneg %p80
        %p345 = pneg %p77
        %p346 = pneg %p101
        %p347 = pneg %p98
        %p348 = pneg %p122
        %p349 = pneg %p119
        %p350 = pneg %p143
        %p351 = pneg %p140
        %p352 = pneg %p164
        %p353 = pneg %p161
        %p354 = pneg %p185
        %p355 = pneg %p182
        %p356 = pneg %p213
        %p357 = pneg %p210
        %s358 = sand.u32 %s200, 1
        %s359 = scalar_lea.sflag [#allocation5], %s358
        %s360 = sand.u32 %s200, 1
        %s361 = smul.addr %s360, 128
        %s362 = scalar_lea.vmem [#allocation11], %s361
        %s363 = smul.u32 16, %s31
        %s365 = smul.u32 %s31, 16
        %s366 = ssub.s32 %s365, 1
        %p367 = scmp.gt.s32.totalorder %s366, 0
        %s368 = scalar_select %p367, %s366, 0
        %s369 = sadd.s32 %s365, 16
        %p370 = scmp.lt.s32.totalorder %s369, 15
        %s371 = scalar_select %p370, %s369, 15
        %s372 = smul.u32 %s365, 2
        %s373 = smul.addr %s372, 4
        %s374 = scalar_lea.vmem %s316, %s373 [#allocation3]
        %v375 = vld [vmem:[%s374] sm:$0xf]
        %v376 = vld [vmem:[%s374 + $0x4] sm:$0xf]
        %v377 = vld [vmem:[%s374 + $0x8] sm:$0xf]
        %v378 = vld [vmem:[%s374 + $0xc] sm:$0xf]
        %v379 = vld [vmem:[%s374 + $0x10] sm:$0xf]
        %v380 = vld [vmem:[%s374 + $0x14] sm:$0xf]
        %v381 = vld [vmem:[%s374 + $0x18] sm:$0xf]
        %v382 = vld [vmem:[%s374 + $0x1c] sm:$0xf]
        %v383 = vld [vmem:[%s374 + $0x20] sm:$0xf]
        %v384 = vld [vmem:[%s374 + $0x24] sm:$0xf]
        %v385 = vld [vmem:[%s374 + $0x28] sm:$0xf]
        %v386 = vld [vmem:[%s374 + $0x2c] sm:$0xf]
        %v387 = vld [vmem:[%s374 + $0x30] sm:$0xf]
        %v388 = vld [vmem:[%s374 + $0x34] sm:$0xf]
        %v389 = vld [vmem:[%s374 + $0x38] sm:$0xf]
        %v390 = vld [vmem:[%s374 + $0x3c] sm:$0xf]
        %v391 = vld [vmem:[%s374 + $0x40] sm:$0xf]
        %v392 = vld [vmem:[%s374 + $0x44] sm:$0xf]
        %v393 = vld [vmem:[%s374 + $0x48] sm:$0xf]
        %v394 = vld [vmem:[%s374 + $0x4c] sm:$0xf]
        %v395 = vld [vmem:[%s374 + $0x50] sm:$0xf]
        %v396 = vld [vmem:[%s374 + $0x54] sm:$0xf]
        %v397 = vld [vmem:[%s374 + $0x58] sm:$0xf]
        %v398 = vld [vmem:[%s374 + $0x5c] sm:$0xf]
        %v399 = vld [vmem:[%s374 + $0x60] sm:$0xf]
        %v400 = vld [vmem:[%s374 + $0x64] sm:$0xf]
        %v401 = vld [vmem:[%s374 + $0x68] sm:$0xf]
        %v402 = vld [vmem:[%s374 + $0x6c] sm:$0xf]
        %v403 = vld [vmem:[%s374 + $0x70] sm:$0xf]
        %v404 = vld [vmem:[%s374 + $0x74] sm:$0xf]
        %v405 = vld [vmem:[%s374 + $0x78] sm:$0xf]
        %v406 = vld [vmem:[%s374 + $0x7c] sm:$0xf]
        %s407 = smul.u32 %s368, 2
        %s408 = smul.addr %s407, 4
        %s409 = scalar_lea.vmem %s316, %s408 [#allocation3]
        %v410 = vld [vmem:[%s409] sm:$0xf]
        %v411 = vld [vmem:[%s409 + $0x4] sm:$0xf]
        %s412 = smul.u32 %s371, 2
        %s413 = smul.addr %s412, 4
        %s414 = scalar_lea.vmem %s316, %s413 [#allocation3]
        %v415 = vld [vmem:[%s414] sm:$0xf]
        %v416 = vld [vmem:[%s414 + $0x4] sm:$0xf]
        %v417 = vld [vmem:[#allocation6] sm:$0xf]
        %v418 = vld [vmem:[#allocation6 + $0x4] sm:$0xf]
        %v419 = vld [vmem:[#allocation6 + $0x8] sm:$0xf]
        %v420 = vld [vmem:[#allocation6 + $0xc] sm:$0xf]
        %v421 = vld [vmem:[#allocation6 + $0x10] sm:$0xf]
        %v422 = vld [vmem:[#allocation6 + $0x14] sm:$0xf]
        %v423 = vld [vmem:[#allocation6 + $0x18] sm:$0xf]
        %v424 = vld [vmem:[#allocation6 + $0x1c] sm:$0xf]
        %v425 = vld [vmem:[#allocation6 + $0x20] sm:$0xf]
        %v426 = vld [vmem:[#allocation6 + $0x24] sm:$0xf]
        %v427 = vld [vmem:[#allocation6 + $0x28] sm:$0xf]
        %v428 = vld [vmem:[#allocation6 + $0x2c] sm:$0xf]
        %v429 = vld [vmem:[#allocation6 + $0x30] sm:$0xf]
        %v430 = vld [vmem:[#allocation6 + $0x34] sm:$0xf]
        %v431 = vld [vmem:[#allocation6 + $0x38] sm:$0xf]
        %v432 = vld [vmem:[#allocation6 + $0x3c] sm:$0xf]
        %v433 = vld [vmem:[%s2] sm:$0x1]
        %v435 = vperm.slane %v433, 0
        %v473 = vunpack.c.l.b16 %v410
        %v474 = vunpack.c.l.b16 %v411
        %v475 = vunpack.c.l.b16 %v375
        %v476 = vunpack.c.l.b16 %v376
        %v477 = vunpack.c.l.b16 %v377
        %v478 = vunpack.c.l.b16 %v378
        %v479 = vunpack.c.l.b16 %v379
        %v480 = vunpack.c.l.b16 %v380
        %v481 = vunpack.c.l.b16 %v381
        %v482 = vunpack.c.l.b16 %v382
        %v483 = vunpack.c.l.b16 %v383
        %v484 = vunpack.c.l.b16 %v384
        %v485 = vunpack.c.l.b16 %v385
        %v486 = vunpack.c.l.b16 %v386
        %v487 = vunpack.c.l.b16 %v387
        %v488 = vunpack.c.l.b16 %v388
        %v489 = vunpack.c.l.b16 %v389
        %v490 = vunpack.c.l.b16 %v390
        %v491 = vunpack.c.l.b16 %v391
        %v492 = vunpack.c.l.b16 %v392
        %v493 = vunpack.c.l.b16 %v393
        %v494 = vunpack.c.l.b16 %v394
        %v495 = vunpack.c.l.b16 %v395
        %v496 = vunpack.c.l.b16 %v396
        %v497 = vunpack.c.l.b16 %v397
        %v498 = vunpack.c.l.b16 %v398
        %v499 = vunpack.c.l.b16 %v399
        %v500 = vunpack.c.l.b16 %v400
        %v501 = vunpack.c.l.b16 %v401
        %v502 = vunpack.c.l.b16 %v402
        %v503 = vunpack.c.l.b16 %v403
        %v504 = vunpack.c.l.b16 %v404
        %v505 = vunpack.c.l.b16 %v405
        %v506 = vunpack.c.l.b16 %v406
        %v507 = vunpack.c.l.b16 %v415
        %v508 = vunpack.c.l.b16 %v416
        %v509 = vpack.c.b16 %v474, %v473
        %v510 = vpack.c.b16 %v476, %v475
        %v511 = vpack.c.b16 %v478, %v477
        %v512 = vpack.c.b16 %v480, %v479
        %v513 = vpack.c.b16 %v482, %v481
        %v514 = vpack.c.b16 %v484, %v483
        %v515 = vpack.c.b16 %v486, %v485
        %v516 = vpack.c.b16 %v488, %v487
        %v517 = vpack.c.b16 %v490, %v489
        %v518 = vpack.c.b16 %v492, %v491
        %v519 = vpack.c.b16 %v494, %v493
        %v520 = vpack.c.b16 %v496, %v495
        %v521 = vpack.c.b16 %v498, %v497
        %v522 = vpack.c.b16 %v500, %v499
        %v523 = vpack.c.b16 %v502, %v501
        %v524 = vpack.c.b16 %v504, %v503
        %v525 = vpack.c.b16 %v506, %v505
        %v526 = vpack.c.b16 %v508, %v507
        %v561 = vunpack.c.l.b16 %v417
        %v562 = vunpack.c.l.b16 %v418
        %v563 = vunpack.c.l.b16 %v419
        %v564 = vunpack.c.l.b16 %v420
        %v565 = vunpack.c.l.b16 %v421
        %v566 = vunpack.c.l.b16 %v422
        %v567 = vunpack.c.l.b16 %v423
        %v568 = vunpack.c.l.b16 %v424
        %v569 = vunpack.c.l.b16 %v425
        %v570 = vunpack.c.l.b16 %v426
        %v571 = vunpack.c.l.b16 %v427
        %v572 = vunpack.c.l.b16 %v428
        %v573 = vunpack.c.l.b16 %v429
        %v574 = vunpack.c.l.b16 %v430
        %v575 = vunpack.c.l.b16 %v431
        %v576 = vunpack.c.l.b16 %v432
        %v577 = vpack.c.b16 %v562, %v561
        %v578 = vpack.c.b16 %v564, %v563
        %v579 = vpack.c.b16 %v566, %v565
        %v580 = vpack.c.b16 %v568, %v567
        %v581 = vpack.c.b16 %v570, %v569
        %v582 = vpack.c.b16 %v572, %v571
        %v583 = vpack.c.b16 %v574, %v573
        %v584 = vpack.c.b16 %v576, %v575
        %593 = vmatpush.bf16.msra.mxu0 %v584
        %594 = vmatpush.bf16.msra.mxu0 %v583
        %595 = vmatpush.bf16.msra.mxu0 %v582
        %596 = vmatpush.bf16.msra.mxu0 %v581
        %597 = vmatpush.bf16.msra.mxu0 %v580
        %598 = vmatpush.bf16.msra.mxu0 %v579
        %599 = vmatpush.bf16.msra.mxu0 %v578
        %600 = vmatpush.bf16.msra.mxu0 %v577
        %601 = vmatmul.bf16.gmra.mxu0 %v509
        %v602 = vpop.f32.mrf.mxu0
        %v603 = vadd.f32 %v435, %v602
        %v604 = vpop.f32.mrf.mxu0
        %v605 = vadd.f32 %v435, %v604
        %606 = vmatmul.bf16.gmra.mxu0 %v510
        %v607 = vpop.f32.mrf.mxu0
        %v608 = vadd.f32 %v435, %v607
        %v609 = vpop.f32.mrf.mxu0
        %v610 = vadd.f32 %v435, %v609
        %611 = vmatmul.bf16.gmra.mxu0 %v511
        %v612 = vpop.f32.mrf.mxu0
        %v613 = vadd.f32 %v435, %v612
        %v614 = vpop.f32.mrf.mxu0
        %v615 = vadd.f32 %v435, %v614
        %616 = vmatmul.bf16.gmra.mxu0 %v512
        %v617 = vpop.f32.mrf.mxu0
        %v618 = vadd.f32 %v435, %v617
        %v619 = vpop.f32.mrf.mxu0
        %v620 = vadd.f32 %v435, %v619
        %621 = vmatmul.bf16.gmra.mxu0 %v513
        %v622 = vpop.f32.mrf.mxu0
        %v623 = vadd.f32 %v435, %v622
        %v624 = vpop.f32.mrf.mxu0
        %v625 = vadd.f32 %v435, %v624
        %626 = vmatmul.bf16.gmra.mxu0 %v514
        %v627 = vpop.f32.mrf.mxu0
        %v628 = vadd.f32 %v435, %v627
        %v629 = vpop.f32.mrf.mxu0
        %v630 = vadd.f32 %v435, %v629
        %631 = vmatmul.bf16.gmra.mxu0 %v515
        %v632 = vpop.f32.mrf.mxu0
        %v633 = vadd.f32 %v435, %v632
        %v634 = vpop.f32.mrf.mxu0
        %v635 = vadd.f32 %v435, %v634
        %636 = vmatmul.bf16.gmra.mxu0 %v516
        %v637 = vpop.f32.mrf.mxu0
        %v638 = vadd.f32 %v435, %v637
        %v639 = vpop.f32.mrf.mxu0
        %v640 = vadd.f32 %v435, %v639
        %641 = vmatmul.bf16.gmra.mxu0 %v517
        %v642 = vpop.f32.mrf.mxu0
        %v643 = vadd.f32 %v435, %v642
        %v644 = vpop.f32.mrf.mxu0
        %v645 = vadd.f32 %v435, %v644
        %646 = vmatmul.bf16.gmra.mxu0 %v518
        %v647 = vpop.f32.mrf.mxu0
        %v648 = vadd.f32 %v435, %v647
        %v649 = vpop.f32.mrf.mxu0
        %v650 = vadd.f32 %v435, %v649
        %651 = vmatmul.bf16.gmra.mxu0 %v519
        %v652 = vpop.f32.mrf.mxu0
        %v653 = vadd.f32 %v435, %v652
        %v654 = vpop.f32.mrf.mxu0
        %v655 = vadd.f32 %v435, %v654
        %656 = vmatmul.bf16.gmra.mxu0 %v520
        %v657 = vpop.f32.mrf.mxu0
        %v658 = vadd.f32 %v435, %v657
        %v659 = vpop.f32.mrf.mxu0
        %v660 = vadd.f32 %v435, %v659
        %661 = vmatmul.bf16.gmra.mxu0 %v521
        %v662 = vpop.f32.mrf.mxu0
        %v663 = vadd.f32 %v435, %v662
        %v664 = vpop.f32.mrf.mxu0
        %v665 = vadd.f32 %v435, %v664
        %666 = vmatmul.bf16.gmra.mxu0 %v522
        %v667 = vpop.f32.mrf.mxu0
        %v668 = vadd.f32 %v435, %v667
        %v669 = vpop.f32.mrf.mxu0
        %v670 = vadd.f32 %v435, %v669
        %671 = vmatmul.bf16.gmra.mxu0 %v523
        %v672 = vpop.f32.mrf.mxu0
        %v673 = vadd.f32 %v435, %v672
        %v674 = vpop.f32.mrf.mxu0
        %v675 = vadd.f32 %v435, %v674
        %676 = vmatmul.bf16.gmra.mxu0 %v524
        %v677 = vpop.f32.mrf.mxu0
        %v678 = vadd.f32 %v435, %v677
        %v679 = vpop.f32.mrf.mxu0
        %v680 = vadd.f32 %v435, %v679
        %681 = vmatmul.bf16.gmra.mxu0 %v525
        %v682 = vpop.f32.mrf.mxu0
        %v683 = vadd.f32 %v435, %v682
        %v684 = vpop.f32.mrf.mxu0
        %v685 = vadd.f32 %v435, %v684
        %686 = vmatmul.bf16.gmra.mxu0 %v526
        %v687 = vpop.f32.mrf.mxu0
        %v688 = vadd.f32 %v435, %v687
        %v689 = vpop.f32.mrf.mxu0
        %v690 = vadd.f32 %v435, %v689
        %691 = vdwg.mxu0
        %v692 = vmax.f32 %v603, 0.0
        %v693 = vmax.f32 %v605, 0.0
        %v694 = vmax.f32 %v608, 0.0
        %v695 = vmax.f32 %v610, 0.0
        %v696 = vmax.f32 %v613, 0.0
        %v697 = vmax.f32 %v615, 0.0
        %v698 = vmax.f32 %v618, 0.0
        %v699 = vmax.f32 %v620, 0.0
        %v700 = vmax.f32 %v623, 0.0
        %v701 = vmax.f32 %v625, 0.0
        %v702 = vmax.f32 %v628, 0.0
        %v703 = vmax.f32 %v630, 0.0
        %v704 = vmax.f32 %v633, 0.0
        %v705 = vmax.f32 %v635, 0.0
        %v706 = vmax.f32 %v638, 0.0
        %v707 = vmax.f32 %v640, 0.0
        %v708 = vmax.f32 %v643, 0.0
        %v709 = vmax.f32 %v645, 0.0
        %v710 = vmax.f32 %v648, 0.0
        %v711 = vmax.f32 %v650, 0.0
        %v712 = vmax.f32 %v653, 0.0
        %v713 = vmax.f32 %v655, 0.0
        %v714 = vmax.f32 %v658, 0.0
        %v715 = vmax.f32 %v660, 0.0
        %v716 = vmax.f32 %v663, 0.0
        %v717 = vmax.f32 %v665, 0.0
        %v718 = vmax.f32 %v668, 0.0
        %v719 = vmax.f32 %v670, 0.0
        %v720 = vmax.f32 %v673, 0.0
        %v721 = vmax.f32 %v675, 0.0
        %v722 = vmax.f32 %v678, 0.0
        %v723 = vmax.f32 %v680, 0.0
        %v724 = vmax.f32 %v683, 0.0
        %v725 = vmax.f32 %v685, 0.0
        %v726 = vmax.f32 %v688, 0.0
        %v727 = vmax.f32 %v690, 0.0
        %v728 = vpack.c.bf16 %v692, %v692
        %v729 = vpack.c.bf16 %v693, %v693
        %v730 = vpack.c.bf16 %v694, %v694
        %v731 = vpack.c.bf16 %v695, %v695
        %v732 = vpack.c.bf16 %v696, %v696
        %v733 = vpack.c.bf16 %v697, %v697
        %v734 = vpack.c.bf16 %v698, %v698
        %v735 = vpack.c.bf16 %v699, %v699
        %v736 = vpack.c.bf16 %v700, %v700
        %v737 = vpack.c.bf16 %v701, %v701
        %v738 = vpack.c.bf16 %v702, %v702
        %v739 = vpack.c.bf16 %v703, %v703
        %v740 = vpack.c.bf16 %v704, %v704
        %v741 = vpack.c.bf16 %v705, %v705
        %v742 = vpack.c.bf16 %v706, %v706
        %v743 = vpack.c.bf16 %v707, %v707
        %v744 = vpack.c.bf16 %v708, %v708
        %v745 = vpack.c.bf16 %v709, %v709
        %v746 = vpack.c.bf16 %v710, %v710
        %v747 = vpack.c.bf16 %v711, %v711
        %v748 = vpack.c.bf16 %v712, %v712
        %v749 = vpack.c.bf16 %v713, %v713
        %v750 = vpack.c.bf16 %v714, %v714
        %v751 = vpack.c.bf16 %v715, %v715
        %v752 = vpack.c.bf16 %v716, %v716
        %v753 = vpack.c.bf16 %v717, %v717
        %v754 = vpack.c.bf16 %v718, %v718
        %v755 = vpack.c.bf16 %v719, %v719
        %v756 = vpack.c.bf16 %v720, %v720
        %v757 = vpack.c.bf16 %v721, %v721
        %v758 = vpack.c.bf16 %v722, %v722
        %v759 = vpack.c.bf16 %v723, %v723
        %v760 = vpack.c.bf16 %v724, %v724
        %v761 = vpack.c.bf16 %v725, %v725
        %v762 = vpack.c.bf16 %v726, %v726
        %v763 = vpack.c.bf16 %v727, %v727
        %764 = vst [vmem:[#allocation2] sm:$0xf] %v728
        %765 = vst [vmem:[#allocation2 + $0x4] sm:$0xf] %v729
        %766 = vst [vmem:[#allocation2 + $0x8] sm:$0xf] %v730
        %767 = vst [vmem:[#allocation2 + $0xc] sm:$0xf] %v731
        %768 = vst [vmem:[#allocation2 + $0x10] sm:$0xf] %v732
        %769 = vst [vmem:[#allocation2 + $0x14] sm:$0xf] %v733
        %770 = vst [vmem:[#allocation2 + $0x18] sm:$0xf] %v734
        %771 = vst [vmem:[#allocation2 + $0x1c] sm:$0xf] %v735
        %772 = vst [vmem:[#allocation2 + $0x20] sm:$0xf] %v736
        %773 = vst [vmem:[#allocation2 + $0x24] sm:$0xf] %v737
        %774 = vst [vmem:[#allocation2 + $0x28] sm:$0xf] %v738
        %775 = vst [vmem:[#allocation2 + $0x2c] sm:$0xf] %v739
        %776 = vst [vmem:[#allocation2 + $0x30] sm:$0xf] %v740
        %777 = vst [vmem:[#allocation2 + $0x34] sm:$0xf] %v741
        %778 = vst [vmem:[#allocation2 + $0x38] sm:$0xf] %v742
        %779 = vst [vmem:[#allocation2 + $0x3c] sm:$0xf] %v743
        %780 = vst [vmem:[#allocation2 + $0x40] sm:$0xf] %v744
        %781 = vst [vmem:[#allocation2 + $0x44] sm:$0xf] %v745
        %782 = vst [vmem:[#allocation2 + $0x48] sm:$0xf] %v746
        %783 = vst [vmem:[#allocation2 + $0x4c] sm:$0xf] %v747
        %784 = vst [vmem:[#allocation2 + $0x50] sm:$0xf] %v748
        %785 = vst [vmem:[#allocation2 + $0x54] sm:$0xf] %v749
        %786 = vst [vmem:[#allocation2 + $0x58] sm:$0xf] %v750
        %787 = vst [vmem:[#allocation2 + $0x5c] sm:$0xf] %v751
        %788 = vst [vmem:[#allocation2 + $0x60] sm:$0xf] %v752
        %789 = vst [vmem:[#allocation2 + $0x64] sm:$0xf] %v753
        %790 = vst [vmem:[#allocation2 + $0x68] sm:$0xf] %v754
        %791 = vst [vmem:[#allocation2 + $0x6c] sm:$0xf] %v755
        %792 = vst [vmem:[#allocation2 + $0x70] sm:$0xf] %v756
        %793 = vst [vmem:[#allocation2 + $0x74] sm:$0xf] %v757
        %794 = vst [vmem:[#allocation2 + $0x78] sm:$0xf] %v758
        %795 = vst [vmem:[#allocation2 + $0x7c] sm:$0xf] %v759
        %796 = vst [vmem:[#allocation2 + $0x80] sm:$0xf] %v760
        %797 = vst [vmem:[#allocation2 + $0x84] sm:$0xf] %v761
        %798 = vst [vmem:[#allocation2 + $0x88] sm:$0xf] %v762
        %799 = vst [vmem:[#allocation2 + $0x8c] sm:$0xf] %v763
        %p800 = scmp.eq.s32.totalorder %s31, 0
        // Predicated region
        $region65: #{tpu_custom_call.1} parent=47 // pred_check
          %p801 = pneg %p800
        $region66: #{tpu_custom_call.1} parent=47 // pred_check_branch
          %803 = sbr.rel (%p801) target = $region68
        $region67: #{tpu_custom_call.1} parent=47 // pred_region
          %804 = vst [vmem:[#allocation2] sm:$0xf] 0
          %805 = vst [vmem:[#allocation2 + $0x4] sm:$0xf] 0
          %s806 = scalar_lea.vmem [#allocation2], 136
          %807 = vst [vmem:[%s806] sm:$0xf] 0
          %808 = vst [vmem:[%s806 + $0x4] sm:$0xf] 0
        $region68: #{tpu_custom_call.1} parent=47 // pred_fallthru
          _
        %v809 = vld [vmem:[#allocation2] sm:$0xf]
        %v810 = vld [vmem:[#allocation2 + $0x4] sm:$0xf]
        %v811 = vld [vmem:[#allocation2 + $0x8] sm:$0xf]
        %v812 = vld [vmem:[#allocation2 + $0xc] sm:$0xf]
        %v813 = vld [vmem:[#allocation2 + $0x10] sm:$0xf]
        %v814 = vld [vmem:[#allocation2 + $0x14] sm:$0xf]
        %v815 = vld [vmem:[#allocation2 + $0x18] sm:$0xf]
        %v816 = vld [vmem:[#allocation2 + $0x1c] sm:$0xf]
        %v817 = vld [vmem:[#allocation2 + $0x20] sm:$0xf]
        %v818 = vld [vmem:[#allocation2 + $0x24] sm:$0xf]
        %v819 = vld [vmem:[#allocation2 + $0x28] sm:$0xf]
        %v820 = vld [vmem:[#allocation2 + $0x2c] sm:$0xf]
        %v821 = vld [vmem:[#allocation2 + $0x30] sm:$0xf]
        %v822 = vld [vmem:[#allocation2 + $0x34] sm:$0xf]
        %v823 = vld [vmem:[#allocation2 + $0x38] sm:$0xf]
        %v824 = vld [vmem:[#allocation2 + $0x3c] sm:$0xf]
        %v825 = vld [vmem:[#allocation2 + $0x40] sm:$0xf]
        %v826 = vld [vmem:[#allocation2 + $0x44] sm:$0xf]
        %v827 = vld [vmem:[#allocation2 + $0x48] sm:$0xf]
        %v828 = vld [vmem:[#allocation2 + $0x4c] sm:$0xf]
        %v829 = vld [vmem:[#allocation2 + $0x50] sm:$0xf]
        %v830 = vld [vmem:[#allocation2 + $0x54] sm:$0xf]
        %v831 = vld [vmem:[#allocation2 + $0x58] sm:$0xf]
        %v832 = vld [vmem:[#allocation2 + $0x5c] sm:$0xf]
        %v833 = vld [vmem:[#allocation2 + $0x60] sm:$0xf]
        %v834 = vld [vmem:[#allocation2 + $0x64] sm:$0xf]
        %v835 = vld [vmem:[#allocation2 + $0x68] sm:$0xf]
        %v836 = vld [vmem:[#allocation2 + $0x6c] sm:$0xf]
        %v837 = vld [vmem:[#allocation2 + $0x70] sm:$0xf]
        %v838 = vld [vmem:[#allocation2 + $0x74] sm:$0xf]
        %v839 = vld [vmem:[#allocation2 + $0x78] sm:$0xf]
        %v840 = vld [vmem:[#allocation2 + $0x7c] sm:$0xf]
        %v841 = vld [vmem:[#allocation2 + $0x80] sm:$0xf]
        %v842 = vld [vmem:[#allocation2 + $0x84] sm:$0xf]
        %v843 = vld [vmem:[#allocation2 + $0x88] sm:$0xf]
        %v844 = vld [vmem:[#allocation2 + $0x8c] sm:$0xf]
        %v881 = vunpack.c.l.b16 %v809
        %v882 = vunpack.c.l.b16 %v810
        %v883 = vunpack.c.l.b16 %v811
        %v884 = vunpack.c.l.b16 %v812
        %v885 = vunpack.c.l.b16 %v813
        %v886 = vunpack.c.l.b16 %v814
        %v887 = vunpack.c.l.b16 %v815
        %v888 = vunpack.c.l.b16 %v816
        %v889 = vunpack.c.l.b16 %v817
        %v890 = vunpack.c.l.b16 %v818
        %v891 = vunpack.c.l.b16 %v819
        %v892 = vunpack.c.l.b16 %v820
        %v893 = vunpack.c.l.b16 %v821
        %v894 = vunpack.c.l.b16 %v822
        %v895 = vunpack.c.l.b16 %v823
        %v896 = vunpack.c.l.b16 %v824
        %v897 = vunpack.c.l.b16 %v825
        %v898 = vunpack.c.l.b16 %v826
        %v899 = vunpack.c.l.b16 %v827
        %v900 = vunpack.c.l.b16 %v828
        %v901 = vunpack.c.l.b16 %v829
        %v902 = vunpack.c.l.b16 %v830
        %v903 = vunpack.c.l.b16 %v831
        %v904 = vunpack.c.l.b16 %v832
        %v905 = vunpack.c.l.b16 %v833
        %v906 = vunpack.c.l.b16 %v834
        %v907 = vunpack.c.l.b16 %v835
        %v908 = vunpack.c.l.b16 %v836
        %v909 = vunpack.c.l.b16 %v837
        %v910 = vunpack.c.l.b16 %v838
        %v911 = vunpack.c.l.b16 %v839
        %v912 = vunpack.c.l.b16 %v840
        %v913 = vunpack.c.l.b16 %v841
        %v914 = vunpack.c.l.b16 %v842
        %v915 = vunpack.c.l.b16 %v843
        %v916 = vunpack.c.l.b16 %v844
        %v917 = vpack.c.b16 %v882, %v881
        %v918 = vpack.c.b16 %v884, %v883
        %v919 = vpack.c.b16 %v886, %v885
        %v920 = vpack.c.b16 %v888, %v887
        %v921 = vpack.c.b16 %v890, %v889
        %v922 = vpack.c.b16 %v892, %v891
        %v923 = vpack.c.b16 %v894, %v893
        %v924 = vpack.c.b16 %v896, %v895
        %v925 = vpack.c.b16 %v898, %v897
        %v926 = vpack.c.b16 %v900, %v899
        %v927 = vpack.c.b16 %v902, %v901
        %v928 = vpack.c.b16 %v904, %v903
        %v929 = vpack.c.b16 %v906, %v905
        %v930 = vpack.c.b16 %v908, %v907
        %v931 = vpack.c.b16 %v910, %v909
        %v932 = vpack.c.b16 %v912, %v911
        %v933 = vpack.c.b16 %v914, %v913
        %v934 = vpack.c.b16 %v916, %v915
        %v936 = vshrl.u32 %v917, 16
        %v938 = vrot.slane %v936, 7
        %v939 = vshll.u32 %v917, 16
        %v941 = vor.u32 %v938, %v939
        %v943 = vshrl.u32 %v918, 16
        %v945 = vrot.slane %v943, 7
        %v946 = vshll.u32 %v918, 16
        %v948 = vor.u32 %v945, %v946
        %v950 = vshrl.u32 %v919, 16
        %v952 = vrot.slane %v950, 7
        %v953 = vshll.u32 %v919, 16
        %v955 = vor.u32 %v952, %v953
        %v957 = vshrl.u32 %v920, 16
        %v959 = vrot.slane %v957, 7
        %v960 = vshll.u32 %v920, 16
        %v962 = vor.u32 %v959, %v960
        %v964 = vshrl.u32 %v921, 16
        %v966 = vrot.slane %v964, 7
        %v967 = vshll.u32 %v921, 16
        %v969 = vor.u32 %v966, %v967
        %v971 = vshrl.u32 %v922, 16
        %v973 = vrot.slane %v971, 7
        %v974 = vshll.u32 %v922, 16
        %v976 = vor.u32 %v973, %v974
        %v978 = vshrl.u32 %v923, 16
        %v980 = vrot.slane %v978, 7
        %v981 = vshll.u32 %v923, 16
        %v983 = vor.u32 %v980, %v981
        %v985 = vshrl.u32 %v924, 16
        %v987 = vrot.slane %v985, 7
        %v988 = vshll.u32 %v924, 16
        %v990 = vor.u32 %v987, %v988
        %v992 = vshrl.u32 %v925, 16
        %v994 = vrot.slane %v992, 7
        %v995 = vshll.u32 %v925, 16
        %v997 = vor.u32 %v994, %v995
        %v999 = vshrl.u32 %v926, 16
        %v1001 = vrot.slane %v999, 7
        %v1002 = vshll.u32 %v926, 16
        %v1004 = vor.u32 %v1001, %v1002
        %v1006 = vshrl.u32 %v927, 16
        %v1008 = vrot.slane %v1006, 7
        %v1009 = vshll.u32 %v927, 16
        %v1011 = vor.u32 %v1008, %v1009
        %v1013 = vshrl.u32 %v928, 16
        %v1015 = vrot.slane %v1013, 7
        %v1016 = vshll.u32 %v928, 16
        %v1018 = vor.u32 %v1015, %v1016
        %v1020 = vshrl.u32 %v929, 16
        %v1022 = vrot.slane %v1020, 7
        %v1023 = vshll.u32 %v929, 16
        %v1025 = vor.u32 %v1022, %v1023
        %v1027 = vshrl.u32 %v930, 16
        %v1029 = vrot.slane %v1027, 7
        %v1030 = vshll.u32 %v930, 16
        %v1032 = vor.u32 %v1029, %v1030
        %v1034 = vshrl.u32 %v931, 16
        %v1036 = vrot.slane %v1034, 7
        %v1037 = vshll.u32 %v931, 16
        %v1039 = vor.u32 %v1036, %v1037
        %v1041 = vshrl.u32 %v932, 16
        %v1043 = vrot.slane %v1041, 7
        %v1044 = vshll.u32 %v932, 16
        %v1046 = vor.u32 %v1043, %v1044
        %v1048 = vshrl.u32 %v933, 16
        %v1050 = vrot.slane %v1048, 7
        %v1051 = vshll.u32 %v933, 16
        %v1053 = vor.u32 %v1050, %v1051
        %v1055 = vshrl.u32 %v934, 16
        %v1057 = vrot.slane %v1055, 7
        %v1058 = vshll.u32 %v934, 16
        %v1060 = vor.u32 %v1057, %v1058
        %vm1097 = vcmask 1040384
        %vm1098 = vsmask.f32 256
        %vm1099 = vmand %vm1097, %vm1098
        %v1100 = vsel %vm1099, 0, %v941
        %v1101 = vsel %vm1099, 0, %v948
        %v1102 = vsel %vm1099, 0, %v955
        %v1103 = vsel %vm1099, 0, %v962
        %v1104 = vsel %vm1099, 0, %v969
        %v1105 = vsel %vm1099, 0, %v976
        %v1106 = vsel %vm1099, 0, %v983
        %v1107 = vsel %vm1099, 0, %v990
        %v1108 = vsel %vm1099, 0, %v997
        %v1109 = vsel %vm1099, 0, %v1004
        %v1110 = vsel %vm1099, 0, %v1011
        %v1111 = vsel %vm1099, 0, %v1018
        %v1112 = vsel %vm1099, 0, %v1025
        %v1113 = vsel %vm1099, 0, %v1032
        %v1114 = vsel %vm1099, 0, %v1039
        %v1115 = vsel %vm1099, 0, %v1046
        %v1116 = vsel %vm1099, 0, %v1053
        %v1117 = vsel %vm1099, 0, %v1060
        %v1118 = vsel %vm1099, %v938, 0
        %v1119 = vsel %vm1099, %v945, 0
        %v1120 = vsel %vm1099, %v952, 0
        %v1121 = vsel %vm1099, %v959, 0
        %v1122 = vsel %vm1099, %v966, 0
        %v1123 = vsel %vm1099, %v973, 0
        %v1124 = vsel %vm1099, %v980, 0
        %v1125 = vsel %vm1099, %v987, 0
        %v1126 = vsel %vm1099, %v994, 0
        %v1127 = vsel %vm1099, %v1001, 0
        %v1128 = vsel %vm1099, %v1008, 0
        %v1129 = vsel %vm1099, %v1015, 0
        %v1130 = vsel %vm1099, %v1022, 0
        %v1131 = vsel %vm1099, %v1029, 0
        %v1132 = vsel %vm1099, %v1036, 0
        %v1133 = vsel %vm1099, %v1043, 0
        %v1134 = vsel %vm1099, %v1050, 0
        %v1135 = vsel %vm1099, %v1057, 0
        %vm1136 = vsmask.f32 7424
        %v1138 = vshrl.u32 %v1100, 16
        %v1140 = vshll.u32 %v1100, 16
        %v1142 = vrot.slane %v1140, 1
        %v1143 = vor.u32 %v1138, %v1142
        %v1145 = vshll.u32 %v1118, 16
        %v1147 = vrot.slane %v1145, 1
        %v1148 = vsel %vm1136, %v1143, %v1147
        %v1150 = vshrl.u32 %v1101, 16
        %v1152 = vshll.u32 %v1101, 16
        %v1154 = vrot.slane %v1152, 1
        %v1155 = vor.u32 %v1150, %v1154
        %v1157 = vshll.u32 %v1119, 16
        %v1159 = vrot.slane %v1157, 1
        %v1160 = vsel %vm1136, %v1155, %v1159
        %v1162 = vshrl.u32 %v1102, 16
        %v1164 = vshll.u32 %v1102, 16
        %v1166 = vrot.slane %v1164, 1
        %v1167 = vor.u32 %v1162, %v1166
        %v1169 = vshll.u32 %v1120, 16
        %v1171 = vrot.slane %v1169, 1
        %v1172 = vsel %vm1136, %v1167, %v1171
        %v1174 = vshrl.u32 %v1103, 16
        %v1176 = vshll.u32 %v1103, 16
        %v1178 = vrot.slane %v1176, 1
        %v1179 = vor.u32 %v1174, %v1178
        %v1181 = vshll.u32 %v1121, 16
        %v1183 = vrot.slane %v1181, 1
        %v1184 = vsel %vm1136, %v1179, %v1183
        %v1186 = vshrl.u32 %v1104, 16
        %v1188 = vshll.u32 %v1104, 16
        %v1190 = vrot.slane %v1188, 1
        %v1191 = vor.u32 %v1186, %v1190
        %v1193 = vshll.u32 %v1122, 16
        %v1195 = vrot.slane %v1193, 1
        %v1196 = vsel %vm1136, %v1191, %v1195
        %v1198 = vshrl.u32 %v1105, 16
        %v1200 = vshll.u32 %v1105, 16
        %v1202 = vrot.slane %v1200, 1
        %v1203 = vor.u32 %v1198, %v1202
        %v1205 = vshll.u32 %v1123, 16
        %v1207 = vrot.slane %v1205, 1
        %v1208 = vsel %vm1136, %v1203, %v1207
        %v1210 = vshrl.u32 %v1106, 16
        %v1212 = vshll.u32 %v1106, 16
        %v1214 = vrot.slane %v1212, 1
        %v1215 = vor.u32 %v1210, %v1214
        %v1217 = vshll.u32 %v1124, 16
        %v1219 = vrot.slane %v1217, 1
        %v1220 = vsel %vm1136, %v1215, %v1219
        %v1222 = vshrl.u32 %v1107, 16
        %v1224 = vshll.u32 %v1107, 16
        %v1226 = vrot.slane %v1224, 1
        %v1227 = vor.u32 %v1222, %v1226
        %v1229 = vshll.u32 %v1125, 16
        %v1231 = vrot.slane %v1229, 1
        %v1232 = vsel %vm1136, %v1227, %v1231
        %v1234 = vshrl.u32 %v1108, 16
        %v1236 = vshll.u32 %v1108, 16
        %v1238 = vrot.slane %v1236, 1
        %v1239 = vor.u32 %v1234, %v1238
        %v1241 = vshll.u32 %v1126, 16
        %v1243 = vrot.slane %v1241, 1
        %v1244 = vsel %vm1136, %v1239, %v1243
        %v1246 = vshrl.u32 %v1109, 16
        %v1248 = vshll.u32 %v1109, 16
        %v1250 = vrot.slane %v1248, 1
        %v1251 = vor.u32 %v1246, %v1250
        %v1253 = vshll.u32 %v1127, 16
        %v1255 = vrot.slane %v1253, 1
        %v1256 = vsel %vm1136, %v1251, %v1255
        %v1258 = vshrl.u32 %v1110, 16
        %v1260 = vshll.u32 %v1110, 16
        %v1262 = vrot.slane %v1260, 1
        %v1263 = vor.u32 %v1258, %v1262
        %v1265 = vshll.u32 %v1128, 16
        %v1267 = vrot.slane %v1265, 1
        %v1268 = vsel %vm1136, %v1263, %v1267
        %v1270 = vshrl.u32 %v1111, 16
        %v1272 = vshll.u32 %v1111, 16
        %v1274 = vrot.slane %v1272, 1
        %v1275 = vor.u32 %v1270, %v1274
        %v1277 = vshll.u32 %v1129, 16
        %v1279 = vrot.slane %v1277, 1
        %v1280 = vsel %vm1136, %v1275, %v1279
        %v1282 = vshrl.u32 %v1112, 16
        %v1284 = vshll.u32 %v1112, 16
        %v1286 = vrot.slane %v1284, 1
        %v1287 = vor.u32 %v1282, %v1286
        %v1289 = vshll.u32 %v1130, 16
        %v1291 = vrot.slane %v1289, 1
        %v1292 = vsel %vm1136, %v1287, %v1291
        %v1294 = vshrl.u32 %v1113, 16
        %v1296 = vshll.u32 %v1113, 16
        %v1298 = vrot.slane %v1296, 1
        %v1299 = vor.u32 %v1294, %v1298
        %v1301 = vshll.u32 %v1131, 16
        %v1303 = vrot.slane %v1301, 1
        %v1304 = vsel %vm1136, %v1299, %v1303
        %v1306 = vshrl.u32 %v1114, 16
        %v1308 = vshll.u32 %v1114, 16
        %v1310 = vrot.slane %v1308, 1
        %v1311 = vor.u32 %v1306, %v1310
        %v1313 = vshll.u32 %v1132, 16
        %v1315 = vrot.slane %v1313, 1
        %v1316 = vsel %vm1136, %v1311, %v1315
        %v1318 = vshrl.u32 %v1115, 16
        %v1320 = vshll.u32 %v1115, 16
        %v1322 = vrot.slane %v1320, 1
        %v1323 = vor.u32 %v1318, %v1322
        %v1325 = vshll.u32 %v1133, 16
        %v1327 = vrot.slane %v1325, 1
        %v1328 = vsel %vm1136, %v1323, %v1327
        %vm1377 = vcmask 1046528
        %v1378 = vrot.slane %v1100, 1
        %v1379 = vrot.slane %v1118, 1
        %v1380 = vsel %vm1377, %v1378, %v1379
        %v1381 = vrot.slane %v1101, 1
        %v1382 = vrot.slane %v1119, 1
        %v1383 = vsel %vm1377, %v1381, %v1382
        %v1384 = vrot.slane %v1102, 1
        %v1385 = vrot.slane %v1120, 1
        %v1386 = vsel %vm1377, %v1384, %v1385
        %v1387 = vrot.slane %v1103, 1
        %v1388 = vrot.slane %v1121, 1
        %v1389 = vsel %vm1377, %v1387, %v1388
        %v1390 = vrot.slane %v1104, 1
        %v1391 = vrot.slane %v1122, 1
        %v1392 = vsel %vm1377, %v1390, %v1391
        %v1393 = vrot.slane %v1105, 1
        %v1394 = vrot.slane %v1123, 1
        %v1395 = vsel %vm1377, %v1393, %v1394
        %v1396 = vrot.slane %v1106, 1
        %v1397 = vrot.slane %v1124, 1
        %v1398 = vsel %vm1377, %v1396, %v1397
        %v1399 = vrot.slane %v1107, 1
        %v1400 = vrot.slane %v1125, 1
        %v1401 = vsel %vm1377, %v1399, %v1400
        %v1402 = vrot.slane %v1108, 1
        %v1403 = vrot.slane %v1126, 1
        %v1404 = vsel %vm1377, %v1402, %v1403
        %v1405 = vrot.slane %v1109, 1
        %v1406 = vrot.slane %v1127, 1
        %v1407 = vsel %vm1377, %v1405, %v1406
        %v1408 = vrot.slane %v1110, 1
        %v1409 = vrot.slane %v1128, 1
        %v1410 = vsel %vm1377, %v1408, %v1409
        %v1411 = vrot.slane %v1111, 1
        %v1412 = vrot.slane %v1129, 1
        %v1413 = vsel %vm1377, %v1411, %v1412
        %v1414 = vrot.slane %v1112, 1
        %v1415 = vrot.slane %v1130, 1
        %v1416 = vsel %vm1377, %v1414, %v1415
        %v1417 = vrot.slane %v1113, 1
        %v1418 = vrot.slane %v1131, 1
        %v1419 = vsel %vm1377, %v1417, %v1418
        %v1420 = vrot.slane %v1114, 1
        %v1421 = vrot.slane %v1132, 1
        %v1422 = vsel %vm1377, %v1420, %v1421
        %v1423 = vrot.slane %v1115, 1
        %v1424 = vrot.slane %v1133, 1
        %v1425 = vsel %vm1377, %v1423, %v1424
        %v1443 = vshrl.u32 %v1116, 16
        %v1445 = vshll.u32 %v1116, 16
        %v1447 = vrot.slane %v1445, 1
        %v1448 = vor.u32 %v1443, %v1447
        %v1450 = vshll.u32 %v1134, 16
        %v1452 = vrot.slane %v1450, 1
        %v1453 = vsel %vm1136, %v1448, %v1452
        %v1457 = vrot.slane %v1116, 1
        %v1458 = vrot.slane %v1134, 1
        %v1459 = vsel %vm1377, %v1457, %v1458
        %v1462 = vshrl.u32 %v1117, 16
        %v1464 = vshll.u32 %v1117, 16
        %v1466 = vrot.slane %v1464, 1
        %v1467 = vor.u32 %v1462, %v1466
        %v1469 = vshll.u32 %v1135, 16
        %v1471 = vrot.slane %v1469, 1
        %v1472 = vsel %vm1136, %v1467, %v1471
        %v1476 = vrot.slane %v1117, 1
        %v1477 = vrot.slane %v1135, 1
        %v1478 = vsel %vm1377, %v1476, %v1477
        %v1480 = vld [vmem:[#allocation8] sm:$0xf]
        %v1481 = vld [vmem:[#allocation8 + $0x4] sm:$0xf]
        %v1482 = vld [vmem:[#allocation8 + $0x8] sm:$0xf]
        %v1483 = vld [vmem:[#allocation8 + $0xc] sm:$0xf]
        %v1484 = vld [vmem:[#allocation8 + $0x10] sm:$0xf]
        %v1485 = vld [vmem:[#allocation8 + $0x14] sm:$0xf]
        %v1486 = vld [vmem:[#allocation8 + $0x18] sm:$0xf]
        %v1487 = vld [vmem:[#allocation8 + $0x1c] sm:$0xf]
        %v1488 = vld [vmem:[#allocation8 + $0x20] sm:$0xf]
        %v1489 = vld [vmem:[#allocation8 + $0x24] sm:$0xf]
        %v1490 = vld [vmem:[#allocation8 + $0x28] sm:$0xf]
        %v1491 = vld [vmem:[#allocation8 + $0x2c] sm:$0xf]
        %v1492 = vld [vmem:[#allocation8 + $0x30] sm:$0xf]
        %v1493 = vld [vmem:[#allocation8 + $0x34] sm:$0xf]
        %v1494 = vld [vmem:[#allocation8 + $0x38] sm:$0xf]
        %v1495 = vld [vmem:[#allocation8 + $0x3c] sm:$0xf]
        %v1496 = vld [vmem:[#allocation8 + $0x40] sm:$0xf]
        %v1497 = vld [vmem:[#allocation8 + $0x44] sm:$0xf]
        %v1498 = vld [vmem:[#allocation8 + $0x48] sm:$0xf]
        %v1499 = vld [vmem:[#allocation8 + $0x4c] sm:$0xf]
        %v1500 = vld [vmem:[#allocation8 + $0x50] sm:$0xf]
        %v1501 = vld [vmem:[#allocation8 + $0x54] sm:$0xf]
        %v1502 = vld [vmem:[#allocation8 + $0x58] sm:$0xf]
        %v1503 = vld [vmem:[#allocation8 + $0x5c] sm:$0xf]
        %v1504 = vld [vmem:[#allocation8 + $0x60] sm:$0xf]
        %v1505 = vld [vmem:[#allocation8 + $0x64] sm:$0xf]
        %v1506 = vld [vmem:[#allocation8 + $0x68] sm:$0xf]
        %v1507 = vld [vmem:[#allocation8 + $0x6c] sm:$0xf]
        %v1508 = vld [vmem:[#allocation8 + $0x70] sm:$0xf]
        %v1509 = vld [vmem:[#allocation8 + $0x74] sm:$0xf]
        %v1510 = vld [vmem:[#allocation8 + $0x78] sm:$0xf]
        %v1511 = vld [vmem:[#allocation8 + $0x7c] sm:$0xf]
        %v1512 = vld [vmem:[#allocation8 + $0x80] sm:$0xf]
        %v1513 = vld [vmem:[#allocation8 + $0x84] sm:$0xf]
        %v1514 = vld [vmem:[#allocation8 + $0x88] sm:$0xf]
        %v1515 = vld [vmem:[#allocation8 + $0x8c] sm:$0xf]
        %v1516 = vld [vmem:[#allocation8 + $0x90] sm:$0xf]
        %v1517 = vld [vmem:[#allocation8 + $0x94] sm:$0xf]
        %v1518 = vld [vmem:[#allocation8 + $0x98] sm:$0xf]
        %v1519 = vld [vmem:[#allocation8 + $0x9c] sm:$0xf]
        %v1520 = vld [vmem:[#allocation8 + $0xa0] sm:$0xf]
        %v1521 = vld [vmem:[#allocation8 + $0xa4] sm:$0xf]
        %v1522 = vld [vmem:[#allocation8 + $0xa8] sm:$0xf]
        %v1523 = vld [vmem:[#allocation8 + $0xac] sm:$0xf]
        %v1524 = vld [vmem:[#allocation8 + $0xb0] sm:$0xf]
        %v1525 = vld [vmem:[#allocation8 + $0xb4] sm:$0xf]
        %v1526 = vld [vmem:[#allocation8 + $0xb8] sm:$0xf]
        %v1527 = vld [vmem:[#allocation8 + $0xbc] sm:$0xf]
        %v1528 = vld [vmem:[#allocation8 + $0xc0] sm:$0xf]
        %v1529 = vld [vmem:[#allocation8 + $0xc4] sm:$0xf]
        %v1530 = vld [vmem:[#allocation8 + $0xc8] sm:$0xf]
        %v1531 = vld [vmem:[#allocation8 + $0xcc] sm:$0xf]
        %v1532 = vld [vmem:[#allocation8 + $0xd0] sm:$0xf]
        %v1533 = vld [vmem:[#allocation8 + $0xd4] sm:$0xf]
        %v1534 = vld [vmem:[#allocation8 + $0xd8] sm:$0xf]
        %v1535 = vld [vmem:[#allocation8 + $0xdc] sm:$0xf]
        %v1536 = vld [vmem:[#allocation8 + $0xe0] sm:$0xf]
        %v1537 = vld [vmem:[#allocation8 + $0xe4] sm:$0xf]
        %v1538 = vld [vmem:[#allocation8 + $0xe8] sm:$0xf]
        %v1539 = vld [vmem:[#allocation8 + $0xec] sm:$0xf]
        %v1540 = vld [vmem:[#allocation8 + $0xf0] sm:$0xf]
        %v1541 = vld [vmem:[#allocation8 + $0xf4] sm:$0xf]
        %v1542 = vld [vmem:[#allocation8 + $0xf8] sm:$0xf]
        %v1543 = vld [vmem:[#allocation8 + $0xfc] sm:$0xf]
        %v1544 = vld [vmem:[#allocation8 + $0x100] sm:$0xf]
        %v1545 = vld [vmem:[#allocation8 + $0x104] sm:$0xf]
        %v1546 = vld [vmem:[#allocation8 + $0x108] sm:$0xf]
        %v1547 = vld [vmem:[#allocation8 + $0x10c] sm:$0xf]
        %v1548 = vld [vmem:[#allocation8 + $0x110] sm:$0xf]
        %v1549 = vld [vmem:[#allocation8 + $0x114] sm:$0xf]
        %v1550 = vld [vmem:[#allocation8 + $0x118] sm:$0xf]
        %v1551 = vld [vmem:[#allocation8 + $0x11c] sm:$0xf]
        %v1552 = vld [vmem:[#allocation8 + $0x120] sm:$0xf]
        %v1553 = vld [vmem:[#allocation8 + $0x124] sm:$0xf]
        %v1554 = vld [vmem:[#allocation8 + $0x128] sm:$0xf]
        %v1555 = vld [vmem:[#allocation8 + $0x12c] sm:$0xf]
        %v1556 = vld [vmem:[#allocation8 + $0x130] sm:$0xf]
        %v1557 = vld [vmem:[#allocation8 + $0x134] sm:$0xf]
        %v1558 = vld [vmem:[#allocation8 + $0x138] sm:$0xf]
        %v1559 = vld [vmem:[#allocation8 + $0x13c] sm:$0xf]
        %v1560 = vld [vmem:[#allocation8 + $0x140] sm:$0xf]
        %v1561 = vld [vmem:[#allocation8 + $0x144] sm:$0xf]
        %v1562 = vld [vmem:[#allocation8 + $0x148] sm:$0xf]
        %v1563 = vld [vmem:[#allocation8 + $0x14c] sm:$0xf]
        %v1564 = vld [vmem:[#allocation8 + $0x150] sm:$0xf]
        %v1565 = vld [vmem:[#allocation8 + $0x154] sm:$0xf]
        %v1566 = vld [vmem:[#allocation8 + $0x158] sm:$0xf]
        %v1567 = vld [vmem:[#allocation8 + $0x15c] sm:$0xf]
        %v1568 = vld [vmem:[#allocation8 + $0x160] sm:$0xf]
        %v1569 = vld [vmem:[#allocation8 + $0x164] sm:$0xf]
        %v1570 = vld [vmem:[#allocation8 + $0x168] sm:$0xf]
        %v1571 = vld [vmem:[#allocation8 + $0x16c] sm:$0xf]
        %v1572 = vld [vmem:[#allocation8 + $0x170] sm:$0xf]
        %v1573 = vld [vmem:[#allocation8 + $0x174] sm:$0xf]
        %v1574 = vld [vmem:[#allocation8 + $0x178] sm:$0xf]
        %v1575 = vld [vmem:[#allocation8 + $0x17c] sm:$0xf]
        %v1576 = vld [vmem:[#allocation8 + $0x180] sm:$0xf]
        %v1577 = vld [vmem:[#allocation8 + $0x184] sm:$0xf]
        %v1578 = vld [vmem:[#allocation8 + $0x188] sm:$0xf]
        %v1579 = vld [vmem:[#allocation8 + $0x18c] sm:$0xf]
        %v1580 = vld [vmem:[#allocation8 + $0x190] sm:$0xf]
        %v1581 = vld [vmem:[#allocation8 + $0x194] sm:$0xf]
        %v1582 = vld [vmem:[#allocation8 + $0x198] sm:$0xf]
        %v1583 = vld [vmem:[#allocation8 + $0x19c] sm:$0xf]
        %v1584 = vld [vmem:[#allocation8 + $0x1a0] sm:$0xf]
        %v1585 = vld [vmem:[#allocation8 + $0x1a4] sm:$0xf]
        %v1586 = vld [vmem:[#allocation8 + $0x1a8] sm:$0xf]
        %v1587 = vld [vmem:[#allocation8 + $0x1ac] sm:$0xf]
        %v1588 = vld [vmem:[#allocation8 + $0x1b0] sm:$0xf]
        %v1589 = vld [vmem:[#allocation8 + $0x1b4] sm:$0xf]
        %v1590 = vld [vmem:[#allocation8 + $0x1b8] sm:$0xf]
        %v1591 = vld [vmem:[#allocation8 + $0x1bc] sm:$0xf]
        %v1592 = vld [vmem:[#allocation8 + $0x1c0] sm:$0xf]
        %v1593 = vld [vmem:[#allocation8 + $0x1c4] sm:$0xf]
        %v1594 = vld [vmem:[#allocation8 + $0x1c8] sm:$0xf]
        %v1595 = vld [vmem:[#allocation8 + $0x1cc] sm:$0xf]
        %v1596 = vld [vmem:[#allocation8 + $0x1d0] sm:$0xf]
        %v1597 = vld [vmem:[#allocation8 + $0x1d4] sm:$0xf]
        %v1598 = vld [vmem:[#allocation8 + $0x1d8] sm:$0xf]
        %v1599 = vld [vmem:[#allocation8 + $0x1dc] sm:$0xf]
        %v1600 = vld [vmem:[#allocation8 + $0x1e0] sm:$0xf]
        %v1601 = vld [vmem:[#allocation8 + $0x1e4] sm:$0xf]
        %v1602 = vld [vmem:[#allocation8 + $0x1e8] sm:$0xf]
        %v1603 = vld [vmem:[#allocation8 + $0x1ec] sm:$0xf]
        %v1604 = vld [vmem:[#allocation8 + $0x1f0] sm:$0xf]
        %v1605 = vld [vmem:[#allocation8 + $0x1f4] sm:$0xf]
        %v1606 = vld [vmem:[#allocation8 + $0x1f8] sm:$0xf]
        %v1607 = vld [vmem:[#allocation8 + $0x1fc] sm:$0xf]
        %v1608 = vld [vmem:[#allocation8 + $0x200] sm:$0xf]
        %v1609 = vld [vmem:[#allocation8 + $0x204] sm:$0xf]
        %v1610 = vld [vmem:[#allocation8 + $0x208] sm:$0xf]
        %v1611 = vld [vmem:[#allocation8 + $0x20c] sm:$0xf]
        %v1612 = vld [vmem:[#allocation8 + $0x210] sm:$0xf]
        %v1613 = vld [vmem:[#allocation8 + $0x214] sm:$0xf]
        %v1614 = vld [vmem:[#allocation8 + $0x218] sm:$0xf]
        %v1615 = vld [vmem:[#allocation8 + $0x21c] sm:$0xf]
        %v1616 = vld [vmem:[#allocation8 + $0x220] sm:$0xf]
        %v1617 = vld [vmem:[#allocation8 + $0x224] sm:$0xf]
        %v1618 = vld [vmem:[#allocation8 + $0x228] sm:$0xf]
        %v1619 = vld [vmem:[#allocation8 + $0x22c] sm:$0xf]
        %v1620 = vld [vmem:[#allocation8 + $0x230] sm:$0xf]
        %v1621 = vld [vmem:[#allocation8 + $0x234] sm:$0xf]
        %v1622 = vld [vmem:[#allocation8 + $0x238] sm:$0xf]
        %v1623 = vld [vmem:[#allocation8 + $0x23c] sm:$0xf]
        %v1624 = vld [vmem:[%s4] sm:$0x1]
        %v1626 = vperm.slane %v1624, 0
        %v1772 = vunpack.c.l.b16 %v1480
        %v1773 = vunpack.c.l.b16 %v1481
        %v1774 = vunpack.c.l.b16 %v1482
        %v1775 = vunpack.c.l.b16 %v1483
        %v1776 = vunpack.c.l.b16 %v1484
        %v1777 = vunpack.c.l.b16 %v1485
        %v1778 = vunpack.c.l.b16 %v1486
        %v1779 = vunpack.c.l.b16 %v1487
        %v1780 = vunpack.c.l.b16 %v1488
        %v1781 = vunpack.c.l.b16 %v1489
        %v1782 = vunpack.c.l.b16 %v1490
        %v1783 = vunpack.c.l.b16 %v1491
        %v1784 = vunpack.c.l.b16 %v1492
        %v1785 = vunpack.c.l.b16 %v1493
        %v1786 = vunpack.c.l.b16 %v1494
        %v1787 = vunpack.c.l.b16 %v1495
        %v1788 = vunpack.c.l.b16 %v1496
        %v1789 = vunpack.c.l.b16 %v1497
        %v1790 = vunpack.c.l.b16 %v1498
        %v1791 = vunpack.c.l.b16 %v1499
        %v1792 = vunpack.c.l.b16 %v1500
        %v1793 = vunpack.c.l.b16 %v1501
        %v1794 = vunpack.c.l.b16 %v1502
        %v1795 = vunpack.c.l.b16 %v1503
        %v1796 = vunpack.c.l.b16 %v1504
        %v1797 = vunpack.c.l.b16 %v1505
        %v1798 = vunpack.c.l.b16 %v1506
        %v1799 = vunpack.c.l.b16 %v1507
        %v1800 = vunpack.c.l.b16 %v1508
        %v1801 = vunpack.c.l.b16 %v1509
        %v1802 = vunpack.c.l.b16 %v1510
        %v1803 = vunpack.c.l.b16 %v1511
        %v1804 = vunpack.c.l.b16 %v1512
        %v1805 = vunpack.c.l.b16 %v1513
        %v1806 = vunpack.c.l.b16 %v1514
        %v1807 = vunpack.c.l.b16 %v1515
        %v1808 = vunpack.c.l.b16 %v1516
        %v1809 = vunpack.c.l.b16 %v1517
        %v1810 = vunpack.c.l.b16 %v1518
        %v1811 = vunpack.c.l.b16 %v1519
        %v1812 = vunpack.c.l.b16 %v1520
        %v1813 = vunpack.c.l.b16 %v1521
        %v1814 = vunpack.c.l.b16 %v1522
        %v1815 = vunpack.c.l.b16 %v1523
        %v1816 = vunpack.c.l.b16 %v1524
        %v1817 = vunpack.c.l.b16 %v1525
        %v1818 = vunpack.c.l.b16 %v1526
        %v1819 = vunpack.c.l.b16 %v1527
        %v1820 = vunpack.c.l.b16 %v1528
        %v1821 = vunpack.c.l.b16 %v1529
        %v1822 = vunpack.c.l.b16 %v1530
        %v1823 = vunpack.c.l.b16 %v1531
        %v1824 = vunpack.c.l.b16 %v1532
        %v1825 = vunpack.c.l.b16 %v1533
        %v1826 = vunpack.c.l.b16 %v1534
        %v1827 = vunpack.c.l.b16 %v1535
        %v1828 = vunpack.c.l.b16 %v1536
        %v1829 = vunpack.c.l.b16 %v1537
        %v1830 = vunpack.c.l.b16 %v1538
        %v1831 = vunpack.c.l.b16 %v1539
        %v1832 = vunpack.c.l.b16 %v1540
        %v1833 = vunpack.c.l.b16 %v1541
        %v1834 = vunpack.c.l.b16 %v1542
        %v1835 = vunpack.c.l.b16 %v1543
        %v1836 = vunpack.c.l.b16 %v1544
        %v1837 = vunpack.c.l.b16 %v1545
        %v1838 = vunpack.c.l.b16 %v1546
        %v1839 = vunpack.c.l.b16 %v1547
        %v1840 = vunpack.c.l.b16 %v1548
        %v1841 = vunpack.c.l.b16 %v1549
        %v1842 = vunpack.c.l.b16 %v1550
        %v1843 = vunpack.c.l.b16 %v1551
        %v1844 = vunpack.c.l.b16 %v1552
        %v1845 = vunpack.c.l.b16 %v1553
        %v1846 = vunpack.c.l.b16 %v1554
        %v1847 = vunpack.c.l.b16 %v1555
        %v1848 = vunpack.c.l.b16 %v1556
        %v1849 = vunpack.c.l.b16 %v1557
        %v1850 = vunpack.c.l.b16 %v1558
        %v1851 = vunpack.c.l.b16 %v1559
        %v1852 = vunpack.c.l.b16 %v1560
        %v1853 = vunpack.c.l.b16 %v1561
        %v1854 = vunpack.c.l.b16 %v1562
        %v1855 = vunpack.c.l.b16 %v1563
        %v1856 = vunpack.c.l.b16 %v1564
        %v1857 = vunpack.c.l.b16 %v1565
        %v1858 = vunpack.c.l.b16 %v1566
        %v1859 = vunpack.c.l.b16 %v1567
        %v1860 = vunpack.c.l.b16 %v1568
        %v1861 = vunpack.c.l.b16 %v1569
        %v1862 = vunpack.c.l.b16 %v1570
        %v1863 = vunpack.c.l.b16 %v1571
        %v1864 = vunpack.c.l.b16 %v1572
        %v1865 = vunpack.c.l.b16 %v1573
        %v1866 = vunpack.c.l.b16 %v1574
        %v1867 = vunpack.c.l.b16 %v1575
        %v1868 = vunpack.c.l.b16 %v1576
        %v1869 = vunpack.c.l.b16 %v1577
        %v1870 = vunpack.c.l.b16 %v1578
        %v1871 = vunpack.c.l.b16 %v1579
        %v1872 = vunpack.c.l.b16 %v1580
        %v1873 = vunpack.c.l.b16 %v1581
        %v1874 = vunpack.c.l.b16 %v1582
        %v1875 = vunpack.c.l.b16 %v1583
        %v1876 = vunpack.c.l.b16 %v1584
        %v1877 = vunpack.c.l.b16 %v1585
        %v1878 = vunpack.c.l.b16 %v1586
        %v1879 = vunpack.c.l.b16 %v1587
        %v1880 = vunpack.c.l.b16 %v1588
        %v1881 = vunpack.c.l.b16 %v1589
        %v1882 = vunpack.c.l.b16 %v1590
        %v1883 = vunpack.c.l.b16 %v1591
        %v1884 = vunpack.c.l.b16 %v1592
        %v1885 = vunpack.c.l.b16 %v1593
        %v1886 = vunpack.c.l.b16 %v1594
        %v1887 = vunpack.c.l.b16 %v1595
        %v1888 = vunpack.c.l.b16 %v1596
        %v1889 = vunpack.c.l.b16 %v1597
        %v1890 = vunpack.c.l.b16 %v1598
        %v1891 = vunpack.c.l.b16 %v1599
        %v1892 = vunpack.c.l.b16 %v1600
        %v1893 = vunpack.c.l.b16 %v1601
        %v1894 = vunpack.c.l.b16 %v1602
        %v1895 = vunpack.c.l.b16 %v1603
        %v1896 = vunpack.c.l.b16 %v1604
        %v1897 = vunpack.c.l.b16 %v1605
        %v1898 = vunpack.c.l.b16 %v1606
        %v1899 = vunpack.c.l.b16 %v1607
        %v1900 = vunpack.c.l.b16 %v1608
        %v1901 = vunpack.c.l.b16 %v1609
        %v1902 = vunpack.c.l.b16 %v1610
        %v1903 = vunpack.c.l.b16 %v1611
        %v1904 = vunpack.c.l.b16 %v1612
        %v1905 = vunpack.c.l.b16 %v1613
        %v1906 = vunpack.c.l.b16 %v1614
        %v1907 = vunpack.c.l.b16 %v1615
        %v1908 = vunpack.c.l.b16 %v1616
        %v1909 = vunpack.c.l.b16 %v1617
        %v1910 = vunpack.c.l.b16 %v1618
        %v1911 = vunpack.c.l.b16 %v1619
        %v1912 = vunpack.c.l.b16 %v1620
        %v1913 = vunpack.c.l.b16 %v1621
        %v1914 = vunpack.c.l.b16 %v1622
        %v1915 = vunpack.c.l.b16 %v1623
        %v1916 = vpack.c.b16 %v1773, %v1772
        %v1917 = vpack.c.b16 %v1775, %v1774
        %v1918 = vpack.c.b16 %v1777, %v1776
        %v1919 = vpack.c.b16 %v1779, %v1778
        %v1920 = vpack.c.b16 %v1781, %v1780
        %v1921 = vpack.c.b16 %v1783, %v1782
        %v1922 = vpack.c.b16 %v1785, %v1784
        %v1923 = vpack.c.b16 %v1787, %v1786
        %v1924 = vpack.c.b16 %v1789, %v1788
        %v1925 = vpack.c.b16 %v1791, %v1790
        %v1926 = vpack.c.b16 %v1793, %v1792
        %v1927 = vpack.c.b16 %v1795, %v1794
        %v1928 = vpack.c.b16 %v1797, %v1796
        %v1929 = vpack.c.b16 %v1799, %v1798
        %v1930 = vpack.c.b16 %v1801, %v1800
        %v1931 = vpack.c.b16 %v1803, %v1802
        %v1932 = vpack.c.b16 %v1805, %v1804
        %v1933 = vpack.c.b16 %v1807, %v1806
        %v1934 = vpack.c.b16 %v1809, %v1808
        %v1935 = vpack.c.b16 %v1811, %v1810
        %v1936 = vpack.c.b16 %v1813, %v1812
        %v1937 = vpack.c.b16 %v1815, %v1814
        %v1938 = vpack.c.b16 %v1817, %v1816
        %v1939 = vpack.c.b16 %v1819, %v1818
        %v1940 = vpack.c.b16 %v1821, %v1820
        %v1941 = vpack.c.b16 %v1823, %v1822
        %v1942 = vpack.c.b16 %v1825, %v1824
        %v1943 = vpack.c.b16 %v1827, %v1826
        %v1944 = vpack.c.b16 %v1829, %v1828
        %v1945 = vpack.c.b16 %v1831, %v1830
        %v1946 = vpack.c.b16 %v1833, %v1832
        %v1947 = vpack.c.b16 %v1835, %v1834
        %v1948 = vpack.c.b16 %v1837, %v1836
        %v1949 = vpack.c.b16 %v1839, %v1838
        %v1950 = vpack.c.b16 %v1841, %v1840
        %v1951 = vpack.c.b16 %v1843, %v1842
        %v1952 = vpack.c.b16 %v1845, %v1844
        %v1953 = vpack.c.b16 %v1847, %v1846
        %v1954 = vpack.c.b16 %v1849, %v1848
        %v1955 = vpack.c.b16 %v1851, %v1850
        %v1956 = vpack.c.b16 %v1853, %v1852
        %v1957 = vpack.c.b16 %v1855, %v1854
        %v1958 = vpack.c.b16 %v1857, %v1856
        %v1959 = vpack.c.b16 %v1859, %v1858
        %v1960 = vpack.c.b16 %v1861, %v1860
        %v1961 = vpack.c.b16 %v1863, %v1862
        %v1962 = vpack.c.b16 %v1865, %v1864
        %v1963 = vpack.c.b16 %v1867, %v1866
        %v1964 = vpack.c.b16 %v1869, %v1868
        %v1965 = vpack.c.b16 %v1871, %v1870
        %v1966 = vpack.c.b16 %v1873, %v1872
        %v1967 = vpack.c.b16 %v1875, %v1874
        %v1968 = vpack.c.b16 %v1877, %v1876
        %v1969 = vpack.c.b16 %v1879, %v1878
        %v1970 = vpack.c.b16 %v1881, %v1880
        %v1971 = vpack.c.b16 %v1883, %v1882
        %v1972 = vpack.c.b16 %v1885, %v1884
        %v1973 = vpack.c.b16 %v1887, %v1886
        %v1974 = vpack.c.b16 %v1889, %v1888
        %v1975 = vpack.c.b16 %v1891, %v1890
        %v1976 = vpack.c.b16 %v1893, %v1892
        %v1977 = vpack.c.b16 %v1895, %v1894
        %v1978 = vpack.c.b16 %v1897, %v1896
        %v1979 = vpack.c.b16 %v1899, %v1898
        %v1980 = vpack.c.b16 %v1901, %v1900
        %v1981 = vpack.c.b16 %v1903, %v1902
        %v1982 = vpack.c.b16 %v1905, %v1904
        %v1983 = vpack.c.b16 %v1907, %v1906
        %v1984 = vpack.c.b16 %v1909, %v1908
        %v1985 = vpack.c.b16 %v1911, %v1910
        %v1986 = vpack.c.b16 %v1913, %v1912
        %v1987 = vpack.c.b16 %v1915, %v1914
        %2060 = vmatpush.bf16.msra.mxu0 %v1923
        %2061 = vmatpush.bf16.msra.mxu0 %v1922
        %2062 = vmatpush.bf16.msra.mxu0 %v1921
        %2063 = vmatpush.bf16.msra.mxu0 %v1920
        %2064 = vmatpush.bf16.msra.mxu0 %v1919
        %2065 = vmatpush.bf16.msra.mxu0 %v1918
        %2066 = vmatpush.bf16.msra.mxu0 %v1917
        %2067 = vmatpush.bf16.msra.mxu0 %v1916
        %2068 = vmatmul.bf16.gmra.mxu0 %v1100
        %v2069 = vpop.f32.mrf.mxu0
        %v2070 = vadd.f32 %v1626, %v2069
        %v2071 = vpop.f32.mrf.mxu0
        %v2072 = vadd.f32 %v1626, %v2071
        %2073 = vmatmul.bf16.gmra.mxu0 %v1101
        %v2074 = vpop.f32.mrf.mxu0
        %v2075 = vadd.f32 %v1626, %v2074
        %v2076 = vpop.f32.mrf.mxu0
        %v2077 = vadd.f32 %v1626, %v2076
        %2078 = vmatmul.bf16.gmra.mxu0 %v1102
        %v2079 = vpop.f32.mrf.mxu0
        %v2080 = vadd.f32 %v1626, %v2079
        %v2081 = vpop.f32.mrf.mxu0
        %v2082 = vadd.f32 %v1626, %v2081
        %2083 = vmatmul.bf16.gmra.mxu0 %v1103
        %v2084 = vpop.f32.mrf.mxu0
        %v2085 = vadd.f32 %v1626, %v2084
        %v2086 = vpop.f32.mrf.mxu0
        %v2087 = vadd.f32 %v1626, %v2086
        %2088 = vmatmul.bf16.gmra.mxu0 %v1104
        %v2089 = vpop.f32.mrf.mxu0
        %v2090 = vadd.f32 %v1626, %v2089
        %v2091 = vpop.f32.mrf.mxu0
        %v2092 = vadd.f32 %v1626, %v2091
        %2093 = vmatmul.bf16.gmra.mxu0 %v1105
        %v2094 = vpop.f32.mrf.mxu0
        %v2095 = vadd.f32 %v1626, %v2094
        %v2096 = vpop.f32.mrf.mxu0
        %v2097 = vadd.f32 %v1626, %v2096
        %2098 = vmatmul.bf16.gmra.mxu0 %v1106
        %v2099 = vpop.f32.mrf.mxu0
        %v2100 = vadd.f32 %v1626, %v2099
        %v2101 = vpop.f32.mrf.mxu0
        %v2102 = vadd.f32 %v1626, %v2101
        %2103 = vmatmul.bf16.gmra.mxu0 %v1107
        %v2104 = vpop.f32.mrf.mxu0
        %v2105 = vadd.f32 %v1626, %v2104
        %v2106 = vpop.f32.mrf.mxu0
        %v2107 = vadd.f32 %v1626, %v2106
        %2108 = vmatmul.bf16.gmra.mxu0 %v1108
        %v2109 = vpop.f32.mrf.mxu0
        %v2110 = vadd.f32 %v1626, %v2109
        %v2111 = vpop.f32.mrf.mxu0
        %v2112 = vadd.f32 %v1626, %v2111
        %2113 = vmatmul.bf16.gmra.mxu0 %v1109
        %v2114 = vpop.f32.mrf.mxu0
        %v2115 = vadd.f32 %v1626, %v2114
        %v2116 = vpop.f32.mrf.mxu0
        %v2117 = vadd.f32 %v1626, %v2116
        %2118 = vmatmul.bf16.gmra.mxu0 %v1110
        %v2119 = vpop.f32.mrf.mxu0
        %v2120 = vadd.f32 %v1626, %v2119
        %v2121 = vpop.f32.mrf.mxu0
        %v2122 = vadd.f32 %v1626, %v2121
        %2123 = vmatmul.bf16.gmra.mxu0 %v1111
        %v2124 = vpop.f32.mrf.mxu0
        %v2125 = vadd.f32 %v1626, %v2124
        %v2126 = vpop.f32.mrf.mxu0
        %v2127 = vadd.f32 %v1626, %v2126
        %2128 = vmatmul.bf16.gmra.mxu0 %v1112
        %v2129 = vpop.f32.mrf.mxu0
        %v2130 = vadd.f32 %v1626, %v2129
        %v2131 = vpop.f32.mrf.mxu0
        %v2132 = vadd.f32 %v1626, %v2131
        %2133 = vmatmul.bf16.gmra.mxu0 %v1113
        %v2134 = vpop.f32.mrf.mxu0
        %v2135 = vadd.f32 %v1626, %v2134
        %v2136 = vpop.f32.mrf.mxu0
        %v2137 = vadd.f32 %v1626, %v2136
        %2138 = vmatmul.bf16.gmra.mxu0 %v1114
        %v2139 = vpop.f32.mrf.mxu0
        %v2140 = vadd.f32 %v1626, %v2139
        %v2141 = vpop.f32.mrf.mxu0
        %v2142 = vadd.f32 %v1626, %v2141
        %2143 = vmatmul.bf16.gmra.mxu0 %v1115
        %v2144 = vpop.f32.mrf.mxu0
        %v2145 = vadd.f32 %v1626, %v2144
        %v2146 = vpop.f32.mrf.mxu0
        %v2147 = vadd.f32 %v1626, %v2146
        %2148 = vdwg.mxu0
        %2149 = vmatpush.bf16.msra.mxu0 %v1931
        %2150 = vmatpush.bf16.msra.mxu0 %v1930
        %2151 = vmatpush.bf16.msra.mxu0 %v1929
        %2152 = vmatpush.bf16.msra.mxu0 %v1928
        %2153 = vmatpush.bf16.msra.mxu0 %v1927
        %2154 = vmatpush.bf16.msra.mxu0 %v1926
        %2155 = vmatpush.bf16.msra.mxu0 %v1925
        %2156 = vmatpush.bf16.msra.mxu0 %v1924
        %2157 = vmatmul.bf16.gmra.mxu0 %v1148
        %v2158 = vpop.f32.mrf.mxu0
        %v2159 = vadd.f32 %v2070, %v2158
        %v2160 = vpop.f32.mrf.mxu0
        %v2161 = vadd.f32 %v2072, %v2160
        %2162 = vmatmul.bf16.gmra.mxu0 %v1160
        %v2163 = vpop.f32.mrf.mxu0
        %v2164 = vadd.f32 %v2075, %v2163
        %v2165 = vpop.f32.mrf.mxu0
        %v2166 = vadd.f32 %v2077, %v2165
        %2167 = vmatmul.bf16.gmra.mxu0 %v1172
        %v2168 = vpop.f32.mrf.mxu0
        %v2169 = vadd.f32 %v2080, %v2168
        %v2170 = vpop.f32.mrf.mxu0
        %v2171 = vadd.f32 %v2082, %v2170
        %2172 = vmatmul.bf16.gmra.mxu0 %v1184
        %v2173 = vpop.f32.mrf.mxu0
        %v2174 = vadd.f32 %v2085, %v2173
        %v2175 = vpop.f32.mrf.mxu0
        %v2176 = vadd.f32 %v2087, %v2175
        %2177 = vmatmul.bf16.gmra.mxu0 %v1196
        %v2178 = vpop.f32.mrf.mxu0
        %v2179 = vadd.f32 %v2090, %v2178
        %v2180 = vpop.f32.mrf.mxu0
        %v2181 = vadd.f32 %v2092, %v2180
        %2182 = vmatmul.bf16.gmra.mxu0 %v1208
        %v2183 = vpop.f32.mrf.mxu0
        %v2184 = vadd.f32 %v2095, %v2183
        %v2185 = vpop.f32.mrf.mxu0
        %v2186 = vadd.f32 %v2097, %v2185
        %2187 = vmatmul.bf16.gmra.mxu0 %v1220
        %v2188 = vpop.f32.mrf.mxu0
        %v2189 = vadd.f32 %v2100, %v2188
        %v2190 = vpop.f32.mrf.mxu0
        %v2191 = vadd.f32 %v2102, %v2190
        %2192 = vmatmul.bf16.gmra.mxu0 %v1232
        %v2193 = vpop.f32.mrf.mxu0
        %v2194 = vadd.f32 %v2105, %v2193
        %v2195 = vpop.f32.mrf.mxu0
        %v2196 = vadd.f32 %v2107, %v2195
        %2197 = vmatmul.bf16.gmra.mxu0 %v1244
        %v2198 = vpop.f32.mrf.mxu0
        %v2199 = vadd.f32 %v2110, %v2198
        %v2200 = vpop.f32.mrf.mxu0
        %v2201 = vadd.f32 %v2112, %v2200
        %2202 = vmatmul.bf16.gmra.mxu0 %v1256
        %v2203 = vpop.f32.mrf.mxu0
        %v2204 = vadd.f32 %v2115, %v2203
        %v2205 = vpop.f32.mrf.mxu0
        %v2206 = vadd.f32 %v2117, %v2205
        %2207 = vmatmul.bf16.gmra.mxu0 %v1268
        %v2208 = vpop.f32.mrf.mxu0
        %v2209 = vadd.f32 %v2120, %v2208
        %v2210 = vpop.f32.mrf.mxu0
        %v2211 = vadd.f32 %v2122, %v2210
        %2212 = vmatmul.bf16.gmra.mxu0 %v1280
        %v2213 = vpop.f32.mrf.mxu0
        %v2214 = vadd.f32 %v2125, %v2213
        %v2215 = vpop.f32.mrf.mxu0
        %v2216 = vadd.f32 %v2127, %v2215
        %2217 = vmatmul.bf16.gmra.mxu0 %v1292
        %v2218 = vpop.f32.mrf.mxu0
        %v2219 = vadd.f32 %v2130, %v2218
        %v2220 = vpop.f32.mrf.mxu0
        %v2221 = vadd.f32 %v2132, %v2220
        %2222 = vmatmul.bf16.gmra.mxu0 %v1304
        %v2223 = vpop.f32.mrf.mxu0
        %v2224 = vadd.f32 %v2135, %v2223
        %v2225 = vpop.f32.mrf.mxu0
        %v2226 = vadd.f32 %v2137, %v2225
        %2227 = vmatmul.bf16.gmra.mxu0 %v1316
        %v2228 = vpop.f32.mrf.mxu0
        %v2229 = vadd.f32 %v2140, %v2228
        %v2230 = vpop.f32.mrf.mxu0
        %v2231 = vadd.f32 %v2142, %v2230
        %2232 = vmatmul.bf16.gmra.mxu0 %v1328
        %v2233 = vpop.f32.mrf.mxu0
        %v2234 = vadd.f32 %v2145, %v2233
        %v2235 = vpop.f32.mrf.mxu0
        %v2236 = vadd.f32 %v2147, %v2235
        %2237 = vdwg.mxu0
        %2238 = vmatpush.bf16.msra.mxu0 %v1939
        %2239 = vmatpush.bf16.msra.mxu0 %v1938
        %2240 = vmatpush.bf16.msra.mxu0 %v1937
        %2241 = vmatpush.bf16.msra.mxu0 %v1936
        %2242 = vmatpush.bf16.msra.mxu0 %v1935
        %2243 = vmatpush.bf16.msra.mxu0 %v1934
        %2244 = vmatpush.bf16.msra.mxu0 %v1933
        %2245 = vmatpush.bf16.msra.mxu0 %v1932
        %2246 = vmatmul.bf16.gmra.mxu0 %v1380
        %v2247 = vpop.f32.mrf.mxu0
        %v2248 = vadd.f32 %v2159, %v2247
        %v2249 = vpop.f32.mrf.mxu0
        %v2250 = vadd.f32 %v2161, %v2249
        %2251 = vmatmul.bf16.gmra.mxu0 %v1383
        %v2252 = vpop.f32.mrf.mxu0
        %v2253 = vadd.f32 %v2164, %v2252
        %v2254 = vpop.f32.mrf.mxu0
        %v2255 = vadd.f32 %v2166, %v2254
        %2256 = vmatmul.bf16.gmra.mxu0 %v1386
        %v2257 = vpop.f32.mrf.mxu0
        %v2258 = vadd.f32 %v2169, %v2257
        %v2259 = vpop.f32.mrf.mxu0
        %v2260 = vadd.f32 %v2171, %v2259
        %2261 = vmatmul.bf16.gmra.mxu0 %v1389
        %v2262 = vpop.f32.mrf.mxu0
        %v2263 = vadd.f32 %v2174, %v2262
        %v2264 = vpop.f32.mrf.mxu0
        %v2265 = vadd.f32 %v2176, %v2264
        %2266 = vmatmul.bf16.gmra.mxu0 %v1392
        %v2267 = vpop.f32.mrf.mxu0
        %v2268 = vadd.f32 %v2179, %v2267
        %v2269 = vpop.f32.mrf.mxu0
        %v2270 = vadd.f32 %v2181, %v2269
        %2271 = vmatmul.bf16.gmra.mxu0 %v1395
        %v2272 = vpop.f32.mrf.mxu0
        %v2273 = vadd.f32 %v2184, %v2272
        %v2274 = vpop.f32.mrf.mxu0
        %v2275 = vadd.f32 %v2186, %v2274
        %2276 = vmatmul.bf16.gmra.mxu0 %v1398
        %v2277 = vpop.f32.mrf.mxu0
        %v2278 = vadd.f32 %v2189, %v2277
        %v2279 = vpop.f32.mrf.mxu0
        %v2280 = vadd.f32 %v2191, %v2279
        %2281 = vmatmul.bf16.gmra.mxu0 %v1401
        %v2282 = vpop.f32.mrf.mxu0
        %v2283 = vadd.f32 %v2194, %v2282
        %v2284 = vpop.f32.mrf.mxu0
        %v2285 = vadd.f32 %v2196, %v2284
        %2286 = vmatmul.bf16.gmra.mxu0 %v1404
        %v2287 = vpop.f32.mrf.mxu0
        %v2288 = vadd.f32 %v2199, %v2287
        %v2289 = vpop.f32.mrf.mxu0
        %v2290 = vadd.f32 %v2201, %v2289
        %2291 = vmatmul.bf16.gmra.mxu0 %v1407
        %v2292 = vpop.f32.mrf.mxu0
        %v2293 = vadd.f32 %v2204, %v2292
        %v2294 = vpop.f32.mrf.mxu0
        %v2295 = vadd.f32 %v2206, %v2294
        %2296 = vmatmul.bf16.gmra.mxu0 %v1410
        %v2297 = vpop.f32.mrf.mxu0
        %v2298 = vadd.f32 %v2209, %v2297
        %v2299 = vpop.f32.mrf.mxu0
        %v2300 = vadd.f32 %v2211, %v2299
        %2301 = vmatmul.bf16.gmra.mxu0 %v1413
        %v2302 = vpop.f32.mrf.mxu0
        %v2303 = vadd.f32 %v2214, %v2302
        %v2304 = vpop.f32.mrf.mxu0
        %v2305 = vadd.f32 %v2216, %v2304
        %2306 = vmatmul.bf16.gmra.mxu0 %v1416
        %v2307 = vpop.f32.mrf.mxu0
        %v2308 = vadd.f32 %v2219, %v2307
        %v2309 = vpop.f32.mrf.mxu0
        %v2310 = vadd.f32 %v2221, %v2309
        %2311 = vmatmul.bf16.gmra.mxu0 %v1419
        %v2312 = vpop.f32.mrf.mxu0
        %v2313 = vadd.f32 %v2224, %v2312
        %v2314 = vpop.f32.mrf.mxu0
        %v2315 = vadd.f32 %v2226, %v2314
        %2316 = vmatmul.bf16.gmra.mxu0 %v1422
        %v2317 = vpop.f32.mrf.mxu0
        %v2318 = vadd.f32 %v2229, %v2317
        %v2319 = vpop.f32.mrf.mxu0
        %v2320 = vadd.f32 %v2231, %v2319
        %2321 = vmatmul.bf16.gmra.mxu0 %v1425
        %v2322 = vpop.f32.mrf.mxu0
        %v2323 = vadd.f32 %v2234, %v2322
        %v2324 = vpop.f32.mrf.mxu0
        %v2325 = vadd.f32 %v2236, %v2324
        %2326 = vdwg.mxu0
        %2327 = vmatpush.bf16.msra.mxu0 %v1947
        %2328 = vmatpush.bf16.msra.mxu0 %v1946
        %2329 = vmatpush.bf16.msra.mxu0 %v1945
        %2330 = vmatpush.bf16.msra.mxu0 %v1944
        %2331 = vmatpush.bf16.msra.mxu0 %v1943
        %2332 = vmatpush.bf16.msra.mxu0 %v1942
        %2333 = vmatpush.bf16.msra.mxu0 %v1941
        %2334 = vmatpush.bf16.msra.mxu0 %v1940
        %2335 = vmatmul.bf16.gmra.mxu0 %v1101
        %v2336 = vpop.f32.mrf.mxu0
        %v2337 = vadd.f32 %v2248, %v2336
        %v2338 = vpop.f32.mrf.mxu0
        %v2339 = vadd.f32 %v2250, %v2338
        %2340 = vmatmul.bf16.gmra.mxu0 %v1102
        %v2341 = vpop.f32.mrf.mxu0
        %v2342 = vadd.f32 %v2253, %v2341
        %v2343 = vpop.f32.mrf.mxu0
        %v2344 = vadd.f32 %v2255, %v2343
        %2345 = vmatmul.bf16.gmra.mxu0 %v1103
        %v2346 = vpop.f32.mrf.mxu0
        %v2347 = vadd.f32 %v2258, %v2346
        %v2348 = vpop.f32.mrf.mxu0
        %v2349 = vadd.f32 %v2260, %v2348
        %2350 = vmatmul.bf16.gmra.mxu0 %v1104
        %v2351 = vpop.f32.mrf.mxu0
        %v2352 = vadd.f32 %v2263, %v2351
        %v2353 = vpop.f32.mrf.mxu0
        %v2354 = vadd.f32 %v2265, %v2353
        %2355 = vmatmul.bf16.gmra.mxu0 %v1105
        %v2356 = vpop.f32.mrf.mxu0
        %v2357 = vadd.f32 %v2268, %v2356
        %v2358 = vpop.f32.mrf.mxu0
        %v2359 = vadd.f32 %v2270, %v2358
        %2360 = vmatmul.bf16.gmra.mxu0 %v1106
        %v2361 = vpop.f32.mrf.mxu0
        %v2362 = vadd.f32 %v2273, %v2361
        %v2363 = vpop.f32.mrf.mxu0
        %v2364 = vadd.f32 %v2275, %v2363
        %2365 = vmatmul.bf16.gmra.mxu0 %v1107
        %v2366 = vpop.f32.mrf.mxu0
        %v2367 = vadd.f32 %v2278, %v2366
        %v2368 = vpop.f32.mrf.mxu0
        %v2369 = vadd.f32 %v2280, %v2368
        %2370 = vmatmul.bf16.gmra.mxu0 %v1108
        %v2371 = vpop.f32.mrf.mxu0
        %v2372 = vadd.f32 %v2283, %v2371
        %v2373 = vpop.f32.mrf.mxu0
        %v2374 = vadd.f32 %v2285, %v2373
        %2375 = vmatmul.bf16.gmra.mxu0 %v1109
        %v2376 = vpop.f32.mrf.mxu0
        %v2377 = vadd.f32 %v2288, %v2376
        %v2378 = vpop.f32.mrf.mxu0
        %v2379 = vadd.f32 %v2290, %v2378
        %2380 = vmatmul.bf16.gmra.mxu0 %v1110
        %v2381 = vpop.f32.mrf.mxu0
        %v2382 = vadd.f32 %v2293, %v2381
        %v2383 = vpop.f32.mrf.mxu0
        %v2384 = vadd.f32 %v2295, %v2383
        %2385 = vmatmul.bf16.gmra.mxu0 %v1111
        %v2386 = vpop.f32.mrf.mxu0
        %v2387 = vadd.f32 %v2298, %v2386
        %v2388 = vpop.f32.mrf.mxu0
        %v2389 = vadd.f32 %v2300, %v2388
        %2390 = vmatmul.bf16.gmra.mxu0 %v1112
        %v2391 = vpop.f32.mrf.mxu0
        %v2392 = vadd.f32 %v2303, %v2391
        %v2393 = vpop.f32.mrf.mxu0
        %v2394 = vadd.f32 %v2305, %v2393
        %2395 = vmatmul.bf16.gmra.mxu0 %v1113
        %v2396 = vpop.f32.mrf.mxu0
        %v2397 = vadd.f32 %v2308, %v2396
        %v2398 = vpop.f32.mrf.mxu0
        %v2399 = vadd.f32 %v2310, %v2398
        %2400 = vmatmul.bf16.gmra.mxu0 %v1114
        %v2401 = vpop.f32.mrf.mxu0
        %v2402 = vadd.f32 %v2313, %v2401
        %v2403 = vpop.f32.mrf.mxu0
        %v2404 = vadd.f32 %v2315, %v2403
        %2405 = vmatmul.bf16.gmra.mxu0 %v1115
        %v2406 = vpop.f32.mrf.mxu0
        %v2407 = vadd.f32 %v2318, %v2406
        %v2408 = vpop.f32.mrf.mxu0
        %v2409 = vadd.f32 %v2320, %v2408
        %2410 = vmatmul.bf16.gmra.mxu0 %v1116
        %v2411 = vpop.f32.mrf.mxu0
        %v2412 = vadd.f32 %v2323, %v2411
        %v2413 = vpop.f32.mrf.mxu0
        %v2414 = vadd.f32 %v2325, %v2413
        %2415 = vdwg.mxu0
        %2416 = vmatpush.bf16.msra.mxu0 %v1955
        %2417 = vmatpush.bf16.msra.mxu0 %v1954
        %2418 = vmatpush.bf16.msra.mxu0 %v1953
        %2419 = vmatpush.bf16.msra.mxu0 %v1952
        %2420 = vmatpush.bf16.msra.mxu0 %v1951
        %2421 = vmatpush.bf16.msra.mxu0 %v1950
        %2422 = vmatpush.bf16.msra.mxu0 %v1949
        %2423 = vmatpush.bf16.msra.mxu0 %v1948
        %2424 = vmatmul.bf16.gmra.mxu0 %v1160
        %v2425 = vpop.f32.mrf.mxu0
        %v2426 = vadd.f32 %v2337, %v2425
        %v2427 = vpop.f32.mrf.mxu0
        %v2428 = vadd.f32 %v2339, %v2427
        %2429 = vmatmul.bf16.gmra.mxu0 %v1172
        %v2430 = vpop.f32.mrf.mxu0
        %v2431 = vadd.f32 %v2342, %v2430
        %v2432 = vpop.f32.mrf.mxu0
        %v2433 = vadd.f32 %v2344, %v2432
        %2434 = vmatmul.bf16.gmra.mxu0 %v1184
        %v2435 = vpop.f32.mrf.mxu0
        %v2436 = vadd.f32 %v2347, %v2435
        %v2437 = vpop.f32.mrf.mxu0
        %v2438 = vadd.f32 %v2349, %v2437
        %2439 = vmatmul.bf16.gmra.mxu0 %v1196
        %v2440 = vpop.f32.mrf.mxu0
        %v2441 = vadd.f32 %v2352, %v2440
        %v2442 = vpop.f32.mrf.mxu0
        %v2443 = vadd.f32 %v2354, %v2442
        %2444 = vmatmul.bf16.gmra.mxu0 %v1208
        %v2445 = vpop.f32.mrf.mxu0
        %v2446 = vadd.f32 %v2357, %v2445
        %v2447 = vpop.f32.mrf.mxu0
        %v2448 = vadd.f32 %v2359, %v2447
        %2449 = vmatmul.bf16.gmra.mxu0 %v1220
        %v2450 = vpop.f32.mrf.mxu0
        %v2451 = vadd.f32 %v2362, %v2450
        %v2452 = vpop.f32.mrf.mxu0
        %v2453 = vadd.f32 %v2364, %v2452
        %2454 = vmatmul.bf16.gmra.mxu0 %v1232
        %v2455 = vpop.f32.mrf.mxu0
        %v2456 = vadd.f32 %v2367, %v2455
        %v2457 = vpop.f32.mrf.mxu0
        %v2458 = vadd.f32 %v2369, %v2457
        %2459 = vmatmul.bf16.gmra.mxu0 %v1244
        %v2460 = vpop.f32.mrf.mxu0
        %v2461 = vadd.f32 %v2372, %v2460
        %v2462 = vpop.f32.mrf.mxu0
        %v2463 = vadd.f32 %v2374, %v2462
        %2464 = vmatmul.bf16.gmra.mxu0 %v1256
        %v2465 = vpop.f32.mrf.mxu0
        %v2466 = vadd.f32 %v2377, %v2465
        %v2467 = vpop.f32.mrf.mxu0
        %v2468 = vadd.f32 %v2379, %v2467
        %2469 = vmatmul.bf16.gmra.mxu0 %v1268
        %v2470 = vpop.f32.mrf.mxu0
        %v2471 = vadd.f32 %v2382, %v2470
        %v2472 = vpop.f32.mrf.mxu0
        %v2473 = vadd.f32 %v2384, %v2472
        %2474 = vmatmul.bf16.gmra.mxu0 %v1280
        %v2475 = vpop.f32.mrf.mxu0
        %v2476 = vadd.f32 %v2387, %v2475
        %v2477 = vpop.f32.mrf.mxu0
        %v2478 = vadd.f32 %v2389, %v2477
        %2479 = vmatmul.bf16.gmra.mxu0 %v1292
        %v2480 = vpop.f32.mrf.mxu0
        %v2481 = vadd.f32 %v2392, %v2480
        %v2482 = vpop.f32.mrf.mxu0
        %v2483 = vadd.f32 %v2394, %v2482
        %2484 = vmatmul.bf16.gmra.mxu0 %v1304
        %v2485 = vpop.f32.mrf.mxu0
        %v2486 = vadd.f32 %v2397, %v2485
        %v2487 = vpop.f32.mrf.mxu0
        %v2488 = vadd.f32 %v2399, %v2487
        %2489 = vmatmul.bf16.gmra.mxu0 %v1316
        %v2490 = vpop.f32.mrf.mxu0
        %v2491 = vadd.f32 %v2402, %v2490
        %v2492 = vpop.f32.mrf.mxu0
        %v2493 = vadd.f32 %v2404, %v2492
        %2494 = vmatmul.bf16.gmra.mxu0 %v1328
        %v2495 = vpop.f32.mrf.mxu0
        %v2496 = vadd.f32 %v2407, %v2495
        %v2497 = vpop.f32.mrf.mxu0
        %v2498 = vadd.f32 %v2409, %v2497
        %2499 = vmatmul.bf16.gmra.mxu0 %v1453
        %v2500 = vpop.f32.mrf.mxu0
        %v2501 = vadd.f32 %v2412, %v2500
        %v2502 = vpop.f32.mrf.mxu0
        %v2503 = vadd.f32 %v2414, %v2502
        %2504 = vdwg.mxu0
        %2505 = vmatpush.bf16.msra.mxu0 %v1963
        %2506 = vmatpush.bf16.msra.mxu0 %v1962
        %2507 = vmatpush.bf16.msra.mxu0 %v1961
        %2508 = vmatpush.bf16.msra.mxu0 %v1960
        %2509 = vmatpush.bf16.msra.mxu0 %v1959
        %2510 = vmatpush.bf16.msra.mxu0 %v1958
        %2511 = vmatpush.bf16.msra.mxu0 %v1957
        %2512 = vmatpush.bf16.msra.mxu0 %v1956
        %2513 = vmatmul.bf16.gmra.mxu0 %v1383
        %v2514 = vpop.f32.mrf.mxu0
        %v2515 = vadd.f32 %v2426, %v2514
        %v2516 = vpop.f32.mrf.mxu0
        %v2517 = vadd.f32 %v2428, %v2516
        %2518 = vmatmul.bf16.gmra.mxu0 %v1386
        %v2519 = vpop.f32.mrf.mxu0
        %v2520 = vadd.f32 %v2431, %v2519
        %v2521 = vpop.f32.mrf.mxu0
        %v2522 = vadd.f32 %v2433, %v2521
        %2523 = vmatmul.bf16.gmra.mxu0 %v1389
        %v2524 = vpop.f32.mrf.mxu0
        %v2525 = vadd.f32 %v2436, %v2524
        %v2526 = vpop.f32.mrf.mxu0
        %v2527 = vadd.f32 %v2438, %v2526
        %2528 = vmatmul.bf16.gmra.mxu0 %v1392
        %v2529 = vpop.f32.mrf.mxu0
        %v2530 = vadd.f32 %v2441, %v2529
        %v2531 = vpop.f32.mrf.mxu0
        %v2532 = vadd.f32 %v2443, %v2531
        %2533 = vmatmul.bf16.gmra.mxu0 %v1395
        %v2534 = vpop.f32.mrf.mxu0
        %v2535 = vadd.f32 %v2446, %v2534
        %v2536 = vpop.f32.mrf.mxu0
        %v2537 = vadd.f32 %v2448, %v2536
        %2538 = vmatmul.bf16.gmra.mxu0 %v1398
        %v2539 = vpop.f32.mrf.mxu0
        %v2540 = vadd.f32 %v2451, %v2539
        %v2541 = vpop.f32.mrf.mxu0
        %v2542 = vadd.f32 %v2453, %v2541
        %2543 = vmatmul.bf16.gmra.mxu0 %v1401
        %v2544 = vpop.f32.mrf.mxu0
        %v2545 = vadd.f32 %v2456, %v2544
        %v2546 = vpop.f32.mrf.mxu0
        %v2547 = vadd.f32 %v2458, %v2546
        %2548 = vmatmul.bf16.gmra.mxu0 %v1404
        %v2549 = vpop.f32.mrf.mxu0
        %v2550 = vadd.f32 %v2461, %v2549
        %v2551 = vpop.f32.mrf.mxu0
        %v2552 = vadd.f32 %v2463, %v2551
        %2553 = vmatmul.bf16.gmra.mxu0 %v1407
        %v2554 = vpop.f32.mrf.mxu0
        %v2555 = vadd.f32 %v2466, %v2554
        %v2556 = vpop.f32.mrf.mxu0
        %v2557 = vadd.f32 %v2468, %v2556
        %2558 = vmatmul.bf16.gmra.mxu0 %v1410
        %v2559 = vpop.f32.mrf.mxu0
        %v2560 = vadd.f32 %v2471, %v2559
        %v2561 = vpop.f32.mrf.mxu0
        %v2562 = vadd.f32 %v2473, %v2561
        %2563 = vmatmul.bf16.gmra.mxu0 %v1413
        %v2564 = vpop.f32.mrf.mxu0
        %v2565 = vadd.f32 %v2476, %v2564
        %v2566 = vpop.f32.mrf.mxu0
        %v2567 = vadd.f32 %v2478, %v2566
        %2568 = vmatmul.bf16.gmra.mxu0 %v1416
        %v2569 = vpop.f32.mrf.mxu0
        %v2570 = vadd.f32 %v2481, %v2569
        %v2571 = vpop.f32.mrf.mxu0
        %v2572 = vadd.f32 %v2483, %v2571
        %2573 = vmatmul.bf16.gmra.mxu0 %v1419
        %v2574 = vpop.f32.mrf.mxu0
        %v2575 = vadd.f32 %v2486, %v2574
        %v2576 = vpop.f32.mrf.mxu0
        %v2577 = vadd.f32 %v2488, %v2576
        %2578 = vmatmul.bf16.gmra.mxu0 %v1422
        %v2579 = vpop.f32.mrf.mxu0
        %v2580 = vadd.f32 %v2491, %v2579
        %v2581 = vpop.f32.mrf.mxu0
        %v2582 = vadd.f32 %v2493, %v2581
        %2583 = vmatmul.bf16.gmra.mxu0 %v1425
        %v2584 = vpop.f32.mrf.mxu0
        %v2585 = vadd.f32 %v2496, %v2584
        %v2586 = vpop.f32.mrf.mxu0
        %v2587 = vadd.f32 %v2498, %v2586
        %2588 = vmatmul.bf16.gmra.mxu0 %v1459
        %v2589 = vpop.f32.mrf.mxu0
        %v2590 = vadd.f32 %v2501, %v2589
        %v2591 = vpop.f32.mrf.mxu0
        %v2592 = vadd.f32 %v2503, %v2591
        %2593 = vdwg.mxu0
        %2594 = vmatpush.bf16.msra.mxu0 %v1971
        %2595 = vmatpush.bf16.msra.mxu0 %v1970
        %2596 = vmatpush.bf16.msra.mxu0 %v1969
        %2597 = vmatpush.bf16.msra.mxu0 %v1968
        %2598 = vmatpush.bf16.msra.mxu0 %v1967
        %2599 = vmatpush.bf16.msra.mxu0 %v1966
        %2600 = vmatpush.bf16.msra.mxu0 %v1965
        %2601 = vmatpush.bf16.msra.mxu0 %v1964
        %2602 = vmatmul.bf16.gmra.mxu0 %v1102
        %v2603 = vpop.f32.mrf.mxu0
        %v2604 = vadd.f32 %v2515, %v2603
        %v2605 = vpop.f32.mrf.mxu0
        %v2606 = vadd.f32 %v2517, %v2605
        %2607 = vmatmul.bf16.gmra.mxu0 %v1103
        %v2608 = vpop.f32.mrf.mxu0
        %v2609 = vadd.f32 %v2520, %v2608
        %v2610 = vpop.f32.mrf.mxu0
        %v2611 = vadd.f32 %v2522, %v2610
        %2612 = vmatmul.bf16.gmra.mxu0 %v1104
        %v2613 = vpop.f32.mrf.mxu0
        %v2614 = vadd.f32 %v2525, %v2613
        %v2615 = vpop.f32.mrf.mxu0
        %v2616 = vadd.f32 %v2527, %v2615
        %2617 = vmatmul.bf16.gmra.mxu0 %v1105
        %v2618 = vpop.f32.mrf.mxu0
        %v2619 = vadd.f32 %v2530, %v2618
        %v2620 = vpop.f32.mrf.mxu0
        %v2621 = vadd.f32 %v2532, %v2620
        %2622 = vmatmul.bf16.gmra.mxu0 %v1106
        %v2623 = vpop.f32.mrf.mxu0
        %v2624 = vadd.f32 %v2535, %v2623
        %v2625 = vpop.f32.mrf.mxu0
        %v2626 = vadd.f32 %v2537, %v2625
        %2627 = vmatmul.bf16.gmra.mxu0 %v1107
        %v2628 = vpop.f32.mrf.mxu0
        %v2629 = vadd.f32 %v2540, %v2628
        %v2630 = vpop.f32.mrf.mxu0
        %v2631 = vadd.f32 %v2542, %v2630
        %2632 = vmatmul.bf16.gmra.mxu0 %v1108
        %v2633 = vpop.f32.mrf.mxu0
        %v2634 = vadd.f32 %v2545, %v2633
        %v2635 = vpop.f32.mrf.mxu0
        %v2636 = vadd.f32 %v2547, %v2635
        %2637 = vmatmul.bf16.gmra.mxu0 %v1109
        %v2638 = vpop.f32.mrf.mxu0
        %v2639 = vadd.f32 %v2550, %v2638
        %v2640 = vpop.f32.mrf.mxu0
        %v2641 = vadd.f32 %v2552, %v2640
        %2642 = vmatmul.bf16.gmra.mxu0 %v1110
        %v2643 = vpop.f32.mrf.mxu0
        %v2644 = vadd.f32 %v2555, %v2643
        %v2645 = vpop.f32.mrf.mxu0
        %v2646 = vadd.f32 %v2557, %v2645
        %2647 = vmatmul.bf16.gmra.mxu0 %v1111
        %v2648 = vpop.f32.mrf.mxu0
        %v2649 = vadd.f32 %v2560, %v2648
        %v2650 = vpop.f32.mrf.mxu0
        %v2651 = vadd.f32 %v2562, %v2650
        %2652 = vmatmul.bf16.gmra.mxu0 %v1112
        %v2653 = vpop.f32.mrf.mxu0
        %v2654 = vadd.f32 %v2565, %v2653
        %v2655 = vpop.f32.mrf.mxu0
        %v2656 = vadd.f32 %v2567, %v2655
        %2657 = vmatmul.bf16.gmra.mxu0 %v1113
        %v2658 = vpop.f32.mrf.mxu0
        %v2659 = vadd.f32 %v2570, %v2658
        %v2660 = vpop.f32.mrf.mxu0
        %v2661 = vadd.f32 %v2572, %v2660
        %2662 = vmatmul.bf16.gmra.mxu0 %v1114
        %v2663 = vpop.f32.mrf.mxu0
        %v2664 = vadd.f32 %v2575, %v2663
        %v2665 = vpop.f32.mrf.mxu0
        %v2666 = vadd.f32 %v2577, %v2665
        %2667 = vmatmul.bf16.gmra.mxu0 %v1115
        %v2668 = vpop.f32.mrf.mxu0
        %v2669 = vadd.f32 %v2580, %v2668
        %v2670 = vpop.f32.mrf.mxu0
        %v2671 = vadd.f32 %v2582, %v2670
        %2672 = vmatmul.bf16.gmra.mxu0 %v1116
        %v2673 = vpop.f32.mrf.mxu0
        %v2674 = vadd.f32 %v2585, %v2673
        %v2675 = vpop.f32.mrf.mxu0
        %v2676 = vadd.f32 %v2587, %v2675
        %2677 = vmatmul.bf16.gmra.mxu0 %v1117
        %v2678 = vpop.f32.mrf.mxu0
        %v2679 = vadd.f32 %v2590, %v2678
        %v2680 = vpop.f32.mrf.mxu0
        %v2681 = vadd.f32 %v2592, %v2680
        %2682 = vdwg.mxu0
        %2683 = vmatpush.bf16.msra.mxu0 %v1979
        %2684 = vmatpush.bf16.msra.mxu0 %v1978
        %2685 = vmatpush.bf16.msra.mxu0 %v1977
        %2686 = vmatpush.bf16.msra.mxu0 %v1976
        %2687 = vmatpush.bf16.msra.mxu0 %v1975
        %2688 = vmatpush.bf16.msra.mxu0 %v1974
        %2689 = vmatpush.bf16.msra.mxu0 %v1973
        %2690 = vmatpush.bf16.msra.mxu0 %v1972
        %2691 = vmatmul.bf16.gmra.mxu0 %v1172
        %v2692 = vpop.f32.mrf.mxu0
        %v2693 = vadd.f32 %v2604, %v2692
        %v2694 = vpop.f32.mrf.mxu0
        %v2695 = vadd.f32 %v2606, %v2694
        %2696 = vmatmul.bf16.gmra.mxu0 %v1184
        %v2697 = vpop.f32.mrf.mxu0
        %v2698 = vadd.f32 %v2609, %v2697
        %v2699 = vpop.f32.mrf.mxu0
        %v2700 = vadd.f32 %v2611, %v2699
        %2701 = vmatmul.bf16.gmra.mxu0 %v1196
        %v2702 = vpop.f32.mrf.mxu0
        %v2703 = vadd.f32 %v2614, %v2702
        %v2704 = vpop.f32.mrf.mxu0
        %v2705 = vadd.f32 %v2616, %v2704
        %2706 = vmatmul.bf16.gmra.mxu0 %v1208
        %v2707 = vpop.f32.mrf.mxu0
        %v2708 = vadd.f32 %v2619, %v2707
        %v2709 = vpop.f32.mrf.mxu0
        %v2710 = vadd.f32 %v2621, %v2709
        %2711 = vmatmul.bf16.gmra.mxu0 %v1220
        %v2712 = vpop.f32.mrf.mxu0
        %v2713 = vadd.f32 %v2624, %v2712
        %v2714 = vpop.f32.mrf.mxu0
        %v2715 = vadd.f32 %v2626, %v2714
        %2716 = vmatmul.bf16.gmra.mxu0 %v1232
        %v2717 = vpop.f32.mrf.mxu0
        %v2718 = vadd.f32 %v2629, %v2717
        %v2719 = vpop.f32.mrf.mxu0
        %v2720 = vadd.f32 %v2631, %v2719
        %2721 = vmatmul.bf16.gmra.mxu0 %v1244
        %v2722 = vpop.f32.mrf.mxu0
        %v2723 = vadd.f32 %v2634, %v2722
        %v2724 = vpop.f32.mrf.mxu0
        %v2725 = vadd.f32 %v2636, %v2724
        %2726 = vmatmul.bf16.gmra.mxu0 %v1256
        %v2727 = vpop.f32.mrf.mxu0
        %v2728 = vadd.f32 %v2639, %v2727
        %v2729 = vpop.f32.mrf.mxu0
        %v2730 = vadd.f32 %v2641, %v2729
        %2731 = vmatmul.bf16.gmra.mxu0 %v1268
        %v2732 = vpop.f32.mrf.mxu0
        %v2733 = vadd.f32 %v2644, %v2732
        %v2734 = vpop.f32.mrf.mxu0
        %v2735 = vadd.f32 %v2646, %v2734
        %2736 = vmatmul.bf16.gmra.mxu0 %v1280
        %v2737 = vpop.f32.mrf.mxu0
        %v2738 = vadd.f32 %v2649, %v2737
        %v2739 = vpop.f32.mrf.mxu0
        %v2740 = vadd.f32 %v2651, %v2739
        %2741 = vmatmul.bf16.gmra.mxu0 %v1292
        %v2742 = vpop.f32.mrf.mxu0
        %v2743 = vadd.f32 %v2654, %v2742
        %v2744 = vpop.f32.mrf.mxu0
        %v2745 = vadd.f32 %v2656, %v2744
        %2746 = vmatmul.bf16.gmra.mxu0 %v1304
        %v2747 = vpop.f32.mrf.mxu0
        %v2748 = vadd.f32 %v2659, %v2747
        %v2749 = vpop.f32.mrf.mxu0
        %v2750 = vadd.f32 %v2661, %v2749
        %2751 = vmatmul.bf16.gmra.mxu0 %v1316
        %v2752 = vpop.f32.mrf.mxu0
        %v2753 = vadd.f32 %v2664, %v2752
        %v2754 = vpop.f32.mrf.mxu0
        %v2755 = vadd.f32 %v2666, %v2754
        %2756 = vmatmul.bf16.gmra.mxu0 %v1328
        %v2757 = vpop.f32.mrf.mxu0
        %v2758 = vadd.f32 %v2669, %v2757
        %v2759 = vpop.f32.mrf.mxu0
        %v2760 = vadd.f32 %v2671, %v2759
        %2761 = vmatmul.bf16.gmra.mxu0 %v1453
        %v2762 = vpop.f32.mrf.mxu0
        %v2763 = vadd.f32 %v2674, %v2762
        %v2764 = vpop.f32.mrf.mxu0
        %v2765 = vadd.f32 %v2676, %v2764
        %2766 = vmatmul.bf16.gmra.mxu0 %v1472
        %v2767 = vpop.f32.mrf.mxu0
        %v2768 = vadd.f32 %v2679, %v2767
        %v2769 = vpop.f32.mrf.mxu0
        %v2770 = vadd.f32 %v2681, %v2769
        %2771 = vdwg.mxu0
        %2772 = vmatpush.bf16.msra.mxu0 %v1987
        %2773 = vmatpush.bf16.msra.mxu0 %v1986
        %2774 = vmatpush.bf16.msra.mxu0 %v1985
        %2775 = vmatpush.bf16.msra.mxu0 %v1984
        %2776 = vmatpush.bf16.msra.mxu0 %v1983
        %2777 = vmatpush.bf16.msra.mxu0 %v1982
        %2778 = vmatpush.bf16.msra.mxu0 %v1981
        %2779 = vmatpush.bf16.msra.mxu0 %v1980
        %2780 = vmatmul.bf16.gmra.mxu0 %v1386
        %v2781 = vpop.f32.mrf.mxu0
        %v2782 = vadd.f32 %v2693, %v2781
        %v2783 = vpop.f32.mrf.mxu0
        %v2784 = vadd.f32 %v2695, %v2783
        %2785 = vmatmul.bf16.gmra.mxu0 %v1389
        %v2786 = vpop.f32.mrf.mxu0
        %v2787 = vadd.f32 %v2698, %v2786
        %v2788 = vpop.f32.mrf.mxu0
        %v2789 = vadd.f32 %v2700, %v2788
        %2790 = vmatmul.bf16.gmra.mxu0 %v1392
        %v2791 = vpop.f32.mrf.mxu0
        %v2792 = vadd.f32 %v2703, %v2791
        %v2793 = vpop.f32.mrf.mxu0
        %v2794 = vadd.f32 %v2705, %v2793
        %2795 = vmatmul.bf16.gmra.mxu0 %v1395
        %v2796 = vpop.f32.mrf.mxu0
        %v2797 = vadd.f32 %v2708, %v2796
        %v2798 = vpop.f32.mrf.mxu0
        %v2799 = vadd.f32 %v2710, %v2798
        %2800 = vmatmul.bf16.gmra.mxu0 %v1398
        %v2801 = vpop.f32.mrf.mxu0
        %v2802 = vadd.f32 %v2713, %v2801
        %v2803 = vpop.f32.mrf.mxu0
        %v2804 = vadd.f32 %v2715, %v2803
        %2805 = vmatmul.bf16.gmra.mxu0 %v1401
        %v2806 = vpop.f32.mrf.mxu0
        %v2807 = vadd.f32 %v2718, %v2806
        %v2808 = vpop.f32.mrf.mxu0
        %v2809 = vadd.f32 %v2720, %v2808
        %2810 = vmatmul.bf16.gmra.mxu0 %v1404
        %v2811 = vpop.f32.mrf.mxu0
        %v2812 = vadd.f32 %v2723, %v2811
        %v2813 = vpop.f32.mrf.mxu0
        %v2814 = vadd.f32 %v2725, %v2813
        %2815 = vmatmul.bf16.gmra.mxu0 %v1407
        %v2816 = vpop.f32.mrf.mxu0
        %v2817 = vadd.f32 %v2728, %v2816
        %v2818 = vpop.f32.mrf.mxu0
        %v2819 = vadd.f32 %v2730, %v2818
        %2820 = vmatmul.bf16.gmra.mxu0 %v1410
        %v2821 = vpop.f32.mrf.mxu0
        %v2822 = vadd.f32 %v2733, %v2821
        %v2823 = vpop.f32.mrf.mxu0
        %v2824 = vadd.f32 %v2735, %v2823
        %2825 = vmatmul.bf16.gmra.mxu0 %v1413
        %v2826 = vpop.f32.mrf.mxu0
        %v2827 = vadd.f32 %v2738, %v2826
        %v2828 = vpop.f32.mrf.mxu0
        %v2829 = vadd.f32 %v2740, %v2828
        %2830 = vmatmul.bf16.gmra.mxu0 %v1416
        %v2831 = vpop.f32.mrf.mxu0
        %v2832 = vadd.f32 %v2743, %v2831
        %v2833 = vpop.f32.mrf.mxu0
        %v2834 = vadd.f32 %v2745, %v2833
        %2835 = vmatmul.bf16.gmra.mxu0 %v1419
        %v2836 = vpop.f32.mrf.mxu0
        %v2837 = vadd.f32 %v2748, %v2836
        %v2838 = vpop.f32.mrf.mxu0
        %v2839 = vadd.f32 %v2750, %v2838
        %2840 = vmatmul.bf16.gmra.mxu0 %v1422
        %v2841 = vpop.f32.mrf.mxu0
        %v2842 = vadd.f32 %v2753, %v2841
        %v2843 = vpop.f32.mrf.mxu0
        %v2844 = vadd.f32 %v2755, %v2843
        %2845 = vmatmul.bf16.gmra.mxu0 %v1425
        %v2846 = vpop.f32.mrf.mxu0
        %v2847 = vadd.f32 %v2758, %v2846
        %v2848 = vpop.f32.mrf.mxu0
        %v2849 = vadd.f32 %v2760, %v2848
        %2850 = vmatmul.bf16.gmra.mxu0 %v1459
        %v2851 = vpop.f32.mrf.mxu0
        %v2852 = vadd.f32 %v2763, %v2851
        %v2853 = vpop.f32.mrf.mxu0
        %v2854 = vadd.f32 %v2765, %v2853
        %2855 = vmatmul.bf16.gmra.mxu0 %v1478
        %v2856 = vpop.f32.mrf.mxu0
        %v2857 = vadd.f32 %v2768, %v2856
        %v2858 = vpop.f32.mrf.mxu0
        %v2859 = vadd.f32 %v2770, %v2858
        %2860 = vdwg.mxu0
        %v2861 = vmax.f32 %v2782, 0.0
        %v2862 = vmax.f32 %v2784, 0.0
        %v2863 = vmax.f32 %v2787, 0.0
        %v2864 = vmax.f32 %v2789, 0.0
        %v2865 = vmax.f32 %v2792, 0.0
        %v2866 = vmax.f32 %v2794, 0.0
        %v2867 = vmax.f32 %v2797, 0.0
        %v2868 = vmax.f32 %v2799, 0.0
        %v2869 = vmax.f32 %v2802, 0.0
        %v2870 = vmax.f32 %v2804, 0.0
        %v2871 = vmax.f32 %v2807, 0.0
        %v2872 = vmax.f32 %v2809, 0.0
        %v2873 = vmax.f32 %v2812, 0.0
        %v2874 = vmax.f32 %v2814, 0.0
        %v2875 = vmax.f32 %v2817, 0.0
        %v2876 = vmax.f32 %v2819, 0.0
        %v2877 = vmax.f32 %v2822, 0.0
        %v2878 = vmax.f32 %v2824, 0.0
        %v2879 = vmax.f32 %v2827, 0.0
        %v2880 = vmax.f32 %v2829, 0.0
        %v2881 = vmax.f32 %v2832, 0.0
        %v2882 = vmax.f32 %v2834, 0.0
        %v2883 = vmax.f32 %v2837, 0.0
        %v2884 = vmax.f32 %v2839, 0.0
        %v2885 = vmax.f32 %v2842, 0.0
        %v2886 = vmax.f32 %v2844, 0.0
        %v2887 = vmax.f32 %v2847, 0.0
        %v2888 = vmax.f32 %v2849, 0.0
        %v2889 = vmax.f32 %v2852, 0.0
        %v2890 = vmax.f32 %v2854, 0.0
        %v2891 = vmax.f32 %v2857, 0.0
        %v2892 = vmax.f32 %v2859, 0.0
        %v2893 = vpack.c.bf16 %v2862, %v2861
        %v2894 = vpack.c.bf16 %v2864, %v2863
        %v2895 = vpack.c.bf16 %v2866, %v2865
        %v2896 = vpack.c.bf16 %v2868, %v2867
        %v2897 = vpack.c.bf16 %v2870, %v2869
        %v2898 = vpack.c.bf16 %v2872, %v2871
        %v2899 = vpack.c.bf16 %v2874, %v2873
        %v2900 = vpack.c.bf16 %v2876, %v2875
        %v2901 = vpack.c.bf16 %v2878, %v2877
        %v2902 = vpack.c.bf16 %v2880, %v2879
        %v2903 = vpack.c.bf16 %v2882, %v2881
        %v2904 = vpack.c.bf16 %v2884, %v2883
        %v2905 = vpack.c.bf16 %v2886, %v2885
        %v2906 = vpack.c.bf16 %v2888, %v2887
        %v2907 = vpack.c.bf16 %v2890, %v2889
        %v2908 = vpack.c.bf16 %v2892, %v2891
        %v2909 = vld [vmem:[#allocation9] sm:$0xf]
        %v2910 = vld [vmem:[#allocation9 + $0x4] sm:$0xf]
        %v2911 = vld [vmem:[#allocation9 + $0x8] sm:$0xf]
        %v2912 = vld [vmem:[#allocation9 + $0xc] sm:$0xf]
        %v2913 = vld [vmem:[#allocation9 + $0x10] sm:$0xf]
        %v2914 = vld [vmem:[#allocation9 + $0x14] sm:$0xf]
        %v2915 = vld [vmem:[#allocation9 + $0x18] sm:$0xf]
        %v2916 = vld [vmem:[#allocation9 + $0x1c] sm:$0xf]
        %v2917 = vld [vmem:[#allocation9 + $0x20] sm:$0xf]
        %v2918 = vld [vmem:[#allocation9 + $0x24] sm:$0xf]
        %v2919 = vld [vmem:[#allocation9 + $0x28] sm:$0xf]
        %v2920 = vld [vmem:[#allocation9 + $0x2c] sm:$0xf]
        %v2921 = vld [vmem:[#allocation9 + $0x30] sm:$0xf]
        %v2922 = vld [vmem:[#allocation9 + $0x34] sm:$0xf]
        %v2923 = vld [vmem:[#allocation9 + $0x38] sm:$0xf]
        %v2924 = vld [vmem:[#allocation9 + $0x3c] sm:$0xf]
        %v2925 = vld [vmem:[%s6] sm:$0x1]
        %v2927 = vperm.slane %v2925, 0
        %v2945 = vunpack.c.l.b16 %v2909
        %v2946 = vunpack.c.l.b16 %v2910
        %v2947 = vunpack.c.l.b16 %v2911
        %v2948 = vunpack.c.l.b16 %v2912
        %v2949 = vunpack.c.l.b16 %v2913
        %v2950 = vunpack.c.l.b16 %v2914
        %v2951 = vunpack.c.l.b16 %v2915
        %v2952 = vunpack.c.l.b16 %v2916
        %v2953 = vunpack.c.l.b16 %v2917
        %v2954 = vunpack.c.l.b16 %v2918
        %v2955 = vunpack.c.l.b16 %v2919
        %v2956 = vunpack.c.l.b16 %v2920
        %v2957 = vunpack.c.l.b16 %v2921
        %v2958 = vunpack.c.l.b16 %v2922
        %v2959 = vunpack.c.l.b16 %v2923
        %v2960 = vunpack.c.l.b16 %v2924
        %v2961 = vpack.c.b16 %v2946, %v2945
        %v2962 = vpack.c.b16 %v2948, %v2947
        %v2963 = vpack.c.b16 %v2950, %v2949
        %v2964 = vpack.c.b16 %v2952, %v2951
        %v2965 = vpack.c.b16 %v2954, %v2953
        %v2966 = vpack.c.b16 %v2956, %v2955
        %v2967 = vpack.c.b16 %v2958, %v2957
        %v2968 = vpack.c.b16 %v2960, %v2959
        %2977 = vmatpush.bf16.msra.mxu0 %v2968
        %2978 = vmatpush.bf16.msra.mxu0 %v2967
        %2979 = vmatpush.bf16.msra.mxu0 %v2966
        %2980 = vmatpush.bf16.msra.mxu0 %v2965
        %2981 = vmatpush.bf16.msra.mxu0 %v2964
        %2982 = vmatpush.bf16.msra.mxu0 %v2963
        %2983 = vmatpush.bf16.msra.mxu0 %v2962
        %2984 = vmatpush.bf16.msra.mxu0 %v2961
        %2985 = vmatmul.bf16.gmra.mxu0 %v2893
        %v2986 = vpop.f32.mrf.mxu0
        %v2987 = vadd.f32 %v2927, %v2986
        %v2988 = vpop.f32.mrf.mxu0
        %v2989 = vadd.f32 %v2927, %v2988
        %2990 = vmatmul.bf16.gmra.mxu0 %v2894
        %v2991 = vpop.f32.mrf.mxu0
        %v2992 = vadd.f32 %v2927, %v2991
        %v2993 = vpop.f32.mrf.mxu0
        %v2994 = vadd.f32 %v2927, %v2993
        %2995 = vmatmul.bf16.gmra.mxu0 %v2895
        %v2996 = vpop.f32.mrf.mxu0
        %v2997 = vadd.f32 %v2927, %v2996
        %v2998 = vpop.f32.mrf.mxu0
        %v2999 = vadd.f32 %v2927, %v2998
        %3000 = vmatmul.bf16.gmra.mxu0 %v2896
        %v3001 = vpop.f32.mrf.mxu0
        %v3002 = vadd.f32 %v2927, %v3001
        %v3003 = vpop.f32.mrf.mxu0
        %v3004 = vadd.f32 %v2927, %v3003
        %3005 = vmatmul.bf16.gmra.mxu0 %v2897
        %v3006 = vpop.f32.mrf.mxu0
        %v3007 = vadd.f32 %v2927, %v3006
        %v3008 = vpop.f32.mrf.mxu0
        %v3009 = vadd.f32 %v2927, %v3008
        %3010 = vmatmul.bf16.gmra.mxu0 %v2898
        %v3011 = vpop.f32.mrf.mxu0
        %v3012 = vadd.f32 %v2927, %v3011
        %v3013 = vpop.f32.mrf.mxu0
        %v3014 = vadd.f32 %v2927, %v3013
        %3015 = vmatmul.bf16.gmra.mxu0 %v2899
        %v3016 = vpop.f32.mrf.mxu0
        %v3017 = vadd.f32 %v2927, %v3016
        %v3018 = vpop.f32.mrf.mxu0
        %v3019 = vadd.f32 %v2927, %v3018
        %3020 = vmatmul.bf16.gmra.mxu0 %v2900
        %v3021 = vpop.f32.mrf.mxu0
        %v3022 = vadd.f32 %v2927, %v3021
        %v3023 = vpop.f32.mrf.mxu0
        %v3024 = vadd.f32 %v2927, %v3023
        %3025 = vmatmul.bf16.gmra.mxu0 %v2901
        %v3026 = vpop.f32.mrf.mxu0
        %v3027 = vadd.f32 %v2927, %v3026
        %v3028 = vpop.f32.mrf.mxu0
        %v3029 = vadd.f32 %v2927, %v3028
        %3030 = vmatmul.bf16.gmra.mxu0 %v2902
        %v3031 = vpop.f32.mrf.mxu0
        %v3032 = vadd.f32 %v2927, %v3031
        %v3033 = vpop.f32.mrf.mxu0
        %v3034 = vadd.f32 %v2927, %v3033
        %3035 = vmatmul.bf16.gmra.mxu0 %v2903
        %v3036 = vpop.f32.mrf.mxu0
        %v3037 = vadd.f32 %v2927, %v3036
        %v3038 = vpop.f32.mrf.mxu0
        %v3039 = vadd.f32 %v2927, %v3038
        %3040 = vmatmul.bf16.gmra.mxu0 %v2904
        %v3041 = vpop.f32.mrf.mxu0
        %v3042 = vadd.f32 %v2927, %v3041
        %v3043 = vpop.f32.mrf.mxu0
        %v3044 = vadd.f32 %v2927, %v3043
        %3045 = vmatmul.bf16.gmra.mxu0 %v2905
        %v3046 = vpop.f32.mrf.mxu0
        %v3047 = vadd.f32 %v2927, %v3046
        %v3048 = vpop.f32.mrf.mxu0
        %v3049 = vadd.f32 %v2927, %v3048
        %3050 = vmatmul.bf16.gmra.mxu0 %v2906
        %v3051 = vpop.f32.mrf.mxu0
        %v3052 = vadd.f32 %v2927, %v3051
        %v3053 = vpop.f32.mrf.mxu0
        %v3054 = vadd.f32 %v2927, %v3053
        %3055 = vmatmul.bf16.gmra.mxu0 %v2907
        %v3056 = vpop.f32.mrf.mxu0
        %v3057 = vadd.f32 %v2927, %v3056
        %v3058 = vpop.f32.mrf.mxu0
        %v3059 = vadd.f32 %v2927, %v3058
        %3060 = vmatmul.bf16.gmra.mxu0 %v2908
        %v3061 = vpop.f32.mrf.mxu0
        %v3062 = vadd.f32 %v2927, %v3061
        %v3063 = vpop.f32.mrf.mxu0
        %v3064 = vadd.f32 %v2927, %v3063
        %3065 = vdwg.mxu0
        %v3066 = vunpack.c.l.bf16 %v375
        %v3067 = vunpack.c.l.bf16 %v376
        %v3068 = vunpack.c.l.bf16 %v377
        %v3069 = vunpack.c.l.bf16 %v378
        %v3070 = vunpack.c.l.bf16 %v379
        %v3071 = vunpack.c.l.bf16 %v380
        %v3072 = vunpack.c.l.bf16 %v381
        %v3073 = vunpack.c.l.bf16 %v382
        %v3074 = vunpack.c.l.bf16 %v383
        %v3075 = vunpack.c.l.bf16 %v384
        %v3076 = vunpack.c.l.bf16 %v385
        %v3077 = vunpack.c.l.bf16 %v386
        %v3078 = vunpack.c.l.bf16 %v387
        %v3079 = vunpack.c.l.bf16 %v388
        %v3080 = vunpack.c.l.bf16 %v389
        %v3081 = vunpack.c.l.bf16 %v390
        %v3082 = vunpack.c.l.bf16 %v391
        %v3083 = vunpack.c.l.bf16 %v392
        %v3084 = vunpack.c.l.bf16 %v393
        %v3085 = vunpack.c.l.bf16 %v394
        %v3086 = vunpack.c.l.bf16 %v395
        %v3087 = vunpack.c.l.bf16 %v396
        %v3088 = vunpack.c.l.bf16 %v397
        %v3089 = vunpack.c.l.bf16 %v398
        %v3090 = vunpack.c.l.bf16 %v399
        %v3091 = vunpack.c.l.bf16 %v400
        %v3092 = vunpack.c.l.bf16 %v401
        %v3093 = vunpack.c.l.bf16 %v402
        %v3094 = vunpack.c.l.bf16 %v403
        %v3095 = vunpack.c.l.bf16 %v404
        %v3096 = vunpack.c.l.bf16 %v405
        %v3097 = vunpack.c.l.bf16 %v406
        %v3098 = vadd.f32 %v2987, %v3066
        %v3099 = vadd.f32 %v2989, %v3067
        %v3100 = vadd.f32 %v2992, %v3068
        %v3101 = vadd.f32 %v2994, %v3069
        %v3102 = vadd.f32 %v2997, %v3070
        %v3103 = vadd.f32 %v2999, %v3071
        %v3104 = vadd.f32 %v3002, %v3072
        %v3105 = vadd.f32 %v3004, %v3073
        %v3106 = vadd.f32 %v3007, %v3074
        %v3107 = vadd.f32 %v3009, %v3075
        %v3108 = vadd.f32 %v3012, %v3076
        %v3109 = vadd.f32 %v3014, %v3077
        %v3110 = vadd.f32 %v3017, %v3078
        %v3111 = vadd.f32 %v3019, %v3079
        %v3112 = vadd.f32 %v3022, %v3080
        %v3113 = vadd.f32 %v3024, %v3081
        %v3114 = vadd.f32 %v3027, %v3082
        %v3115 = vadd.f32 %v3029, %v3083
        %v3116 = vadd.f32 %v3032, %v3084
        %v3117 = vadd.f32 %v3034, %v3085
        %v3118 = vadd.f32 %v3037, %v3086
        %v3119 = vadd.f32 %v3039, %v3087
        %v3120 = vadd.f32 %v3042, %v3088
        %v3121 = vadd.f32 %v3044, %v3089
        %v3122 = vadd.f32 %v3047, %v3090
        %v3123 = vadd.f32 %v3049, %v3091
        %v3124 = vadd.f32 %v3052, %v3092
        %v3125 = vadd.f32 %v3054, %v3093
        %v3126 = vadd.f32 %v3057, %v3094
        %v3127 = vadd.f32 %v3059, %v3095
        %v3128 = vadd.f32 %v3062, %v3096
        %v3129 = vadd.f32 %v3064, %v3097
        %v3130 = vmax.f32 %v3098, 0.0
        %v3131 = vmax.f32 %v3099, 0.0
        %v3132 = vmax.f32 %v3100, 0.0
        %v3133 = vmax.f32 %v3101, 0.0
        %v3134 = vmax.f32 %v3102, 0.0
        %v3135 = vmax.f32 %v3103, 0.0
        %v3136 = vmax.f32 %v3104, 0.0
        %v3137 = vmax.f32 %v3105, 0.0
        %v3138 = vmax.f32 %v3106, 0.0
        %v3139 = vmax.f32 %v3107, 0.0
        %v3140 = vmax.f32 %v3108, 0.0
        %v3141 = vmax.f32 %v3109, 0.0
        %v3142 = vmax.f32 %v3110, 0.0
        %v3143 = vmax.f32 %v3111, 0.0
        %v3144 = vmax.f32 %v3112, 0.0
        %v3145 = vmax.f32 %v3113, 0.0
        %v3146 = vmax.f32 %v3114, 0.0
        %v3147 = vmax.f32 %v3115, 0.0
        %v3148 = vmax.f32 %v3116, 0.0
        %v3149 = vmax.f32 %v3117, 0.0
        %v3150 = vmax.f32 %v3118, 0.0
        %v3151 = vmax.f32 %v3119, 0.0
        %v3152 = vmax.f32 %v3120, 0.0
        %v3153 = vmax.f32 %v3121, 0.0
        %v3154 = vmax.f32 %v3122, 0.0
        %v3155 = vmax.f32 %v3123, 0.0
        %v3156 = vmax.f32 %v3124, 0.0
        %v3157 = vmax.f32 %v3125, 0.0
        %v3158 = vmax.f32 %v3126, 0.0
        %v3159 = vmax.f32 %v3127, 0.0
        %v3160 = vmax.f32 %v3128, 0.0
        %v3161 = vmax.f32 %v3129, 0.0
        %v3162 = vpack.c.bf16 %v3130, %v3130
        %v3163 = vpack.c.bf16 %v3131, %v3131
        %v3164 = vpack.c.bf16 %v3132, %v3132
        %v3165 = vpack.c.bf16 %v3133, %v3133
        %v3166 = vpack.c.bf16 %v3134, %v3134
        %v3167 = vpack.c.bf16 %v3135, %v3135
        %v3168 = vpack.c.bf16 %v3136, %v3136
        %v3169 = vpack.c.bf16 %v3137, %v3137
        %v3170 = vpack.c.bf16 %v3138, %v3138
        %v3171 = vpack.c.bf16 %v3139, %v3139
        %v3172 = vpack.c.bf16 %v3140, %v3140
        %v3173 = vpack.c.bf16 %v3141, %v3141
        %v3174 = vpack.c.bf16 %v3142, %v3142
        %v3175 = vpack.c.bf16 %v3143, %v3143
        %v3176 = vpack.c.bf16 %v3144, %v3144
        %v3177 = vpack.c.bf16 %v3145, %v3145
        %v3178 = vpack.c.bf16 %v3146, %v3146
        %v3179 = vpack.c.bf16 %v3147, %v3147
        %v3180 = vpack.c.bf16 %v3148, %v3148
        %v3181 = vpack.c.bf16 %v3149, %v3149
        %v3182 = vpack.c.bf16 %v3150, %v3150
        %v3183 = vpack.c.bf16 %v3151, %v3151
        %v3184 = vpack.c.bf16 %v3152, %v3152
        %v3185 = vpack.c.bf16 %v3153, %v3153
        %v3186 = vpack.c.bf16 %v3154, %v3154
        %v3187 = vpack.c.bf16 %v3155, %v3155
        %v3188 = vpack.c.bf16 %v3156, %v3156
        %v3189 = vpack.c.bf16 %v3157, %v3157
        %v3190 = vpack.c.bf16 %v3158, %v3158
        %v3191 = vpack.c.bf16 %v3159, %v3159
        %v3192 = vpack.c.bf16 %v3160, %v3160
        %v3193 = vpack.c.bf16 %v3161, %v3161
        %3194 = vst [vmem:[%s362] sm:$0xf] %v3162
        %3195 = vst [vmem:[%s362 + $0x4] sm:$0xf] %v3163
        %3196 = vst [vmem:[%s362 + $0x8] sm:$0xf] %v3164
        %3197 = vst [vmem:[%s362 + $0xc] sm:$0xf] %v3165
        %3198 = vst [vmem:[%s362 + $0x10] sm:$0xf] %v3166
        %3199 = vst [vmem:[%s362 + $0x14] sm:$0xf] %v3167
        %3200 = vst [vmem:[%s362 + $0x18] sm:$0xf] %v3168
        %3201 = vst [vmem:[%s362 + $0x1c] sm:$0xf] %v3169
        %3202 = vst [vmem:[%s362 + $0x20] sm:$0xf] %v3170
        %3203 = vst [vmem:[%s362 + $0x24] sm:$0xf] %v3171
        %3204 = vst [vmem:[%s362 + $0x28] sm:$0xf] %v3172
        %3205 = vst [vmem:[%s362 + $0x2c] sm:$0xf] %v3173
        %3206 = vst [vmem:[%s362 + $0x30] sm:$0xf] %v3174
        %3207 = vst [vmem:[%s362 + $0x34] sm:$0xf] %v3175
        %3208 = vst [vmem:[%s362 + $0x38] sm:$0xf] %v3176
        %3209 = vst [vmem:[%s362 + $0x3c] sm:$0xf] %v3177
        %3210 = vst [vmem:[%s362 + $0x40] sm:$0xf] %v3178
        %3211 = vst [vmem:[%s362 + $0x44] sm:$0xf] %v3179
        %3212 = vst [vmem:[%s362 + $0x48] sm:$0xf] %v3180
        %3213 = vst [vmem:[%s362 + $0x4c] sm:$0xf] %v3181
        %3214 = vst [vmem:[%s362 + $0x50] sm:$0xf] %v3182
        %3215 = vst [vmem:[%s362 + $0x54] sm:$0xf] %v3183
        %3216 = vst [vmem:[%s362 + $0x58] sm:$0xf] %v3184
        %3217 = vst [vmem:[%s362 + $0x5c] sm:$0xf] %v3185
        %3218 = vst [vmem:[%s362 + $0x60] sm:$0xf] %v3186
        %3219 = vst [vmem:[%s362 + $0x64] sm:$0xf] %v3187
        %3220 = vst [vmem:[%s362 + $0x68] sm:$0xf] %v3188
        %3221 = vst [vmem:[%s362 + $0x6c] sm:$0xf] %v3189
        %3222 = vst [vmem:[%s362 + $0x70] sm:$0xf] %v3190
        %3223 = vst [vmem:[%s362 + $0x74] sm:$0xf] %v3191
        %3224 = vst [vmem:[%s362 + $0x78] sm:$0xf] %v3192
        %3225 = vst [vmem:[%s362 + $0x7c] sm:$0xf] %v3193
        %s3226 = sand.u32 %s200, 1
        %s3227 = scalar_lea.sflag [#allocation5], %s3226
        %s3228 = sand.u32 %s200, 1
        %s3229 = smul.addr %s3228, 128
        %s3230 = scalar_lea.vmem [#allocation11], %s3229
        // Predicated region
        $region69: #{tpu_custom_call.1} parent=47 // pred_check
          %p3231 = pneg %p210
        $region70: #{tpu_custom_call.1} parent=47 // pred_check_branch
          %3233 = sbr.rel (%p3231) target = $region72
        $region71: #{tpu_custom_call.1} parent=47 // pred_region
          %s3234 = smul.u32 16, %s31
          %3236 = vsyncadd %s3227, 0
          %s3237 = smul.addr %s3234, 2
          %s3238 = smul.addr %s30, 32
          %s3239 = sadd.s32 %s3237, %s3238
          %s3240 = smul.addr %s3239, 4
          %s3241 = scalar_lea.hbm %s7, %s3240
          %s3242 = sshll.u32 %s3230, 4
          %s3243 = int_to_ptr.vmem [resolvable:$true] %s3242
          %s3244 = sshll.u32 %s3241, 4
          %s3245 = int_to_ptr.hbm [resolvable:$true] %s3244
          %3250 = dma.vmem_to_hbm [thread:$0]  %s3243, 2048, %s3245, %s3227, 64, 64, 4
        $region72: #{tpu_custom_call.1} parent=47 // pred_fallthru
          _
      $region48: #{tpu_custom_call.1} parent=5 // pred_fallthru
        _
      %p3251 = scmp.le.s32.totalorder 2, %s21
      // Predicated region
      $region73: #{tpu_custom_call.1} parent=5 // pred_check
        %p3252 = pneg %p3251
      $region74: #{tpu_custom_call.1} parent=5 // pred_check_branch
        %3254 = sbr.rel (%p3252) target = $region76
      $region75: #{tpu_custom_call.1} parent=5 // pred_region
        %s3255 = ssub.s32 %s21, 2
        // Predicated region
        $region77: #{tpu_custom_call.1} parent=75 // pred_check
          %p3256 = pneg %p216
        $region78: #{tpu_custom_call.1} parent=75 // pred_check_branch
          %3258 = sbr.rel (%p3256) target = $region80
        $region79: #{tpu_custom_call.1} parent=75 // pred_region
          %s3259 = sand.u32 %s201, 1
          %s3260 = scalar_lea.sflag [#allocation5], %s3259
          %s3261 = sand.u32 %s201, 1
          %s3262 = smul.addr %s3261, 128
          %s3263 = scalar_lea.vmem [#allocation11], %s3262
          %3265 = dma.done %s3260, 2048
        $region80: #{tpu_custom_call.1} parent=75 // pred_fallthru
          _
      $region76: #{tpu_custom_call.1} parent=5 // pred_fallthru
        _
    $region6: #{tpu_custom_call.1} parent=1 // loop_footer
      %s25 = sadd.s32 1, %s21
    $region7: #{tpu_custom_call.1} parent=1 // loop_footer_branch
      %20 = sbr.rel target = $region3
    $region8: #{tpu_custom_call.1} parent=1 // loop_exit
      _
    %3266 = vsyncpa [#allocation4], 1
    %s3267 = scalar_lea.sflag [#allocation4], 1
    %3268 = vsyncpa %s3267, 1
    %3269 = vsyncpa [#allocation7], 1
    %3270 = vsyncpa [#allocation10], 1
    %3271 = vsyncpa [#allocation5], 1
    %s3272 = scalar_lea.sflag [#allocation5], 1
    %3273 = vsyncpa %s3272, 1

// kernel: tpu_custom_call.1
$region0: #{tpu_custom_call.1}
  #allocation0 [shape = 'u32[]', space=smem, size = 0x4, offset = 0x4, fixed_abs, tag = 'smem constant byte address 0x4 - core index']
  #allocation1 [shape = 'u32[72,128]{1,0:T(1,128)}', space=vmem, size = 0x9000, scoped, tag = 'internal scratch']
  #allocation2 [shape = 'bf16[18,16,128]{2,1,0:T(8,128)(2,1)}', space=vmem, size = 0x12000, scoped, tag = 'scratch operand']
  %s0 = inlined_call_operand.hbm [shape: bf16[2,16,16,128], index: 0, kind: input, shape index: {}]
  %s1 = inlined_call_operand.hbm [shape: bf16[128,128], index: 1, kind: input, shape index: {}]
  %s2 = inlined_call_operand.vmem [shape: f32[1,128], index: 2, kind: input, shape index: {}]
  %s3 = inlined_call_operand.hbm [shape: bf16[1152,128], index: 3, kind: input, shape index: {}]
  %s4 = inlined_call_operand.vmem [shape: f32[1,128], index: 4, kind: input, shape index: {}]
  %s5 = inlined_call_operand.hbm [shape: bf16[128,128], index: 5, kind: input, shape index: {}]
  %s6 = inlined_call_operand.vmem [shape: f32[1,128], index: 6, kind: input, shape index: {}]
  %s7 = inlined_call_operand.hbm [shape: bf16[2,16,16,128], index: 7, kind: output, shape index: {}]
  %s8 = sld [smem:[#allocation0]]
  $region81: #{tpu_custom_call.1} parent=0
    _
  %s10 = ssub.s32 1, %s8
  %s11 = scalar_select 0, %s10, %s8
  $region1: #{tpu_custom_call.1} parent=0
    #allocation3 [shape = 'u8[131072]{0}', space=vmem, size = 0x20000, scoped, tag = 'input window, operand 0']
    #allocation4 [shape = 's32[2]{0}', space=sflag, size = 0x8, scoped, tag = 'scoped memory for tpu_custom_call.1']
    #allocation5 [shape = 's32[2]{0}', space=sflag, size = 0x8, scoped, tag = 'scoped memory for tpu_custom_call.1']
    #allocation6 [shape = 'u8[32768]{0}', space=vmem, size = 0x8000, scoped, tag = 'input window, operand 1, single buffered']
    #allocation7 [shape = 's32[1]{0}', space=sflag, size = 0x4, scoped, tag = 'scoped memory for tpu_custom_call.1']
    #allocation8 [shape = 'u8[294912]{0}', space=vmem, size = 0x48000, scoped, tag = 'input window, operand 3, single buffered']
    #allocation9 [shape = 'u8[32768]{0}', space=vmem, size = 0x8000, scoped, tag = 'input window, operand 5, single buffered']
    #allocation10 [shape = 's32[1]{0}', space=sflag, size = 0x4, scoped, tag = 'scoped memory for tpu_custom_call.1']
    #allocation11 [shape = 'u8[131072]{0}', space=vmem, size = 0x20000, scoped, tag = 'output window, operand 0']
    %12 = vsyncpa [#allocation4], 0
    %s13 = scalar_lea.sflag [#allocation4], 1
    %14 = vsyncpa %s13, 0
    %15 = vsyncpa [#allocation7], 0
    %16 = vsyncpa [#allocation10], 0
    %17 = vsyncpa [#allocation5], 0
    %s18 = scalar_lea.sflag [#allocation5], 1
    %19 = vsyncpa %s18, 0
    loop: start=0, step=1, limit=4
    $region2: #{tpu_custom_call.1} parent=1 // loop_pre_header
      _
    $region3: #{tpu_custom_call.1} parent=1 // loop_header
      %s21 = sphi 0, %s25
      %p22 = scmp.ge.s32.totalorder %s21, 4
      %s28 = sphi 0, %s40
      %s29 = sphi 0, %s36
      %s30 = sphi 0, %s28
      %s31 = sphi 0, %s29
      %s32 = sphi 0, %s30
      %s33 = sphi 0, %s31
      %s43 = sphi 0, %s45
      %s46 = sphi 0, %s43
      %s47 = sphi 0, %s46
      %s63 = sphi 0, %s47
      %s67 = sphi 0, %s67
      %s69 = sphi 0, %s67
      %s70 = sphi 0, %s69
      %s84 = sphi 0, %s70
      %s88 = sphi 0, %s88
      %s90 = sphi 0, %s88
      %s91 = sphi 0, %s90
      %s105 = sphi 0, %s91
      %s109 = sphi 0, %s109
      %s111 = sphi 0, %s109
      %s112 = sphi 0, %s111
      %s126 = sphi 0, %s112
      %s130 = sphi 0, %s130
      %s132 = sphi 0, %s130
      %s133 = sphi 0, %s132
      %s147 = sphi 0, %s133
      %s151 = sphi 0, %s151
      %s153 = sphi 0, %s151
      %s154 = sphi 0, %s153
      %s168 = sphi 0, %s154
      %s172 = sphi 0, %s172
      %s174 = sphi 0, %s172
      %s175 = sphi 0, %s174
      %s189 = sphi 0, %s175
      %s197 = sphi 0, %s199
      %s200 = sphi 0, %s197
      %s201 = sphi 0, %s200
      %s217 = sphi 0, %s201
    $region4: #{tpu_custom_call.1} parent=1 // loop_header_branch
      %24 = sbr.rel (%p22) target = $region8
    $region5: #{tpu_custom_call.1} parent=1 // loop_body
      %s26 = ssub.s32 %s21, 1
      %s27 = ssub.s32 %s21, 2
      %s34 = sadd.s32 1, %s29
      %p35 = scmp.ge.s32.totalorder %s34, 1
      %s36 = scalar_select %p35, 0, %s34
      %s37 = sadd.s32 1, %s28
      %s38 = scalar_select %p35, %s37, %s28
      %p39 = scmp.ge.s32.totalorder %s38, 2
      %s40 = scalar_select %p39, 0, %s38
      %s41 = ssub.s32 %s28, %s40
      %p42 = scmp.eq.s32.totalorder %s41, 0
      %s44 = sadd.s32 %s43, 1
      %s45 = scalar_select %p42, %s43, %s44
      %p48 = pneg %p42
      %p49 = scmp.eq.s32.totalorder %s21, 1
      %p50 = por %p48, %p49
      %p51 = scmp.ne.s32.totalorder %s43, %s46
      %p52 = scmp.eq.s32.totalorder %s21, 0
      %p53 = por %p51, %p52
      %p54 = scmp.ne.s32.totalorder %s43, %s46
      %p55 = scmp.eq.s32.totalorder %s26, 1
      %p56 = por %p54, %p55
      %p57 = scmp.ne.s32.totalorder %s46, %s47
      %p58 = scmp.eq.s32.totalorder %s26, 0
      %p59 = por %p57, %p58
      %p60 = scmp.ne.s32.totalorder %s46, %s47
      %p61 = scmp.eq.s32.totalorder %s27, 1
      %p62 = por %p60, %p61
      %p64 = scmp.ne.s32.totalorder %s47, %s63
      %p65 = scmp.eq.s32.totalorder %s27, 0
      %p66 = por %p64, %p65
      %s68 = sadd.s32 %s67, 1
      %p71 = scmp.eq.s32.totalorder %s21, 1
      %p72 = scmp.ne.s32.totalorder %s67, %s69
      %p73 = scmp.eq.s32.totalorder %s21, 0
      %p74 = por %p72, %p73
      %p75 = scmp.ne.s32.totalorder %s67, %s69
      %p76 = scmp.eq.s32.totalorder %s26, 1
      %p77 = por %p75, %p76
      %p78 = scmp.ne.s32.totalorder %s69, %s70
      %p79 = scmp.eq.s32.totalorder %s26, 0
      %p80 = por %p78, %p79
      %p81 = scmp.ne.s32.totalorder %s69, %s70
      %p82 = scmp.eq.s32.totalorder %s27, 1
      %p83 = por %p81, %p82
      %p85 = scmp.ne.s32.totalorder %s70, %s84
      %p86 = scmp.eq.s32.totalorder %s27, 0
      %p87 = por %p85, %p86
      %s89 = sadd.s32 %s88, 1
      %p92 = scmp.eq.s32.totalorder %s21, 1
      %p93 = scmp.ne.s32.totalorder %s88, %s90
      %p94 = scmp.eq.s32.totalorder %s21, 0
      %p95 = por %p93, %p94
      %p96 = scmp.ne.s32.totalorder %s88, %s90
      %p97 = scmp.eq.s32.totalorder %s26, 1
      %p98 = por %p96, %p97
      %p99 = scmp.ne.s32.totalorder %s90, %s91
      %p100 = scmp.eq.s32.totalorder %s26, 0
      %p101 = por %p99, %p100
      %p102 = scmp.ne.s32.totalorder %s90, %s91
      %p103 = scmp.eq.s32.totalorder %s27, 1
      %p104 = por %p102, %p103
      %p106 = scmp.ne.s32.totalorder %s91, %s105
      %p107 = scmp.eq.s32.totalorder %s27, 0
      %p108 = por %p106, %p107
      %s110 = sadd.s32 %s109, 1
      %p113 = scmp.eq.s32.totalorder %s21, 1
      %p114 = scmp.ne.s32.totalorder %s109, %s111
      %p115 = scmp.eq.s32.totalorder %s21, 0
      %p116 = por %p114, %p115
      %p117 = scmp.ne.s32.totalorder %s109, %s111
      %p118 = scmp.eq.s32.totalorder %s26, 1
      %p119 = por %p117, %p118
      %p120 = scmp.ne.s32.totalorder %s111, %s112
      %p121 = scmp.eq.s32.totalorder %s26, 0
      %p122 = por %p120, %p121
      %p123 = scmp.ne.s32.totalorder %s111, %s112
      %p124 = scmp.eq.s32.totalorder %s27, 1
      %p125 = por %p123, %p124
      %p127 = scmp.ne.s32.totalorder %s112, %s126
      %p128 = scmp.eq.s32.totalorder %s27, 0
      %p129 = por %p127, %p128
      %s131 = sadd.s32 %s130, 1
      %p134 = scmp.eq.s32.totalorder %s21, 1
      %p135 = scmp.ne.s32.totalorder %s130, %s132
      %p136 = scmp.eq.s32.totalorder %s21, 0
      %p137 = por %p135, %p136
      %p138 = scmp.ne.s32.totalorder %s130, %s132
      %p139 = scmp.eq.s32.totalorder %s26, 1
      %p140 = por %p138, %p139
      %p141 = scmp.ne.s32.totalorder %s132, %s133
      %p142 = scmp.eq.s32.totalorder %s26, 0
      %p143 = por %p141, %p142
      %p144 = scmp.ne.s32.totalorder %s132, %s133
      %p145 = scmp.eq.s32.totalorder %s27, 1
      %p146 = por %p144, %p145
      %p148 = scmp.ne.s32.totalorder %s133, %s147
      %p149 = scmp.eq.s32.totalorder %s27, 0
      %p150 = por %p148, %p149
      %s152 = sadd.s32 %s151, 1
      %p155 = scmp.eq.s32.totalorder %s21, 1
      %p156 = scmp.ne.s32.totalorder %s151, %s153
      %p157 = scmp.eq.s32.totalorder %s21, 0
      %p158 = por %p156, %p157
      %p159 = scmp.ne.s32.totalorder %s151, %s153
      %p160 = scmp.eq.s32.totalorder %s26, 1
      %p161 = por %p159, %p160
      %p162 = scmp.ne.s32.totalorder %s153, %s154
      %p163 = scmp.eq.s32.totalorder %s26, 0
      %p164 = por %p162, %p163
      %p165 = scmp.ne.s32.totalorder %s153, %s154
      %p166 = scmp.eq.s32.totalorder %s27, 1
      %p167 = por %p165, %p166
      %p169 = scmp.ne.s32.totalorder %s154, %s168
      %p170 = scmp.eq.s32.totalorder %s27, 0
      %p171 = por %p169, %p170
      %s173 = sadd.s32 %s172, 1
      %p176 = scmp.eq.s32.totalorder %s21, 1
      %p177 = scmp.ne.s32.totalorder %s172, %s174
      %p178 = scmp.eq.s32.totalorder %s21, 0
      %p179 = por %p177, %p178
      %p180 = scmp.ne.s32.totalorder %s172, %s174
      %p181 = scmp.eq.s32.totalorder %s26, 1
      %p182 = por %p180, %p181
      %p183 = scmp.ne.s32.totalorder %s174, %s175
      %p184 = scmp.eq.s32.totalorder %s26, 0
      %p185 = por %p183, %p184
      %p186 = scmp.ne.s32.totalorder %s174, %s175
      %p187 = scmp.eq.s32.totalorder %s27, 1
      %p188 = por %p186, %p187
      %p190 = scmp.ne.s32.totalorder %s175, %s189
      %p191 = scmp.eq.s32.totalorder %s27, 0
      %p192 = por %p190, %p191
      %s193 = ssub.s32 %s28, %s40
      %s194 = ssub.s32 %s29, %s36
      %s195 = sor.u32 %s193, %s194
      %p196 = scmp.eq.s32.totalorder %s195, 0
      %s198 = sadd.s32 %s197, 1
      %s199 = scalar_select %p196, %s197, %s198
      %p202 = pneg %p196
      %p203 = scmp.eq.s32.totalorder %s21, 1
      %p204 = por %p202, %p203
      %p205 = scmp.ne.s32.totalorder %s197, %s200
      %p206 = scmp.eq.s32.totalorder %s21, 0
      %p207 = por %p205, %p206
      %p208 = scmp.ne.s32.totalorder %s197, %s200
      %p209 = scmp.eq.s32.totalorder %s26, 1
      %p210 = por %p208, %p209
      %p211 = scmp.ne.s32.totalorder %s200, %s201
      %p212 = scmp.eq.s32.totalorder %s26, 0
      %p213 = por %p211, %p212
      %p214 = scmp.ne.s32.totalorder %s200, %s201
      %p215 = scmp.eq.s32.totalorder %s27, 1
      %p216 = por %p214, %p215
      %p218 = scmp.ne.s32.totalorder %s201, %s217
      %p219 = scmp.eq.s32.totalorder %s27, 0
      %p220 = por %p218, %p219
      %p221 = scmp.le.s32.totalorder 1, %s21
      %p222 = scmp.lt.s32.totalorder %s21, 3
      %p223 = pnand %p221, %p222
      %p224 = pneg %p223
      // Predicated region
      $region9: #{tpu_custom_call.1} parent=5 // pred_check
        _
      $region10: #{tpu_custom_call.1} parent=5 // pred_check_branch
        %226 = sbr.rel (%p223) target = $region12
      $region11: #{tpu_custom_call.1} parent=5 // pred_region
        %s227 = ssub.s32 %s21, 1
        // Predicated region
        $region13: #{tpu_custom_call.1} parent=11 // pred_check
          %p228 = pneg %p80
        $region14: #{tpu_custom_call.1} parent=11 // pred_check_branch
          %230 = sbr.rel (%p228) target = $region16
        $region15: #{tpu_custom_call.1} parent=11 // pred_region
          %232 = vsyncadd [#allocation7], 0
          %s233 = sshll.u32 %s1, 4
          %s234 = int_to_ptr.hbm [resolvable:$true] %s233
          %s235 = sshll.u32 [#allocation6], 4
          %s236 = int_to_ptr.vmem [resolvable:$true] %s235
          %241 = dma.hbm_to_vmem [thread:$0]  %s234, 1024, %s236, [#allocation7], 64, 64, 4
        $region16: #{tpu_custom_call.1} parent=11 // pred_fallthru
          _
        // Predicated region
        $region17: #{tpu_custom_call.1} parent=11 // pred_check
          %p242 = pneg %p101
        $region18: #{tpu_custom_call.1} parent=11 // pred_check_branch
          %244 = sbr.rel (%p242) target = $region20
        $region19: #{tpu_custom_call.1} parent=11 // pred_region
          _
        $region20: #{tpu_custom_call.1} parent=11 // pred_fallthru
          _
        // Predicated region
        $region21: #{tpu_custom_call.1} parent=11 // pred_check
          %p245 = pneg %p122
        $region22: #{tpu_custom_call.1} parent=11 // pred_check_branch
          %247 = sbr.rel (%p245) target = $region24
        $region23: #{tpu_custom_call.1} parent=11 // pred_region
          %249 = vsyncadd [#allocation7], 0
          %s250 = sshll.u32 %s3, 4
          %s251 = int_to_ptr.hbm [resolvable:$true] %s250
          %s252 = sshll.u32 [#allocation8], 4
          %s253 = int_to_ptr.vmem [resolvable:$true] %s252
          %258 = dma.hbm_to_vmem [thread:$0]  %s251, 9216, %s253, [#allocation7], 64, 64, 4
        $region24: #{tpu_custom_call.1} parent=11 // pred_fallthru
          _
        // Predicated region
        $region25: #{tpu_custom_call.1} parent=11 // pred_check
          %p259 = pneg %p143
        $region26: #{tpu_custom_call.1} parent=11 // pred_check_branch
          %261 = sbr.rel (%p259) target = $region28
        $region27: #{tpu_custom_call.1} parent=11 // pred_region
          _
        $region28: #{tpu_custom_call.1} parent=11 // pred_fallthru
          _
        // Predicated region
        $region29: #{tpu_custom_call.1} parent=11 // pred_check
          %p262 = pneg %p164
        $region30: #{tpu_custom_call.1} parent=11 // pred_check_branch
          %264 = sbr.rel (%p262) target = $region32
        $region31: #{tpu_custom_call.1} parent=11 // pred_region
          %266 = vsyncadd [#allocation10], 0
          %s267 = sshll.u32 %s5, 4
          %s268 = int_to_ptr.hbm [resolvable:$true] %s267
          %s269 = sshll.u32 [#allocation9], 4
          %s270 = int_to_ptr.vmem [resolvable:$true] %s269
          %275 = dma.hbm_to_vmem [thread:$0]  %s268, 1024, %s270, [#allocation10], 64, 64, 4
        $region32: #{tpu_custom_call.1} parent=11 // pred_fallthru
          _
        // Predicated region
        $region33: #{tpu_custom_call.1} parent=11 // pred_check
          %p276 = pneg %p185
        $region34: #{tpu_custom_call.1} parent=11 // pred_check_branch
          %278 = sbr.rel (%p276) target = $region36
        $region35: #{tpu_custom_call.1} parent=11 // pred_region
          _
        $region36: #{tpu_custom_call.1} parent=11 // pred_fallthru
          _
      $region12: #{tpu_custom_call.1} parent=5 // pred_fallthru
        _
      %p279 = scmp.lt.s32.totalorder %s21, 2
      // Predicated region
      $region37: #{tpu_custom_call.1} parent=5 // pred_check
        %p280 = pneg %p279
      $region38: #{tpu_custom_call.1} parent=5 // pred_check_branch
        %282 = sbr.rel (%p280) target = $region40
      $region39: #{tpu_custom_call.1} parent=5 // pred_region
        // Predicated region
        $region41: #{tpu_custom_call.1} parent=39 // pred_check
          %p283 = pneg %p53
        $region42: #{tpu_custom_call.1} parent=39 // pred_check_branch
          %285 = sbr.rel (%p283) target = $region44
        $region43: #{tpu_custom_call.1} parent=39 // pred_region
          %s286 = sand.u32 %s43, 1
          %s287 = scalar_lea.sflag [#allocation4], %s286
          %s288 = sand.u32 %s43, 1
          %s289 = smul.addr %s288, 128
          %s290 = scalar_lea.vmem [#allocation3], %s289
          %292 = vsyncadd %s287, 0
          %s293 = smul.addr %s28, 32
          %s294 = smul.addr %s293, 4
          %s295 = scalar_lea.hbm %s0, %s294
          %s296 = sshll.u32 %s295, 4
          %s297 = int_to_ptr.hbm [resolvable:$true] %s296
          %s298 = sshll.u32 %s290, 4
          %s299 = int_to_ptr.vmem [resolvable:$true] %s298
          %304 = dma.hbm_to_vmem [thread:$0]  %s297, 2048, %s299, %s287, 64, 64, 4
        $region44: #{tpu_custom_call.1} parent=39 // pred_fallthru
          _
      $region40: #{tpu_custom_call.1} parent=5 // pred_fallthru
        _
      %p305 = scmp.le.s32.totalorder 1, %s21
      %p306 = scmp.lt.s32.totalorder %s21, 3
      %p307 = pnand %p305, %p306
      %p308 = pneg %p307
      // Predicated region
      $region45: #{tpu_custom_call.1} parent=5 // pred_check
        _
      $region46: #{tpu_custom_call.1} parent=5 // pred_check_branch
        %310 = sbr.rel (%p307) target = $region48
      $region47: #{tpu_custom_call.1} parent=5 // pred_region
        %s311 = ssub.s32 %s21, 1
        %s312 = sand.u32 %s46, 1
        %s313 = scalar_lea.sflag [#allocation4], %s312
        %s314 = sand.u32 %s46, 1
        %s315 = smul.addr %s314, 128
        %s316 = scalar_lea.vmem [#allocation3], %s315
        // Predicated region
        $region49: #{tpu_custom_call.1} parent=47 // pred_check
          %p317 = pneg %p59
        $region50: #{tpu_custom_call.1} parent=47 // pred_check_branch
          %319 = sbr.rel (%p317) target = $region52
        $region51: #{tpu_custom_call.1} parent=47 // pred_region
          %321 = dma.done %s313, 2048
        $region52: #{tpu_custom_call.1} parent=47 // pred_fallthru
          _
        // Predicated region
        $region53: #{tpu_custom_call.1} parent=47 // pred_check
          %p322 = pneg %p80
        $region54: #{tpu_custom_call.1} parent=47 // pred_check_branch
          %324 = sbr.rel (%p322) target = $region56
        $region55: #{tpu_custom_call.1} parent=47 // pred_region
          %326 = dma.done [#allocation7], 1024
        $region56: #{tpu_custom_call.1} parent=47 // pred_fallthru
          _
        // Predicated region
        $region57: #{tpu_custom_call.1} parent=47 // pred_check
          %p327 = pneg %p122
        $region58: #{tpu_custom_call.1} parent=47 // pred_check_branch
          %329 = sbr.rel (%p327) target = $region60
        $region59: #{tpu_custom_call.1} parent=47 // pred_region
          %331 = dma.done [#allocation7], 9216
        $region60: #{tpu_custom_call.1} parent=47 // pred_fallthru
          _
        // Predicated region
        $region61: #{tpu_custom_call.1} parent=47 // pred_check
          %p332 = pneg %p164
        $region62: #{tpu_custom_call.1} parent=47 // pred_check_branch
          %334 = sbr.rel (%p332) target = $region64
        $region63: #{tpu_custom_call.1} parent=47 // pred_region
          %336 = dma.done [#allocation10], 1024
        $region64: #{tpu_custom_call.1} parent=47 // pred_fallthru
          _
        %s337 = sand.u32 %s46, 1
        %s338 = scalar_lea.sflag [#allocation4], %s337
        %s339 = sand.u32 %s46, 1
        %s340 = smul.addr %s339, 128
        %s341 = scalar_lea.vmem [#allocation3], %s340
        %p342 = pneg %p59
        %p343 = pneg %p56
        %p344 = pneg %p80
        %p345 = pneg %p77
        %p346 = pneg %p101
        %p347 = pneg %p98
        %p348 = pneg %p122
        %p349 = pneg %p119
        %p350 = pneg %p143
        %p351 = pneg %p140
        %p352 = pneg %p164
        %p353 = pneg %p161
        %p354 = pneg %p185
        %p355 = pneg %p182
        %p356 = pneg %p213
        %p357 = pneg %p210
        %s358 = sand.u32 %s200, 1
        %s359 = scalar_lea.sflag [#allocation5], %s358
        %s360 = sand.u32 %s200, 1
        %s361 = smul.addr %s360, 128
        %s362 = scalar_lea.vmem [#allocation11], %s361
        %s363 = smul.u32 16, %s31
        %s365 = smul.u32 %s31, 16
        %s366 = ssub.s32 %s365, 1
        %p367 = scmp.gt.s32.totalorder %s366, 0
        %s368 = scalar_select %p367, %s366, 0
        %s369 = sadd.s32 %s365, 16
        %p370 = scmp.lt.s32.totalorder %s369, 15
        %s371 = scalar_select %p370, %s369, 15
        %s372 = smul.u32 %s365, 2
        %s373 = smul.addr %s372, 4
        %s374 = scalar_lea.vmem %s316, %s373 [#allocation3]
        %v375 = vld [vmem:[%s374] sm:$0xf]
        %v376 = vld [vmem:[%s374 + $0x4] sm:$0xf]
        %v377 = vld [vmem:[%s374 + $0x8] sm:$0xf]
        %v378 = vld [vmem:[%s374 + $0xc] sm:$0xf]
        %v379 = vld [vmem:[%s374 + $0x10] sm:$0xf]
        %v380 = vld [vmem:[%s374 + $0x14] sm:$0xf]
        %v381 = vld [vmem:[%s374 + $0x18] sm:$0xf]
        %v382 = vld [vmem:[%s374 + $0x1c] sm:$0xf]
        %v383 = vld [vmem:[%s374 + $0x20] sm:$0xf]
        %v384 = vld [vmem:[%s374 + $0x24] sm:$0xf]
        %v385 = vld [vmem:[%s374 + $0x28] sm:$0xf]
        %v386 = vld [vmem:[%s374 + $0x2c] sm:$0xf]
        %v387 = vld [vmem:[%s374 + $0x30] sm:$0xf]
        %v388 = vld [vmem:[%s374 + $0x34] sm:$0xf]
        %v389 = vld [vmem:[%s374 + $0x38] sm:$0xf]
        %v390 = vld [vmem:[%s374 + $0x3c] sm:$0xf]
        %v391 = vld [vmem:[%s374 + $0x40] sm:$0xf]
        %v392 = vld [vmem:[%s374 + $0x44] sm:$0xf]
        %v393 = vld [vmem:[%s374 + $0x48] sm:$0xf]
        %v394 = vld [vmem:[%s374 + $0x4c] sm:$0xf]
        %v395 = vld [vmem:[%s374 + $0x50] sm:$0xf]
        %v396 = vld [vmem:[%s374 + $0x54] sm:$0xf]
        %v397 = vld [vmem:[%s374 + $0x58] sm:$0xf]
        %v398 = vld [vmem:[%s374 + $0x5c] sm:$0xf]
        %v399 = vld [vmem:[%s374 + $0x60] sm:$0xf]
        %v400 = vld [vmem:[%s374 + $0x64] sm:$0xf]
        %v401 = vld [vmem:[%s374 + $0x68] sm:$0xf]
        %v402 = vld [vmem:[%s374 + $0x6c] sm:$0xf]
        %v403 = vld [vmem:[%s374 + $0x70] sm:$0xf]
        %v404 = vld [vmem:[%s374 + $0x74] sm:$0xf]
        %v405 = vld [vmem:[%s374 + $0x78] sm:$0xf]
        %v406 = vld [vmem:[%s374 + $0x7c] sm:$0xf]
        %s407 = smul.u32 %s368, 2
        %s408 = smul.addr %s407, 4
        %s409 = scalar_lea.vmem %s316, %s408 [#allocation3]
        %v410 = vld [vmem:[%s409] sm:$0xf]
        %v411 = vld [vmem:[%s409 + $0x4] sm:$0xf]
        %s412 = smul.u32 %s371, 2
        %s413 = smul.addr %s412, 4
        %s414 = scalar_lea.vmem %s316, %s413 [#allocation3]
        %v415 = vld [vmem:[%s414] sm:$0xf]
        %v416 = vld [vmem:[%s414 + $0x4] sm:$0xf]
        %v417 = vld [vmem:[#allocation6] sm:$0xf]
        %v418 = vld [vmem:[#allocation6 + $0x4] sm:$0xf]
        %v419 = vld [vmem:[#allocation6 + $0x8] sm:$0xf]
        %v420 = vld [vmem:[#allocation6 + $0xc] sm:$0xf]
        %v421 = vld [vmem:[#allocation6 + $0x10] sm:$0xf]
        %v422 = vld [vmem:[#allocation6 + $0x14] sm:$0xf]
        %v423 = vld [vmem:[#allocation6 + $0x18] sm:$0xf]
        %v424 = vld [vmem:[#allocation6 + $0x1c] sm:$0xf]
        %v425 = vld [vmem:[#allocation6 + $0x20] sm:$0xf]
        %v426 = vld [vmem:[#allocation6 + $0x24] sm:$0xf]
        %v427 = vld [vmem:[#allocation6 + $0x28] sm:$0xf]
        %v428 = vld [vmem:[#allocation6 + $0x2c] sm:$0xf]
        %v429 = vld [vmem:[#allocation6 + $0x30] sm:$0xf]
        %v430 = vld [vmem:[#allocation6 + $0x34] sm:$0xf]
        %v431 = vld [vmem:[#allocation6 + $0x38] sm:$0xf]
        %v432 = vld [vmem:[#allocation6 + $0x3c] sm:$0xf]
        %v433 = vld [vmem:[%s2] sm:$0x1]
        %v435 = vperm.slane %v433, 0
        %v473 = vunpack.c.l.b16 %v410
        %v474 = vunpack.c.l.b16 %v411
        %v475 = vunpack.c.l.b16 %v375
        %v476 = vunpack.c.l.b16 %v376
        %v477 = vunpack.c.l.b16 %v377
        %v478 = vunpack.c.l.b16 %v378
        %v479 = vunpack.c.l.b16 %v379
        %v480 = vunpack.c.l.b16 %v380
        %v481 = vunpack.c.l.b16 %v381
        %v482 = vunpack.c.l.b16 %v382
        %v483 = vunpack.c.l.b16 %v383
        %v484 = vunpack.c.l.b16 %v384
        %v485 = vunpack.c.l.b16 %v385
        %v486 = vunpack.c.l.b16 %v386
        %v487 = vunpack.c.l.b16 %v387
        %v488 = vunpack.c.l.b16 %v388
        %v489 = vunpack.c.l.b16 %v389
        %v490 = vunpack.c.l.b16 %v390
        %v491 = vunpack.c.l.b16 %v391
        %v492 = vunpack.c.l.b16 %v392
        %v493 = vunpack.c.l.b16 %v393
        %v494 = vunpack.c.l.b16 %v394
        %v495 = vunpack.c.l.b16 %v395
        %v496 = vunpack.c.l.b16 %v396
        %v497 = vunpack.c.l.b16 %v397
        %v498 = vunpack.c.l.b16 %v398
        %v499 = vunpack.c.l.b16 %v399
        %v500 = vunpack.c.l.b16 %v400
        %v501 = vunpack.c.l.b16 %v401
        %v502 = vunpack.c.l.b16 %v402
        %v503 = vunpack.c.l.b16 %v403
        %v504 = vunpack.c.l.b16 %v404
        %v505 = vunpack.c.l.b16 %v405
        %v506 = vunpack.c.l.b16 %v406
        %v507 = vunpack.c.l.b16 %v415
        %v508 = vunpack.c.l.b16 %v416
        %v509 = vpack.c.b16 %v474, %v473
        %v510 = vpack.c.b16 %v476, %v475
        %v511 = vpack.c.b16 %v478, %v477
        %v512 = vpack.c.b16 %v480, %v479
        %v513 = vpack.c.b16 %v482, %v481
        %v514 = vpack.c.b16 %v484, %v483
        %v515 = vpack.c.b16 %v486, %v485
        %v516 = vpack.c.b16 %v488, %v487
        %v517 = vpack.c.b16 %v490, %v489
        %v518 = vpack.c.b16 %v492, %v491
        %v519 = vpack.c.b16 %v494, %v493
        %v520 = vpack.c.b16 %v496, %v495
        %v521 = vpack.c.b16 %v498, %v497
        %v522 = vpack.c.b16 %v500, %v499
        %v523 = vpack.c.b16 %v502, %v501
        %v524 = vpack.c.b16 %v504, %v503
        %v525 = vpack.c.b16 %v506, %v505
        %v526 = vpack.c.b16 %v508, %v507
        %v561 = vunpack.c.l.b16 %v417
        %v562 = vunpack.c.l.b16 %v418
        %v563 = vunpack.c.l.b16 %v419
        %v564 = vunpack.c.l.b16 %v420
        %v565 = vunpack.c.l.b16 %v421
        %v566 = vunpack.c.l.b16 %v422
        %v567 = vunpack.c.l.b16 %v423
        %v568 = vunpack.c.l.b16 %v424
        %v569 = vunpack.c.l.b16 %v425
        %v570 = vunpack.c.l.b16 %v426
        %v571 = vunpack.c.l.b16 %v427
        %v572 = vunpack.c.l.b16 %v428
        %v573 = vunpack.c.l.b16 %v429
        %v574 = vunpack.c.l.b16 %v430
        %v575 = vunpack.c.l.b16 %v431
        %v576 = vunpack.c.l.b16 %v432
        %v577 = vpack.c.b16 %v562, %v561
        %v578 = vpack.c.b16 %v564, %v563
        %v579 = vpack.c.b16 %v566, %v565
        %v580 = vpack.c.b16 %v568, %v567
        %v581 = vpack.c.b16 %v570, %v569
        %v582 = vpack.c.b16 %v572, %v571
        %v583 = vpack.c.b16 %v574, %v573
        %v584 = vpack.c.b16 %v576, %v575
        %593 = vmatpush.bf16.msra.mxu0 %v584
        %594 = vmatpush.bf16.msra.mxu0 %v583
        %595 = vmatpush.bf16.msra.mxu0 %v582
        %596 = vmatpush.bf16.msra.mxu0 %v581
        %597 = vmatpush.bf16.msra.mxu0 %v580
        %598 = vmatpush.bf16.msra.mxu0 %v579
        %599 = vmatpush.bf16.msra.mxu0 %v578
        %600 = vmatpush.bf16.msra.mxu0 %v577
        %601 = vmatmul.bf16.gmra.mxu0 %v509
        %v602 = vpop.f32.mrf.mxu0
        %v603 = vadd.f32 %v435, %v602
        %v604 = vpop.f32.mrf.mxu0
        %v605 = vadd.f32 %v435, %v604
        %606 = vmatmul.bf16.gmra.mxu0 %v510
        %v607 = vpop.f32.mrf.mxu0
        %v608 = vadd.f32 %v435, %v607
        %v609 = vpop.f32.mrf.mxu0
        %v610 = vadd.f32 %v435, %v609
        %611 = vmatmul.bf16.gmra.mxu0 %v511
        %v612 = vpop.f32.mrf.mxu0
        %v613 = vadd.f32 %v435, %v612
        %v614 = vpop.f32.mrf.mxu0
        %v615 = vadd.f32 %v435, %v614
        %616 = vmatmul.bf16.gmra.mxu0 %v512
        %v617 = vpop.f32.mrf.mxu0
        %v618 = vadd.f32 %v435, %v617
        %v619 = vpop.f32.mrf.mxu0
        %v620 = vadd.f32 %v435, %v619
        %621 = vmatmul.bf16.gmra.mxu0 %v513
        %v622 = vpop.f32.mrf.mxu0
        %v623 = vadd.f32 %v435, %v622
        %v624 = vpop.f32.mrf.mxu0
        %v625 = vadd.f32 %v435, %v624
        %626 = vmatmul.bf16.gmra.mxu0 %v514
        %v627 = vpop.f32.mrf.mxu0
        %v628 = vadd.f32 %v435, %v627
        %v629 = vpop.f32.mrf.mxu0
        %v630 = vadd.f32 %v435, %v629
        %631 = vmatmul.bf16.gmra.mxu0 %v515
        %v632 = vpop.f32.mrf.mxu0
        %v633 = vadd.f32 %v435, %v632
        %v634 = vpop.f32.mrf.mxu0
        %v635 = vadd.f32 %v435, %v634
        %636 = vmatmul.bf16.gmra.mxu0 %v516
        %v637 = vpop.f32.mrf.mxu0
        %v638 = vadd.f32 %v435, %v637
        %v639 = vpop.f32.mrf.mxu0
        %v640 = vadd.f32 %v435, %v639
        %641 = vmatmul.bf16.gmra.mxu0 %v517
        %v642 = vpop.f32.mrf.mxu0
        %v643 = vadd.f32 %v435, %v642
        %v644 = vpop.f32.mrf.mxu0
        %v645 = vadd.f32 %v435, %v644
        %646 = vmatmul.bf16.gmra.mxu0 %v518
        %v647 = vpop.f32.mrf.mxu0
        %v648 = vadd.f32 %v435, %v647
        %v649 = vpop.f32.mrf.mxu0
        %v650 = vadd.f32 %v435, %v649
        %651 = vmatmul.bf16.gmra.mxu0 %v519
        %v652 = vpop.f32.mrf.mxu0
        %v653 = vadd.f32 %v435, %v652
        %v654 = vpop.f32.mrf.mxu0
        %v655 = vadd.f32 %v435, %v654
        %656 = vmatmul.bf16.gmra.mxu0 %v520
        %v657 = vpop.f32.mrf.mxu0
        %v658 = vadd.f32 %v435, %v657
        %v659 = vpop.f32.mrf.mxu0
        %v660 = vadd.f32 %v435, %v659
        %661 = vmatmul.bf16.gmra.mxu0 %v521
        %v662 = vpop.f32.mrf.mxu0
        %v663 = vadd.f32 %v435, %v662
        %v664 = vpop.f32.mrf.mxu0
        %v665 = vadd.f32 %v435, %v664
        %666 = vmatmul.bf16.gmra.mxu0 %v522
        %v667 = vpop.f32.mrf.mxu0
        %v668 = vadd.f32 %v435, %v667
        %v669 = vpop.f32.mrf.mxu0
        %v670 = vadd.f32 %v435, %v669
        %671 = vmatmul.bf16.gmra.mxu0 %v523
        %v672 = vpop.f32.mrf.mxu0
        %v673 = vadd.f32 %v435, %v672
        %v674 = vpop.f32.mrf.mxu0
        %v675 = vadd.f32 %v435, %v674
        %676 = vmatmul.bf16.gmra.mxu0 %v524
        %v677 = vpop.f32.mrf.mxu0
        %v678 = vadd.f32 %v435, %v677
        %v679 = vpop.f32.mrf.mxu0
        %v680 = vadd.f32 %v435, %v679
        %681 = vmatmul.bf16.gmra.mxu0 %v525
        %v682 = vpop.f32.mrf.mxu0
        %v683 = vadd.f32 %v435, %v682
        %v684 = vpop.f32.mrf.mxu0
        %v685 = vadd.f32 %v435, %v684
        %686 = vmatmul.bf16.gmra.mxu0 %v526
        %v687 = vpop.f32.mrf.mxu0
        %v688 = vadd.f32 %v435, %v687
        %v689 = vpop.f32.mrf.mxu0
        %v690 = vadd.f32 %v435, %v689
        %691 = vdwg.mxu0
        %v692 = vmax.f32 %v603, 0.0
        %v693 = vmax.f32 %v605, 0.0
        %v694 = vmax.f32 %v608, 0.0
        %v695 = vmax.f32 %v610, 0.0
        %v696 = vmax.f32 %v613, 0.0
        %v697 = vmax.f32 %v615, 0.0
        %v698 = vmax.f32 %v618, 0.0
        %v699 = vmax.f32 %v620, 0.0
        %v700 = vmax.f32 %v623, 0.0
        %v701 = vmax.f32 %v625, 0.0
        %v702 = vmax.f32 %v628, 0.0
        %v703 = vmax.f32 %v630, 0.0
        %v704 = vmax.f32 %v633, 0.0
        %v705 = vmax.f32 %v635, 0.0
        %v706 = vmax.f32 %v638, 0.0
        %v707 = vmax.f32 %v640, 0.0
        %v708 = vmax.f32 %v643, 0.0
        %v709 = vmax.f32 %v645, 0.0
        %v710 = vmax.f32 %v648, 0.0
        %v711 = vmax.f32 %v650, 0.0
        %v712 = vmax.f32 %v653, 0.0
        %v713 = vmax.f32 %v655, 0.0
        %v714 = vmax.f32 %v658, 0.0
        %v715 = vmax.f32 %v660, 0.0
        %v716 = vmax.f32 %v663, 0.0
        %v717 = vmax.f32 %v665, 0.0
        %v718 = vmax.f32 %v668, 0.0
        %v719 = vmax.f32 %v670, 0.0
        %v720 = vmax.f32 %v673, 0.0
        %v721 = vmax.f32 %v675, 0.0
        %v722 = vmax.f32 %v678, 0.0
        %v723 = vmax.f32 %v680, 0.0
        %v724 = vmax.f32 %v683, 0.0
        %v725 = vmax.f32 %v685, 0.0
        %v726 = vmax.f32 %v688, 0.0
        %v727 = vmax.f32 %v690, 0.0
        %v728 = vpack.c.bf16 %v692, %v692
        %v729 = vpack.c.bf16 %v693, %v693
        %v730 = vpack.c.bf16 %v694, %v694
        %v731 = vpack.c.bf16 %v695, %v695
        %v732 = vpack.c.bf16 %v696, %v696
        %v733 = vpack.c.bf16 %v697, %v697
        %v734 = vpack.c.bf16 %v698, %v698
        %v735 = vpack.c.bf16 %v699, %v699
        %v736 = vpack.c.bf16 %v700, %v700
        %v737 = vpack.c.bf16 %v701, %v701
        %v738 = vpack.c.bf16 %v702, %v702
        %v739 = vpack.c.bf16 %v703, %v703
        %v740 = vpack.c.bf16 %v704, %v704
        %v741 = vpack.c.bf16 %v705, %v705
        %v742 = vpack.c.bf16 %v706, %v706
        %v743 = vpack.c.bf16 %v707, %v707
        %v744 = vpack.c.bf16 %v708, %v708
        %v745 = vpack.c.bf16 %v709, %v709
        %v746 = vpack.c.bf16 %v710, %v710
        %v747 = vpack.c.bf16 %v711, %v711
        %v748 = vpack.c.bf16 %v712, %v712
        %v749 = vpack.c.bf16 %v713, %v713
        %v750 = vpack.c.bf16 %v714, %v714
        %v751 = vpack.c.bf16 %v715, %v715
        %v752 = vpack.c.bf16 %v716, %v716
        %v753 = vpack.c.bf16 %v717, %v717
        %v754 = vpack.c.bf16 %v718, %v718
        %v755 = vpack.c.bf16 %v719, %v719
        %v756 = vpack.c.bf16 %v720, %v720
        %v757 = vpack.c.bf16 %v721, %v721
        %v758 = vpack.c.bf16 %v722, %v722
        %v759 = vpack.c.bf16 %v723, %v723
        %v760 = vpack.c.bf16 %v724, %v724
        %v761 = vpack.c.bf16 %v725, %v725
        %v762 = vpack.c.bf16 %v726, %v726
        %v763 = vpack.c.bf16 %v727, %v727
        %764 = vst [vmem:[#allocation2] sm:$0xf] %v728
        %765 = vst [vmem:[#allocation2 + $0x4] sm:$0xf] %v729
        %766 = vst [vmem:[#allocation2 + $0x8] sm:$0xf] %v730
        %767 = vst [vmem:[#allocation2 + $0xc] sm:$0xf] %v731
        %768 = vst [vmem:[#allocation2 + $0x10] sm:$0xf] %v732
        %769 = vst [vmem:[#allocation2 + $0x14] sm:$0xf] %v733
        %770 = vst [vmem:[#allocation2 + $0x18] sm:$0xf] %v734
        %771 = vst [vmem:[#allocation2 + $0x1c] sm:$0xf] %v735
        %772 = vst [vmem:[#allocation2 + $0x20] sm:$0xf] %v736
        %773 = vst [vmem:[#allocation2 + $0x24] sm:$0xf] %v737
        %774 = vst [vmem:[#allocation2 + $0x28] sm:$0xf] %v738
        %775 = vst [vmem:[#allocation2 + $0x2c] sm:$0xf] %v739
        %776 = vst [vmem:[#allocation2 + $0x30] sm:$0xf] %v740
        %777 = vst [vmem:[#allocation2 + $0x34] sm:$0xf] %v741
        %778 = vst [vmem:[#allocation2 + $0x38] sm:$0xf] %v742
        %779 = vst [vmem:[#allocation2 + $0x3c] sm:$0xf] %v743
        %780 = vst [vmem:[#allocation2 + $0x40] sm:$0xf] %v744
        %781 = vst [vmem:[#allocation2 + $0x44] sm:$0xf] %v745
        %782 = vst [vmem:[#allocation2 + $0x48] sm:$0xf] %v746
        %783 = vst [vmem:[#allocation2 + $0x4c] sm:$0xf] %v747
        %784 = vst [vmem:[#allocation2 + $0x50] sm:$0xf] %v748
        %785 = vst [vmem:[#allocation2 + $0x54] sm:$0xf] %v749
        %786 = vst [vmem:[#allocation2 + $0x58] sm:$0xf] %v750
        %787 = vst [vmem:[#allocation2 + $0x5c] sm:$0xf] %v751
        %788 = vst [vmem:[#allocation2 + $0x60] sm:$0xf] %v752
        %789 = vst [vmem:[#allocation2 + $0x64] sm:$0xf] %v753
        %790 = vst [vmem:[#allocation2 + $0x68] sm:$0xf] %v754
        %791 = vst [vmem:[#allocation2 + $0x6c] sm:$0xf] %v755
        %792 = vst [vmem:[#allocation2 + $0x70] sm:$0xf] %v756
        %793 = vst [vmem:[#allocation2 + $0x74] sm:$0xf] %v757
        %794 = vst [vmem:[#allocation2 + $0x78] sm:$0xf] %v758
        %795 = vst [vmem:[#allocation2 + $0x7c] sm:$0xf] %v759
        %796 = vst [vmem:[#allocation2 + $0x80] sm:$0xf] %v760
        %797 = vst [vmem:[#allocation2 + $0x84] sm:$0xf] %v761
        %798 = vst [vmem:[#allocation2 + $0x88] sm:$0xf] %v762
        %799 = vst [vmem:[#allocation2 + $0x8c] sm:$0xf] %v763
        %p800 = scmp.eq.s32.totalorder %s31, 0
        // Predicated region
        $region65: #{tpu_custom_call.1} parent=47 // pred_check
          %p801 = pneg %p800
        $region66: #{tpu_custom_call.1} parent=47 // pred_check_branch
          %803 = sbr.rel (%p801) target = $region68
        $region67: #{tpu_custom_call.1} parent=47 // pred_region
          %804 = vst [vmem:[#allocation2] sm:$0xf] 0
          %805 = vst [vmem:[#allocation2 + $0x4] sm:$0xf] 0
          %s806 = scalar_lea.vmem [#allocation2], 136
          %807 = vst [vmem:[%s806] sm:$0xf] 0
          %808 = vst [vmem:[%s806 + $0x4] sm:$0xf] 0
        $region68: #{tpu_custom_call.1} parent=47 // pred_fallthru
          _
        %v809 = vld [vmem:[#allocation2] sm:$0xf]
        %v810 = vld [vmem:[#allocation2 + $0x4] sm:$0xf]
        %v811 = vld [vmem:[#allocation2 + $0x8] sm:$0xf]
        %v812 = vld [vmem:[#allocation2 + $0xc] sm:$0xf]
        %v813 = vld [vmem:[#allocation2 + $0x10] sm:$0xf]
        %v814 = vld [vmem:[#allocation2 + $0x14] sm:$0xf]
        %v815 = vld [vmem:[#allocation2 + $0x18] sm:$0xf]
        %v816 = vld [vmem:[#allocation2 + $0x1c] sm:$0xf]
        %v817 = vld [vmem:[#allocation2 + $0x20] sm:$0xf]
        %v818 = vld [vmem:[#allocation2 + $0x24] sm:$0xf]
        %v819 = vld [vmem:[#allocation2 + $0x28] sm:$0xf]
        %v820 = vld [vmem:[#allocation2 + $0x2c] sm:$0xf]
        %v821 = vld [vmem:[#allocation2 + $0x30] sm:$0xf]
        %v822 = vld [vmem:[#allocation2 + $0x34] sm:$0xf]
        %v823 = vld [vmem:[#allocation2 + $0x38] sm:$0xf]
        %v824 = vld [vmem:[#allocation2 + $0x3c] sm:$0xf]
        %v825 = vld [vmem:[#allocation2 + $0x40] sm:$0xf]
        %v826 = vld [vmem:[#allocation2 + $0x44] sm:$0xf]
        %v827 = vld [vmem:[#allocation2 + $0x48] sm:$0xf]
        %v828 = vld [vmem:[#allocation2 + $0x4c] sm:$0xf]
        %v829 = vld [vmem:[#allocation2 + $0x50] sm:$0xf]
        %v830 = vld [vmem:[#allocation2 + $0x54] sm:$0xf]
        %v831 = vld [vmem:[#allocation2 + $0x58] sm:$0xf]
        %v832 = vld [vmem:[#allocation2 + $0x5c] sm:$0xf]
        %v833 = vld [vmem:[#allocation2 + $0x60] sm:$0xf]
        %v834 = vld [vmem:[#allocation2 + $0x64] sm:$0xf]
        %v835 = vld [vmem:[#allocation2 + $0x68] sm:$0xf]
        %v836 = vld [vmem:[#allocation2 + $0x6c] sm:$0xf]
        %v837 = vld [vmem:[#allocation2 + $0x70] sm:$0xf]
        %v838 = vld [vmem:[#allocation2 + $0x74] sm:$0xf]
        %v839 = vld [vmem:[#allocation2 + $0x78] sm:$0xf]
        %v840 = vld [vmem:[#allocation2 + $0x7c] sm:$0xf]
        %v841 = vld [vmem:[#allocation2 + $0x80] sm:$0xf]
        %v842 = vld [vmem:[#allocation2 + $0x84] sm:$0xf]
        %v843 = vld [vmem:[#allocation2 + $0x88] sm:$0xf]
        %v844 = vld [vmem:[#allocation2 + $0x8c] sm:$0xf]
        %v881 = vunpack.c.l.b16 %v809
        %v882 = vunpack.c.l.b16 %v810
        %v883 = vunpack.c.l.b16 %v811
        %v884 = vunpack.c.l.b16 %v812
        %v885 = vunpack.c.l.b16 %v813
        %v886 = vunpack.c.l.b16 %v814
        %v887 = vunpack.c.l.b16 %v815
        %v888 = vunpack.c.l.b16 %v816
        %v889 = vunpack.c.l.b16 %v817
        %v890 = vunpack.c.l.b16 %v818
        %v891 = vunpack.c.l.b16 %v819
        %v892 = vunpack.c.l.b16 %v820
        %v893 = vunpack.c.l.b16 %v821
        %v894 = vunpack.c.l.b16 %v822
        %v895 = vunpack.c.l.b16 %v823
        %v896 = vunpack.c.l.b16 %v824
        %v897 = vunpack.c.l.b16 %v825
        %v898 = vunpack.c.l.b16 %v826
        %v899 = vunpack.c.l.b16 %v827
        %v900 = vunpack.c.l.b16 %v828
        %v901 = vunpack.c.l.b16 %v829
        %v902 = vunpack.c.l.b16 %v830
        %v903 = vunpack.c.l.b16 %v831
        %v904 = vunpack.c.l.b16 %v832
        %v905 = vunpack.c.l.b16 %v833
        %v906 = vunpack.c.l.b16 %v834
        %v907 = vunpack.c.l.b16 %v835
        %v908 = vunpack.c.l.b16 %v836
        %v909 = vunpack.c.l.b16 %v837
        %v910 = vunpack.c.l.b16 %v838
        %v911 = vunpack.c.l.b16 %v839
        %v912 = vunpack.c.l.b16 %v840
        %v913 = vunpack.c.l.b16 %v841
        %v914 = vunpack.c.l.b16 %v842
        %v915 = vunpack.c.l.b16 %v843
        %v916 = vunpack.c.l.b16 %v844
        %v917 = vpack.c.b16 %v882, %v881
        %v918 = vpack.c.b16 %v884, %v883
        %v919 = vpack.c.b16 %v886, %v885
        %v920 = vpack.c.b16 %v888, %v887
        %v921 = vpack.c.b16 %v890, %v889
        %v922 = vpack.c.b16 %v892, %v891
        %v923 = vpack.c.b16 %v894, %v893
        %v924 = vpack.c.b16 %v896, %v895
        %v925 = vpack.c.b16 %v898, %v897
        %v926 = vpack.c.b16 %v900, %v899
        %v927 = vpack.c.b16 %v902, %v901
        %v928 = vpack.c.b16 %v904, %v903
        %v929 = vpack.c.b16 %v906, %v905
        %v930 = vpack.c.b16 %v908, %v907
        %v931 = vpack.c.b16 %v910, %v909
        %v932 = vpack.c.b16 %v912, %v911
        %v933 = vpack.c.b16 %v914, %v913
        %v934 = vpack.c.b16 %v916, %v915
        %v936 = vshrl.u32 %v917, 16
        %v938 = vrot.slane %v936, 7
        %v939 = vshll.u32 %v917, 16
        %v941 = vor.u32 %v938, %v939
        %v943 = vshrl.u32 %v918, 16
        %v945 = vrot.slane %v943, 7
        %v946 = vshll.u32 %v918, 16
        %v948 = vor.u32 %v945, %v946
        %v950 = vshrl.u32 %v919, 16
        %v952 = vrot.slane %v950, 7
        %v953 = vshll.u32 %v919, 16
        %v955 = vor.u32 %v952, %v953
        %v957 = vshrl.u32 %v920, 16
        %v959 = vrot.slane %v957, 7
        %v960 = vshll.u32 %v920, 16
        %v962 = vor.u32 %v959, %v960
        %v964 = vshrl.u32 %v921, 16
        %v966 = vrot.slane %v964, 7
        %v967 = vshll.u32 %v921, 16
        %v969 = vor.u32 %v966, %v967
        %v971 = vshrl.u32 %v922, 16
        %v973 = vrot.slane %v971, 7
        %v974 = vshll.u32 %v922, 16
        %v976 = vor.u32 %v973, %v974
        %v978 = vshrl.u32 %v923, 16
        %v980 = vrot.slane %v978, 7
        %v981 = vshll.u32 %v923, 16
        %v983 = vor.u32 %v980, %v981
        %v985 = vshrl.u32 %v924, 16
        %v987 = vrot.slane %v985, 7
        %v988 = vshll.u32 %v924, 16
        %v990 = vor.u32 %v987, %v988
        %v992 = vshrl.u32 %v925, 16
        %v994 = vrot.slane %v992, 7
        %v995 = vshll.u32 %v925, 16
        %v997 = vor.u32 %v994, %v995
        %v999 = vshrl.u32 %v926, 16
        %v1001 = vrot.slane %v999, 7
        %v1002 = vshll.u32 %v926, 16
        %v1004 = vor.u32 %v1001, %v1002
        %v1006 = vshrl.u32 %v927, 16
        %v1008 = vrot.slane %v1006, 7
        %v1009 = vshll.u32 %v927, 16
        %v1011 = vor.u32 %v1008, %v1009
        %v1013 = vshrl.u32 %v928, 16
        %v1015 = vrot.slane %v1013, 7
        %v1016 = vshll.u32 %v928, 16
        %v1018 = vor.u32 %v1015, %v1016
        %v1020 = vshrl.u32 %v929, 16
        %v1022 = vrot.slane %v1020, 7
        %v1023 = vshll.u32 %v929, 16
        %v1025 = vor.u32 %v1022, %v1023
        %v1027 = vshrl.u32 %v930, 16
        %v1029 = vrot.slane %v1027, 7
        %v1030 = vshll.u32 %v930, 16
        %v1032 = vor.u32 %v1029, %v1030
        %v1034 = vshrl.u32 %v931, 16
        %v1036 = vrot.slane %v1034, 7
        %v1037 = vshll.u32 %v931, 16
        %v1039 = vor.u32 %v1036, %v1037
        %v1041 = vshrl.u32 %v932, 16
        %v1043 = vrot.slane %v1041, 7
        %v1044 = vshll.u32 %v932, 16
        %v1046 = vor.u32 %v1043, %v1044
        %v1048 = vshrl.u32 %v933, 16
        %v1050 = vrot.slane %v1048, 7
        %v1051 = vshll.u32 %v933, 16
        %v1053 = vor.u32 %v1050, %v1051
        %v1055 = vshrl.u32 %v934, 16
        %v1057 = vrot.slane %v1055, 7
        %v1058 = vshll.u32 %v934, 16
        %v1060 = vor.u32 %v1057, %v1058
        %vm1097 = vcmask 1040384
        %vm1098 = vsmask.f32 256
        %vm1099 = vmand %vm1097, %vm1098
        %v1100 = vsel %vm1099, 0, %v941
        %v1101 = vsel %vm1099, 0, %v948
        %v1102 = vsel %vm1099, 0, %v955
        %v1103 = vsel %vm1099, 0, %v962
        %v1104 = vsel %vm1099, 0, %v969
        %v1105 = vsel %vm1099, 0, %v976
        %v1106 = vsel %vm1099, 0, %v983
        %v1107 = vsel %vm1099, 0, %v990
        %v1108 = vsel %vm1099, 0, %v997
        %v1109 = vsel %vm1099, 0, %v1004
        %v1110 = vsel %vm1099, 0, %v1011
        %v1111 = vsel %vm1099, 0, %v1018
        %v1112 = vsel %vm1099, 0, %v1025
        %v1113 = vsel %vm1099, 0, %v1032
        %v1114 = vsel %vm1099, 0, %v1039
        %v1115 = vsel %vm1099, 0, %v1046
        %v1116 = vsel %vm1099, 0, %v1053
        %v1117 = vsel %vm1099, 0, %v1060
        %v1118 = vsel %vm1099, %v938, 0
        %v1119 = vsel %vm1099, %v945, 0
        %v1120 = vsel %vm1099, %v952, 0
        %v1121 = vsel %vm1099, %v959, 0
        %v1122 = vsel %vm1099, %v966, 0
        %v1123 = vsel %vm1099, %v973, 0
        %v1124 = vsel %vm1099, %v980, 0
        %v1125 = vsel %vm1099, %v987, 0
        %v1126 = vsel %vm1099, %v994, 0
        %v1127 = vsel %vm1099, %v1001, 0
        %v1128 = vsel %vm1099, %v1008, 0
        %v1129 = vsel %vm1099, %v1015, 0
        %v1130 = vsel %vm1099, %v1022, 0
        %v1131 = vsel %vm1099, %v1029, 0
        %v1132 = vsel %vm1099, %v1036, 0
        %v1133 = vsel %vm1099, %v1043, 0
        %v1134 = vsel %vm1099, %v1050, 0
        %v1135 = vsel %vm1099, %v1057, 0
        %vm1136 = vsmask.f32 7424
        %v1138 = vshrl.u32 %v1100, 16
        %v1140 = vshll.u32 %v1100, 16
        %v1142 = vrot.slane %v1140, 1
        %v1143 = vor.u32 %v1138, %v1142
        %v1145 = vshll.u32 %v1118, 16
        %v1147 = vrot.slane %v1145, 1
        %v1148 = vsel %vm1136, %v1143, %v1147
        %v1150 = vshrl.u32 %v1101, 16
        %v1152 = vshll.u32 %v1101, 16
        %v1154 = vrot.slane %v1152, 1
        %v1155 = vor.u32 %v1150, %v1154
        %v1157 = vshll.u32 %v1119, 16
        %v1159 = vrot.slane %v1157, 1
        %v1160 = vsel %vm1136, %v1155, %v1159
        %v1162 = vshrl.u32 %v1102, 16
        %v1164 = vshll.u32 %v1102, 16
        %v1166 = vrot.slane %v1164, 1
        %v1167 = vor.u32 %v1162, %v1166
        %v1169 = vshll.u32 %v1120, 16
        %v1171 = vrot.slane %v1169, 1
        %v1172 = vsel %vm1136, %v1167, %v1171
        %v1174 = vshrl.u32 %v1103, 16
        %v1176 = vshll.u32 %v1103, 16
        %v1178 = vrot.slane %v1176, 1
        %v1179 = vor.u32 %v1174, %v1178
        %v1181 = vshll.u32 %v1121, 16
        %v1183 = vrot.slane %v1181, 1
        %v1184 = vsel %vm1136, %v1179, %v1183
        %v1186 = vshrl.u32 %v1104, 16
        %v1188 = vshll.u32 %v1104, 16
        %v1190 = vrot.slane %v1188, 1
        %v1191 = vor.u32 %v1186, %v1190
        %v1193 = vshll.u32 %v1122, 16
        %v1195 = vrot.slane %v1193, 1
        %v1196 = vsel %vm1136, %v1191, %v1195
        %v1198 = vshrl.u32 %v1105, 16
        %v1200 = vshll.u32 %v1105, 16
        %v1202 = vrot.slane %v1200, 1
        %v1203 = vor.u32 %v1198, %v1202
        %v1205 = vshll.u32 %v1123, 16
        %v1207 = vrot.slane %v1205, 1
        %v1208 = vsel %vm1136, %v1203, %v1207
        %v1210 = vshrl.u32 %v1106, 16
        %v1212 = vshll.u32 %v1106, 16
        %v1214 = vrot.slane %v1212, 1
        %v1215 = vor.u32 %v1210, %v1214
        %v1217 = vshll.u32 %v1124, 16
        %v1219 = vrot.slane %v1217, 1
        %v1220 = vsel %vm1136, %v1215, %v1219
        %v1222 = vshrl.u32 %v1107, 16
        %v1224 = vshll.u32 %v1107, 16
        %v1226 = vrot.slane %v1224, 1
        %v1227 = vor.u32 %v1222, %v1226
        %v1229 = vshll.u32 %v1125, 16
        %v1231 = vrot.slane %v1229, 1
        %v1232 = vsel %vm1136, %v1227, %v1231
        %v1234 = vshrl.u32 %v1108, 16
        %v1236 = vshll.u32 %v1108, 16
        %v1238 = vrot.slane %v1236, 1
        %v1239 = vor.u32 %v1234, %v1238
        %v1241 = vshll.u32 %v1126, 16
        %v1243 = vrot.slane %v1241, 1
        %v1244 = vsel %vm1136, %v1239, %v1243
        %v1246 = vshrl.u32 %v1109, 16
        %v1248 = vshll.u32 %v1109, 16
        %v1250 = vrot.slane %v1248, 1
        %v1251 = vor.u32 %v1246, %v1250
        %v1253 = vshll.u32 %v1127, 16
        %v1255 = vrot.slane %v1253, 1
        %v1256 = vsel %vm1136, %v1251, %v1255
        %v1258 = vshrl.u32 %v1110, 16
        %v1260 = vshll.u32 %v1110, 16
        %v1262 = vrot.slane %v1260, 1
        %v1263 = vor.u32 %v1258, %v1262
        %v1265 = vshll.u32 %v1128, 16
        %v1267 = vrot.slane %v1265, 1
        %v1268 = vsel %vm1136, %v1263, %v1267
        %v1270 = vshrl.u32 %v1111, 16
        %v1272 = vshll.u32 %v1111, 16
        %v1274 = vrot.slane %v1272, 1
        %v1275 = vor.u32 %v1270, %v1274
        %v1277 = vshll.u32 %v1129, 16
        %v1279 = vrot.slane %v1277, 1
        %v1280 = vsel %vm1136, %v1275, %v1279
        %v1282 = vshrl.u32 %v1112, 16
        %v1284 = vshll.u32 %v1112, 16
        %v1286 = vrot.slane %v1284, 1
        %v1287 = vor.u32 %v1282, %v1286
        %v1289 = vshll.u32 %v1130, 16
        %v1291 = vrot.slane %v1289, 1
        %v1292 = vsel %vm1136, %v1287, %v1291
        %v1294 = vshrl.u32 %v1113, 16
        %v1296 = vshll.u32 %v1113, 16
        %v1298 = vrot.slane %v1296, 1
        %v1299 = vor.u32 %v1294, %v1298
        %v1301 = vshll.u32 %v1131, 16
        %v1303 = vrot.slane %v1301, 1
        %v1304 = vsel %vm1136, %v1299, %v1303
        %v1306 = vshrl.u32 %v1114, 16
        %v1308 = vshll.u32 %v1114, 16
        %v1310 = vrot.slane %v1308, 1
        %v1311 = vor.u32 %v1306, %v1310
        %v1313 = vshll.u32 %v1132, 16
        %v1315 = vrot.slane %v1313, 1
        %v1316 = vsel %vm1136, %v1311, %v1315
        %v1318 = vshrl.u32 %v1115, 16
        %v1320 = vshll.u32 %v1115, 16
        %v1322 = vrot.slane %v1320, 1
        %v1323 = vor.u32 %v1318, %v1322
        %v1325 = vshll.u32 %v1133, 16
        %v1327 = vrot.slane %v1325, 1
        %v1328 = vsel %vm1136, %v1323, %v1327
        %vm1377 = vcmask 1046528
        %v1378 = vrot.slane %v1100, 1
        %v1379 = vrot.slane %v1118, 1
        %v1380 = vsel %vm1377, %v1378, %v1379
        %v1381 = vrot.slane %v1101, 1
        %v1382 = vrot.slane %v1119, 1
        %v1383 = vsel %vm1377, %v1381, %v1382
        %v1384 = vrot.slane %v1102, 1
        %v1385 = vrot.slane %v1120, 1
        %v1386 = vsel %vm1377, %v1384, %v1385
        %v1387 = vrot.slane %v1103, 1
        %v1388 = vrot.slane %v1121, 1
        %v1389 = vsel %vm1377, %v1387, %v1388
        %v1390 = vrot.slane %v1104, 1
        %v1391 = vrot.slane %v1122, 1
        %v1392 = vsel %vm1377, %v1390, %v1391
        %v1393 = vrot.slane %v1105, 1
        %v1394 = vrot.slane %v1123, 1
        %v1395 = vsel %vm1377, %v1393, %v1394
        %v1396 = vrot.slane %v1106, 1
        %v1397 = vrot.slane %v1124, 1
        %v1398 = vsel %vm1377, %v1396, %v1397
        %v1399 = vrot.slane %v1107, 1
        %v1400 = vrot.slane %v1125, 1
        %v1401 = vsel %vm1377, %v1399, %v1400
        %v1402 = vrot.slane %v1108, 1
        %v1403 = vrot.slane %v1126, 1
        %v1404 = vsel %vm1377, %v1402, %v1403
        %v1405 = vrot.slane %v1109, 1
        %v1406 = vrot.slane %v1127, 1
        %v1407 = vsel %vm1377, %v1405, %v1406
        %v1408 = vrot.slane %v1110, 1
        %v1409 = vrot.slane %v1128, 1
        %v1410 = vsel %vm1377, %v1408, %v1409
        %v1411 = vrot.slane %v1111, 1
        %v1412 = vrot.slane %v1129, 1
        %v1413 = vsel %vm1377, %v1411, %v1412
        %v1414 = vrot.slane %v1112, 1
        %v1415 = vrot.slane %v1130, 1
        %v1416 = vsel %vm1377, %v1414, %v1415
        %v1417 = vrot.slane %v1113, 1
        %v1418 = vrot.slane %v1131, 1
        %v1419 = vsel %vm1377, %v1417, %v1418
        %v1420 = vrot.slane %v1114, 1
        %v1421 = vrot.slane %v1132, 1
        %v1422 = vsel %vm1377, %v1420, %v1421
        %v1423 = vrot.slane %v1115, 1
        %v1424 = vrot.slane %v1133, 1
        %v1425 = vsel %vm1377, %v1423, %v1424
        %v1443 = vshrl.u32 %v1116, 16
        %v1445 = vshll.u32 %v1116, 16
        %v1447 = vrot.slane %v1445, 1
        %v1448 = vor.u32 %v1443, %v1447
        %v1450 = vshll.u32 %v1134, 16
        %v1452 = vrot.slane %v1450, 1
        %v1453 = vsel %vm1136, %v1448, %v1452
        %v1457 = vrot.slane %v1116, 1
        %v1458 = vrot.slane %v1134, 1
        %v1459 = vsel %vm1377, %v1457, %v1458
        %v1462 = vshrl.u32 %v1117, 16
        %v1464 = vshll.u32 %v1117, 16
        %v1466 = vrot.slane %v1464, 1
        %v1467 = vor.u32 %v1462, %v1466
        %v1469 = vshll.u32 %v1135, 16
        %v1471 = vrot.slane %v1469, 1
        %v1472 = vsel %vm1136, %v1467, %v1471
        %v1476 = vrot.slane %v1117, 1
        %v1477 = vrot.slane %v1135, 1
        %v1478 = vsel %vm1377, %v1476, %v1477
        %v1480 = vld [vmem:[#allocation8] sm:$0xf]
        %v1481 = vld [vmem:[#allocation8 + $0x4] sm:$0xf]
        %v1482 = vld [vmem:[#allocation8 + $0x8] sm:$0xf]
        %v1483 = vld [vmem:[#allocation8 + $0xc] sm:$0xf]
        %v1484 = vld [vmem:[#allocation8 + $0x10] sm:$0xf]
        %v1485 = vld [vmem:[#allocation8 + $0x14] sm:$0xf]
        %v1486 = vld [vmem:[#allocation8 + $0x18] sm:$0xf]
        %v1487 = vld [vmem:[#allocation8 + $0x1c] sm:$0xf]
        %v1488 = vld [vmem:[#allocation8 + $0x20] sm:$0xf]
        %v1489 = vld [vmem:[#allocation8 + $0x24] sm:$0xf]
        %v1490 = vld [vmem:[#allocation8 + $0x28] sm:$0xf]
        %v1491 = vld [vmem:[#allocation8 + $0x2c] sm:$0xf]
        %v1492 = vld [vmem:[#allocation8 + $0x30] sm:$0xf]
        %v1493 = vld [vmem:[#allocation8 + $0x34] sm:$0xf]
        %v1494 = vld [vmem:[#allocation8 + $0x38] sm:$0xf]
        %v1495 = vld [vmem:[#allocation8 + $0x3c] sm:$0xf]
        %v1496 = vld [vmem:[#allocation8 + $0x40] sm:$0xf]
        %v1497 = vld [vmem:[#allocation8 + $0x44] sm:$0xf]
        %v1498 = vld [vmem:[#allocation8 + $0x48] sm:$0xf]
        %v1499 = vld [vmem:[#allocation8 + $0x4c] sm:$0xf]
        %v1500 = vld [vmem:[#allocation8 + $0x50] sm:$0xf]
        %v1501 = vld [vmem:[#allocation8 + $0x54] sm:$0xf]
        %v1502 = vld [vmem:[#allocation8 + $0x58] sm:$0xf]
        %v1503 = vld [vmem:[#allocation8 + $0x5c] sm:$0xf]
        %v1504 = vld [vmem:[#allocation8 + $0x60] sm:$0xf]
        %v1505 = vld [vmem:[#allocation8 + $0x64] sm:$0xf]
        %v1506 = vld [vmem:[#allocation8 + $0x68] sm:$0xf]
        %v1507 = vld [vmem:[#allocation8 + $0x6c] sm:$0xf]
        %v1508 = vld [vmem:[#allocation8 + $0x70] sm:$0xf]
        %v1509 = vld [vmem:[#allocation8 + $0x74] sm:$0xf]
        %v1510 = vld [vmem:[#allocation8 + $0x78] sm:$0xf]
        %v1511 = vld [vmem:[#allocation8 + $0x7c] sm:$0xf]
        %v1512 = vld [vmem:[#allocation8 + $0x80] sm:$0xf]
        %v1513 = vld [vmem:[#allocation8 + $0x84] sm:$0xf]
        %v1514 = vld [vmem:[#allocation8 + $0x88] sm:$0xf]
        %v1515 = vld [vmem:[#allocation8 + $0x8c] sm:$0xf]
        %v1516 = vld [vmem:[#allocation8 + $0x90] sm:$0xf]
        %v1517 = vld [vmem:[#allocation8 + $0x94] sm:$0xf]
        %v1518 = vld [vmem:[#allocation8 + $0x98] sm:$0xf]
        %v1519 = vld [vmem:[#allocation8 + $0x9c] sm:$0xf]
        %v1520 = vld [vmem:[#allocation8 + $0xa0] sm:$0xf]
        %v1521 = vld [vmem:[#allocation8 + $0xa4] sm:$0xf]
        %v1522 = vld [vmem:[#allocation8 + $0xa8] sm:$0xf]
        %v1523 = vld [vmem:[#allocation8 + $0xac] sm:$0xf]
        %v1524 = vld [vmem:[#allocation8 + $0xb0] sm:$0xf]
        %v1525 = vld [vmem:[#allocation8 + $0xb4] sm:$0xf]
        %v1526 = vld [vmem:[#allocation8 + $0xb8] sm:$0xf]
        %v1527 = vld [vmem:[#allocation8 + $0xbc] sm:$0xf]
        %v1528 = vld [vmem:[#allocation8 + $0xc0] sm:$0xf]
        %v1529 = vld [vmem:[#allocation8 + $0xc4] sm:$0xf]
        %v1530 = vld [vmem:[#allocation8 + $0xc8] sm:$0xf]
        %v1531 = vld [vmem:[#allocation8 + $0xcc] sm:$0xf]
        %v1532 = vld [vmem:[#allocation8 + $0xd0] sm:$0xf]
        %v1533 = vld [vmem:[#allocation8 + $0xd4] sm:$0xf]
        %v1534 = vld [vmem:[#allocation8 + $0xd8] sm:$0xf]
        %v1535 = vld [vmem:[#allocation8 + $0xdc] sm:$0xf]
        %v1536 = vld [vmem:[#allocation8 + $0xe0] sm:$0xf]
        %v1537 = vld [vmem:[#allocation8 + $0xe4] sm:$0xf]
        %v1538 = vld [vmem:[#allocation8 + $0xe8] sm:$0xf]
        %v1539 = vld [vmem:[#allocation8 + $0xec] sm:$0xf]
        %v1540 = vld [vmem:[#allocation8 + $0xf0] sm:$0xf]
        %v1541 = vld [vmem:[#allocation8 + $0xf4] sm:$0xf]
        %v1542 = vld [vmem:[#allocation8 + $0xf8] sm:$0xf]
        %v1543 = vld [vmem:[#allocation8 + $0xfc] sm:$0xf]
        %v1544 = vld [vmem:[#allocation8 + $0x100] sm:$0xf]
        %v1545 = vld [vmem:[#allocation8 + $0x104] sm:$0xf]
        %v1546 = vld [vmem:[#allocation8 + $0x108] sm:$0xf]
        %v1547 = vld [vmem:[#allocation8 + $0x10c] sm:$0xf]
        %v1548 = vld [vmem:[#allocation8 + $0x110] sm:$0xf]
        %v1549 = vld [vmem:[#allocation8 + $0x114] sm:$0xf]
        %v1550 = vld [vmem:[#allocation8 + $0x118] sm:$0xf]
        %v1551 = vld [vmem:[#allocation8 + $0x11c] sm:$0xf]
        %v1552 = vld [vmem:[#allocation8 + $0x120] sm:$0xf]
        %v1553 = vld [vmem:[#allocation8 + $0x124] sm:$0xf]
        %v1554 = vld [vmem:[#allocation8 + $0x128] sm:$0xf]
        %v1555 = vld [vmem:[#allocation8 + $0x12c] sm:$0xf]
        %v1556 = vld [vmem:[#allocation8 + $0x130] sm:$0xf]
        %v1557 = vld [vmem:[#allocation8 + $0x134] sm:$0xf]
        %v1558 = vld [vmem:[#allocation8 + $0x138] sm:$0xf]
        %v1559 = vld [vmem:[#allocation8 + $0x13c] sm:$0xf]
        %v1560 = vld [vmem:[#allocation8 + $0x140] sm:$0xf]
        %v1561 = vld [vmem:[#allocation8 + $0x144] sm:$0xf]
        %v1562 = vld [vmem:[#allocation8 + $0x148] sm:$0xf]
        %v1563 = vld [vmem:[#allocation8 + $0x14c] sm:$0xf]
        %v1564 = vld [vmem:[#allocation8 + $0x150] sm:$0xf]
        %v1565 = vld [vmem:[#allocation8 + $0x154] sm:$0xf]
        %v1566 = vld [vmem:[#allocation8 + $0x158] sm:$0xf]
        %v1567 = vld [vmem:[#allocation8 + $0x15c] sm:$0xf]
        %v1568 = vld [vmem:[#allocation8 + $0x160] sm:$0xf]
        %v1569 = vld [vmem:[#allocation8 + $0x164] sm:$0xf]
        %v1570 = vld [vmem:[#allocation8 + $0x168] sm:$0xf]
        %v1571 = vld [vmem:[#allocation8 + $0x16c] sm:$0xf]
        %v1572 = vld [vmem:[#allocation8 + $0x170] sm:$0xf]
        %v1573 = vld [vmem:[#allocation8 + $0x174] sm:$0xf]
        %v1574 = vld [vmem:[#allocation8 + $0x178] sm:$0xf]
        %v1575 = vld [vmem:[#allocation8 + $0x17c] sm:$0xf]
        %v1576 = vld [vmem:[#allocation8 + $0x180] sm:$0xf]
        %v1577 = vld [vmem:[#allocation8 + $0x184] sm:$0xf]
        %v1578 = vld [vmem:[#allocation8 + $0x188] sm:$0xf]
        %v1579 = vld [vmem:[#allocation8 + $0x18c] sm:$0xf]
        %v1580 = vld [vmem:[#allocation8 + $0x190] sm:$0xf]
        %v1581 = vld [vmem:[#allocation8 + $0x194] sm:$0xf]
        %v1582 = vld [vmem:[#allocation8 + $0x198] sm:$0xf]
        %v1583 = vld [vmem:[#allocation8 + $0x19c] sm:$0xf]
        %v1584 = vld [vmem:[#allocation8 + $0x1a0] sm:$0xf]
        %v1585 = vld [vmem:[#allocation8 + $0x1a4] sm:$0xf]
        %v1586 = vld [vmem:[#allocation8 + $0x1a8] sm:$0xf]
        %v1587 = vld [vmem:[#allocation8 + $0x1ac] sm:$0xf]
        %v1588 = vld [vmem:[#allocation8 + $0x1b0] sm:$0xf]
        %v1589 = vld [vmem:[#allocation8 + $0x1b4] sm:$0xf]
        %v1590 = vld [vmem:[#allocation8 + $0x1b8] sm:$0xf]
        %v1591 = vld [vmem:[#allocation8 + $0x1bc] sm:$0xf]
        %v1592 = vld [vmem:[#allocation8 + $0x1c0] sm:$0xf]
        %v1593 = vld [vmem:[#allocation8 + $0x1c4] sm:$0xf]
        %v1594 = vld [vmem:[#allocation8 + $0x1c8] sm:$0xf]
        %v1595 = vld [vmem:[#allocation8 + $0x1cc] sm:$0xf]
        %v1596 = vld [vmem:[#allocation8 + $0x1d0] sm:$0xf]
        %v1597 = vld [vmem:[#allocation8 + $0x1d4] sm:$0xf]
        %v1598 = vld [vmem:[#allocation8 + $0x1d8] sm:$0xf]
        %v1599 = vld [vmem:[#allocation8 + $0x1dc] sm:$0xf]
        %v1600 = vld [vmem:[#allocation8 + $0x1e0] sm:$0xf]
        %v1601 = vld [vmem:[#allocation8 + $0x1e4] sm:$0xf]
        %v1602 = vld [vmem:[#allocation8 + $0x1e8] sm:$0xf]
        %v1603 = vld [vmem:[#allocation8 + $0x1ec] sm:$0xf]
        %v1604 = vld [vmem:[#allocation8 + $0x1f0] sm:$0xf]
        %v1605 = vld [vmem:[#allocation8 + $0x1f4] sm:$0xf]
        %v1606 = vld [vmem:[#allocation8 + $0x1f8] sm:$0xf]
        %v1607 = vld [vmem:[#allocation8 + $0x1fc] sm:$0xf]
        %v1608 = vld [vmem:[#allocation8 + $0x200] sm:$0xf]
        %v1609 = vld [vmem:[#allocation8 + $0x204] sm:$0xf]
        %v1610 = vld [vmem:[#allocation8 + $0x208] sm:$0xf]
        %v1611 = vld [vmem:[#allocation8 + $0x20c] sm:$0xf]
        %v1612 = vld [vmem:[#allocation8 + $0x210] sm:$0xf]
        %v1613 = vld [vmem:[#allocation8 + $0x214] sm:$0xf]
        %v1614 = vld [vmem:[#allocation8 + $0x218] sm:$0xf]
        %v1615 = vld [vmem:[#allocation8 + $0x21c] sm:$0xf]
        %v1616 = vld [vmem:[#allocation8 + $0x220] sm:$0xf]
        %v1617 = vld [vmem:[#allocation8 + $0x224] sm:$0xf]
        %v1618 = vld [vmem:[#allocation8 + $0x228] sm:$0xf]
        %v1619 = vld [vmem:[#allocation8 + $0x22c] sm:$0xf]
        %v1620 = vld [vmem:[#allocation8 + $0x230] sm:$0xf]
        %v1621 = vld [vmem:[#allocation8 + $0x234] sm:$0xf]
        %v1622 = vld [vmem:[#allocation8 + $0x238] sm:$0xf]
        %v1623 = vld [vmem:[#allocation8 + $0x23c] sm:$0xf]
        %v1624 = vld [vmem:[%s4] sm:$0x1]
        %v1626 = vperm.slane %v1624, 0
        %v1772 = vunpack.c.l.b16 %v1480
        %v1773 = vunpack.c.l.b16 %v1481
        %v1774 = vunpack.c.l.b16 %v1482
        %v1775 = vunpack.c.l.b16 %v1483
        %v1776 = vunpack.c.l.b16 %v1484
        %v1777 = vunpack.c.l.b16 %v1485
        %v1778 = vunpack.c.l.b16 %v1486
        %v1779 = vunpack.c.l.b16 %v1487
        %v1780 = vunpack.c.l.b16 %v1488
        %v1781 = vunpack.c.l.b16 %v1489
        %v1782 = vunpack.c.l.b16 %v1490
        %v1783 = vunpack.c.l.b16 %v1491
        %v1784 = vunpack.c.l.b16 %v1492
        %v1785 = vunpack.c.l.b16 %v1493
        %v1786 = vunpack.c.l.b16 %v1494
        %v1787 = vunpack.c.l.b16 %v1495
        %v1788 = vunpack.c.l.b16 %v1496
        %v1789 = vunpack.c.l.b16 %v1497
        %v1790 = vunpack.c.l.b16 %v1498
        %v1791 = vunpack.c.l.b16 %v1499
        %v1792 = vunpack.c.l.b16 %v1500
        %v1793 = vunpack.c.l.b16 %v1501
        %v1794 = vunpack.c.l.b16 %v1502
        %v1795 = vunpack.c.l.b16 %v1503
        %v1796 = vunpack.c.l.b16 %v1504
        %v1797 = vunpack.c.l.b16 %v1505
        %v1798 = vunpack.c.l.b16 %v1506
        %v1799 = vunpack.c.l.b16 %v1507
        %v1800 = vunpack.c.l.b16 %v1508
        %v1801 = vunpack.c.l.b16 %v1509
        %v1802 = vunpack.c.l.b16 %v1510
        %v1803 = vunpack.c.l.b16 %v1511
        %v1804 = vunpack.c.l.b16 %v1512
        %v1805 = vunpack.c.l.b16 %v1513
        %v1806 = vunpack.c.l.b16 %v1514
        %v1807 = vunpack.c.l.b16 %v1515
        %v1808 = vunpack.c.l.b16 %v1516
        %v1809 = vunpack.c.l.b16 %v1517
        %v1810 = vunpack.c.l.b16 %v1518
        %v1811 = vunpack.c.l.b16 %v1519
        %v1812 = vunpack.c.l.b16 %v1520
        %v1813 = vunpack.c.l.b16 %v1521
        %v1814 = vunpack.c.l.b16 %v1522
        %v1815 = vunpack.c.l.b16 %v1523
        %v1816 = vunpack.c.l.b16 %v1524
        %v1817 = vunpack.c.l.b16 %v1525
        %v1818 = vunpack.c.l.b16 %v1526
        %v1819 = vunpack.c.l.b16 %v1527
        %v1820 = vunpack.c.l.b16 %v1528
        %v1821 = vunpack.c.l.b16 %v1529
        %v1822 = vunpack.c.l.b16 %v1530
        %v1823 = vunpack.c.l.b16 %v1531
        %v1824 = vunpack.c.l.b16 %v1532
        %v1825 = vunpack.c.l.b16 %v1533
        %v1826 = vunpack.c.l.b16 %v1534
        %v1827 = vunpack.c.l.b16 %v1535
        %v1828 = vunpack.c.l.b16 %v1536
        %v1829 = vunpack.c.l.b16 %v1537
        %v1830 = vunpack.c.l.b16 %v1538
        %v1831 = vunpack.c.l.b16 %v1539
        %v1832 = vunpack.c.l.b16 %v1540
        %v1833 = vunpack.c.l.b16 %v1541
        %v1834 = vunpack.c.l.b16 %v1542
        %v1835 = vunpack.c.l.b16 %v1543
        %v1836 = vunpack.c.l.b16 %v1544
        %v1837 = vunpack.c.l.b16 %v1545
        %v1838 = vunpack.c.l.b16 %v1546
        %v1839 = vunpack.c.l.b16 %v1547
        %v1840 = vunpack.c.l.b16 %v1548
        %v1841 = vunpack.c.l.b16 %v1549
        %v1842 = vunpack.c.l.b16 %v1550
        %v1843 = vunpack.c.l.b16 %v1551
        %v1844 = vunpack.c.l.b16 %v1552
        %v1845 = vunpack.c.l.b16 %v1553
        %v1846 = vunpack.c.l.b16 %v1554
        %v1847 = vunpack.c.l.b16 %v1555
        %v1848 = vunpack.c.l.b16 %v1556
        %v1849 = vunpack.c.l.b16 %v1557
        %v1850 = vunpack.c.l.b16 %v1558
        %v1851 = vunpack.c.l.b16 %v1559
        %v1852 = vunpack.c.l.b16 %v1560
        %v1853 = vunpack.c.l.b16 %v1561
        %v1854 = vunpack.c.l.b16 %v1562
        %v1855 = vunpack.c.l.b16 %v1563
        %v1856 = vunpack.c.l.b16 %v1564
        %v1857 = vunpack.c.l.b16 %v1565
        %v1858 = vunpack.c.l.b16 %v1566
        %v1859 = vunpack.c.l.b16 %v1567
        %v1860 = vunpack.c.l.b16 %v1568
        %v1861 = vunpack.c.l.b16 %v1569
        %v1862 = vunpack.c.l.b16 %v1570
        %v1863 = vunpack.c.l.b16 %v1571
        %v1864 = vunpack.c.l.b16 %v1572
        %v1865 = vunpack.c.l.b16 %v1573
        %v1866 = vunpack.c.l.b16 %v1574
        %v1867 = vunpack.c.l.b16 %v1575
        %v1868 = vunpack.c.l.b16 %v1576
        %v1869 = vunpack.c.l.b16 %v1577
        %v1870 = vunpack.c.l.b16 %v1578
        %v1871 = vunpack.c.l.b16 %v1579
        %v1872 = vunpack.c.l.b16 %v1580
        %v1873 = vunpack.c.l.b16 %v1581
        %v1874 = vunpack.c.l.b16 %v1582
        %v1875 = vunpack.c.l.b16 %v1583
        %v1876 = vunpack.c.l.b16 %v1584
        %v1877 = vunpack.c.l.b16 %v1585
        %v1878 = vunpack.c.l.b16 %v1586
        %v1879 = vunpack.c.l.b16 %v1587
        %v1880 = vunpack.c.l.b16 %v1588
        %v1881 = vunpack.c.l.b16 %v1589
        %v1882 = vunpack.c.l.b16 %v1590
        %v1883 = vunpack.c.l.b16 %v1591
        %v1884 = vunpack.c.l.b16 %v1592
        %v1885 = vunpack.c.l.b16 %v1593
        %v1886 = vunpack.c.l.b16 %v1594
        %v1887 = vunpack.c.l.b16 %v1595
        %v1888 = vunpack.c.l.b16 %v1596
        %v1889 = vunpack.c.l.b16 %v1597
        %v1890 = vunpack.c.l.b16 %v1598
        %v1891 = vunpack.c.l.b16 %v1599
        %v1892 = vunpack.c.l.b16 %v1600
        %v1893 = vunpack.c.l.b16 %v1601
        %v1894 = vunpack.c.l.b16 %v1602
        %v1895 = vunpack.c.l.b16 %v1603
        %v1896 = vunpack.c.l.b16 %v1604
        %v1897 = vunpack.c.l.b16 %v1605
        %v1898 = vunpack.c.l.b16 %v1606
        %v1899 = vunpack.c.l.b16 %v1607
        %v1900 = vunpack.c.l.b16 %v1608
        %v1901 = vunpack.c.l.b16 %v1609
        %v1902 = vunpack.c.l.b16 %v1610
        %v1903 = vunpack.c.l.b16 %v1611
        %v1904 = vunpack.c.l.b16 %v1612
        %v1905 = vunpack.c.l.b16 %v1613
        %v1906 = vunpack.c.l.b16 %v1614
        %v1907 = vunpack.c.l.b16 %v1615
        %v1908 = vunpack.c.l.b16 %v1616
        %v1909 = vunpack.c.l.b16 %v1617
        %v1910 = vunpack.c.l.b16 %v1618
        %v1911 = vunpack.c.l.b16 %v1619
        %v1912 = vunpack.c.l.b16 %v1620
        %v1913 = vunpack.c.l.b16 %v1621
        %v1914 = vunpack.c.l.b16 %v1622
        %v1915 = vunpack.c.l.b16 %v1623
        %v1916 = vpack.c.b16 %v1773, %v1772
        %v1917 = vpack.c.b16 %v1775, %v1774
        %v1918 = vpack.c.b16 %v1777, %v1776
        %v1919 = vpack.c.b16 %v1779, %v1778
        %v1920 = vpack.c.b16 %v1781, %v1780
        %v1921 = vpack.c.b16 %v1783, %v1782
        %v1922 = vpack.c.b16 %v1785, %v1784
        %v1923 = vpack.c.b16 %v1787, %v1786
        %v1924 = vpack.c.b16 %v1789, %v1788
        %v1925 = vpack.c.b16 %v1791, %v1790
        %v1926 = vpack.c.b16 %v1793, %v1792
        %v1927 = vpack.c.b16 %v1795, %v1794
        %v1928 = vpack.c.b16 %v1797, %v1796
        %v1929 = vpack.c.b16 %v1799, %v1798
        %v1930 = vpack.c.b16 %v1801, %v1800
        %v1931 = vpack.c.b16 %v1803, %v1802
        %v1932 = vpack.c.b16 %v1805, %v1804
        %v1933 = vpack.c.b16 %v1807, %v1806
        %v1934 = vpack.c.b16 %v1809, %v1808
        %v1935 = vpack.c.b16 %v1811, %v1810
        %v1936 = vpack.c.b16 %v1813, %v1812
        %v1937 = vpack.c.b16 %v1815, %v1814
        %v1938 = vpack.c.b16 %v1817, %v1816
        %v1939 = vpack.c.b16 %v1819, %v1818
        %v1940 = vpack.c.b16 %v1821, %v1820
        %v1941 = vpack.c.b16 %v1823, %v1822
        %v1942 = vpack.c.b16 %v1825, %v1824
        %v1943 = vpack.c.b16 %v1827, %v1826
        %v1944 = vpack.c.b16 %v1829, %v1828
        %v1945 = vpack.c.b16 %v1831, %v1830
        %v1946 = vpack.c.b16 %v1833, %v1832
        %v1947 = vpack.c.b16 %v1835, %v1834
        %v1948 = vpack.c.b16 %v1837, %v1836
        %v1949 = vpack.c.b16 %v1839, %v1838
        %v1950 = vpack.c.b16 %v1841, %v1840
        %v1951 = vpack.c.b16 %v1843, %v1842
        %v1952 = vpack.c.b16 %v1845, %v1844
        %v1953 = vpack.c.b16 %v1847, %v1846
        %v1954 = vpack.c.b16 %v1849, %v1848
        %v1955 = vpack.c.b16 %v1851, %v1850
        %v1956 = vpack.c.b16 %v1853, %v1852
        %v1957 = vpack.c.b16 %v1855, %v1854
        %v1958 = vpack.c.b16 %v1857, %v1856
        %v1959 = vpack.c.b16 %v1859, %v1858
        %v1960 = vpack.c.b16 %v1861, %v1860
        %v1961 = vpack.c.b16 %v1863, %v1862
        %v1962 = vpack.c.b16 %v1865, %v1864
        %v1963 = vpack.c.b16 %v1867, %v1866
        %v1964 = vpack.c.b16 %v1869, %v1868
        %v1965 = vpack.c.b16 %v1871, %v1870
        %v1966 = vpack.c.b16 %v1873, %v1872
        %v1967 = vpack.c.b16 %v1875, %v1874
        %v1968 = vpack.c.b16 %v1877, %v1876
        %v1969 = vpack.c.b16 %v1879, %v1878
        %v1970 = vpack.c.b16 %v1881, %v1880
        %v1971 = vpack.c.b16 %v1883, %v1882
        %v1972 = vpack.c.b16 %v1885, %v1884
        %v1973 = vpack.c.b16 %v1887, %v1886
        %v1974 = vpack.c.b16 %v1889, %v1888
        %v1975 = vpack.c.b16 %v1891, %v1890
        %v1976 = vpack.c.b16 %v1893, %v1892
        %v1977 = vpack.c.b16 %v1895, %v1894
        %v1978 = vpack.c.b16 %v1897, %v1896
        %v1979 = vpack.c.b16 %v1899, %v1898
        %v1980 = vpack.c.b16 %v1901, %v1900
        %v1981 = vpack.c.b16 %v1903, %v1902
        %v1982 = vpack.c.b16 %v1905, %v1904
        %v1983 = vpack.c.b16 %v1907, %v1906
        %v1984 = vpack.c.b16 %v1909, %v1908
        %v1985 = vpack.c.b16 %v1911, %v1910
        %v1986 = vpack.c.b16 %v1913, %v1912
        %v1987 = vpack.c.b16 %v1915, %v1914
        %2060 = vmatpush.bf16.msra.mxu0 %v1923
        %2061 = vmatpush.bf16.msra.mxu0 %v1922
        %2062 = vmatpush.bf16.msra.mxu0 %v1921
        %2063 = vmatpush.bf16.msra.mxu0 %v1920
        %2064 = vmatpush.bf16.msra.mxu0 %v1919
        %2065 = vmatpush.bf16.msra.mxu0 %v1918
        %2066 = vmatpush.bf16.msra.mxu0 %v1917
        %2067 = vmatpush.bf16.msra.mxu0 %v1916
        %2068 = vmatmul.bf16.gmra.mxu0 %v1100
        %v2069 = vpop.f32.mrf.mxu0
        %v2070 = vadd.f32 %v1626, %v2069
        %v2071 = vpop.f32.mrf.mxu0
        %v2072 = vadd.f32 %v1626, %v2071
        %2073 = vmatmul.bf16.gmra.mxu0 %v1101
        %v2074 = vpop.f32.mrf.mxu0
        %v2075 = vadd.f32 %v1626, %v2074
        %v2076 = vpop.f32.mrf.mxu0
        %v2077 = vadd.f32 %v1626, %v2076
        %2078 = vmatmul.bf16.gmra.mxu0 %v1102
        %v2079 = vpop.f32.mrf.mxu0
        %v2080 = vadd.f32 %v1626, %v2079
        %v2081 = vpop.f32.mrf.mxu0
        %v2082 = vadd.f32 %v1626, %v2081
        %2083 = vmatmul.bf16.gmra.mxu0 %v1103
        %v2084 = vpop.f32.mrf.mxu0
        %v2085 = vadd.f32 %v1626, %v2084
        %v2086 = vpop.f32.mrf.mxu0
        %v2087 = vadd.f32 %v1626, %v2086
        %2088 = vmatmul.bf16.gmra.mxu0 %v1104
        %v2089 = vpop.f32.mrf.mxu0
        %v2090 = vadd.f32 %v1626, %v2089
        %v2091 = vpop.f32.mrf.mxu0
        %v2092 = vadd.f32 %v1626, %v2091
        %2093 = vmatmul.bf16.gmra.mxu0 %v1105
        %v2094 = vpop.f32.mrf.mxu0
        %v2095 = vadd.f32 %v1626, %v2094
        %v2096 = vpop.f32.mrf.mxu0
        %v2097 = vadd.f32 %v1626, %v2096
        %2098 = vmatmul.bf16.gmra.mxu0 %v1106
        %v2099 = vpop.f32.mrf.mxu0
        %v2100 = vadd.f32 %v1626, %v2099
        %v2101 = vpop.f32.mrf.mxu0
        %v2102 = vadd.f32 %v1626, %v2101
        %2103 = vmatmul.bf16.gmra.mxu0 %v1107
        %v2104 = vpop.f32.mrf.mxu0
        %v2105 = vadd.f32 %v1626, %v2104
        %v2106 = vpop.f32.mrf.mxu0
        %v2107 = vadd.f32 %v1626, %v2106
        %2108 = vmatmul.bf16.gmra.mxu0 %v1108
        %v2109 = vpop.f32.mrf.mxu0
        %v2110 = vadd.f32 %v1626, %v2109
        %v2111 = vpop.f32.mrf.mxu0
        %v2112 = vadd.f32 %v1626, %v2111
        %2113 = vmatmul.bf16.gmra.mxu0 %v1109
        %v2114 = vpop.f32.mrf.mxu0
        %v2115 = vadd.f32 %v1626, %v2114
        %v2116 = vpop.f32.mrf.mxu0
        %v2117 = vadd.f32 %v1626, %v2116
        %2118 = vmatmul.bf16.gmra.mxu0 %v1110
        %v2119 = vpop.f32.mrf.mxu0
        %v2120 = vadd.f32 %v1626, %v2119
        %v2121 = vpop.f32.mrf.mxu0
        %v2122 = vadd.f32 %v1626, %v2121
        %2123 = vmatmul.bf16.gmra.mxu0 %v1111
        %v2124 = vpop.f32.mrf.mxu0
        %v2125 = vadd.f32 %v1626, %v2124
        %v2126 = vpop.f32.mrf.mxu0
        %v2127 = vadd.f32 %v1626, %v2126
        %2128 = vmatmul.bf16.gmra.mxu0 %v1112
        %v2129 = vpop.f32.mrf.mxu0
        %v2130 = vadd.f32 %v1626, %v2129
        %v2131 = vpop.f32.mrf.mxu0
        %v2132 = vadd.f32 %v1626, %v2131
        %2133 = vmatmul.bf16.gmra.mxu0 %v1113
        %v2134 = vpop.f32.mrf.mxu0
        %v2135 = vadd.f32 %v1626, %v2134
        %v2136 = vpop.f32.mrf.mxu0
        %v2137 = vadd.f32 %v1626, %v2136
        %2138 = vmatmul.bf16.gmra.mxu0 %v1114
        %v2139 = vpop.f32.mrf.mxu0
        %v2140 = vadd.f32 %v1626, %v2139
        %v2141 = vpop.f32.mrf.mxu0
        %v2142 = vadd.f32 %v1626, %v2141
        %2143 = vmatmul.bf16.gmra.mxu0 %v1115
        %v2144 = vpop.f32.mrf.mxu0
        %v2145 = vadd.f32 %v1626, %v2144
        %v2146 = vpop.f32.mrf.mxu0
        %v2147 = vadd.f32 %v1626, %v2146
        %2148 = vdwg.mxu0
        %2149 = vmatpush.bf16.msra.mxu0 %v1931
        %2150 = vmatpush.bf16.msra.mxu0 %v1930
        %2151 = vmatpush.bf16.msra.mxu0 %v1929
        %2152 = vmatpush.bf16.msra.mxu0 %v1928
        %2153 = vmatpush.bf16.msra.mxu0 %v1927
        %2154 = vmatpush.bf16.msra.mxu0 %v1926
        %2155 = vmatpush.bf16.msra.mxu0 %v1925
        %2156 = vmatpush.bf16.msra.mxu0 %v1924
        %2157 = vmatmul.bf16.gmra.mxu0 %v1148
        %v2158 = vpop.f32.mrf.mxu0
        %v2159 = vadd.f32 %v2070, %v2158
        %v2160 = vpop.f32.mrf.mxu0
        %v2161 = vadd.f32 %v2072, %v2160
        %2162 = vmatmul.bf16.gmra.mxu0 %v1160
        %v2163 = vpop.f32.mrf.mxu0
        %v2164 = vadd.f32 %v2075, %v2163
        %v2165 = vpop.f32.mrf.mxu0
        %v2166 = vadd.f32 %v2077, %v2165
        %2167 = vmatmul.bf16.gmra.mxu0 %v1172
        %v2168 = vpop.f32.mrf.mxu0
        %v2169 = vadd.f32 %v2080, %v2168
        %v2170 = vpop.f32.mrf.mxu0
        %v2171 = vadd.f32 %v2082, %v2170
        %2172 = vmatmul.bf16.gmra.mxu0 %v1184
        %v2173 = vpop.f32.mrf.mxu0
        %v2174 = vadd.f32 %v2085, %v2173
        %v2175 = vpop.f32.mrf.mxu0
        %v2176 = vadd.f32 %v2087, %v2175
        %2177 = vmatmul.bf16.gmra.mxu0 %v1196
        %v2178 = vpop.f32.mrf.mxu0
        %v2179 = vadd.f32 %v2090, %v2178
        %v2180 = vpop.f32.mrf.mxu0
        %v2181 = vadd.f32 %v2092, %v2180
        %2182 = vmatmul.bf16.gmra.mxu0 %v1208
        %v2183 = vpop.f32.mrf.mxu0
        %v2184 = vadd.f32 %v2095, %v2183
        %v2185 = vpop.f32.mrf.mxu0
        %v2186 = vadd.f32 %v2097, %v2185
        %2187 = vmatmul.bf16.gmra.mxu0 %v1220
        %v2188 = vpop.f32.mrf.mxu0
        %v2189 = vadd.f32 %v2100, %v2188
        %v2190 = vpop.f32.mrf.mxu0
        %v2191 = vadd.f32 %v2102, %v2190
        %2192 = vmatmul.bf16.gmra.mxu0 %v1232
        %v2193 = vpop.f32.mrf.mxu0
        %v2194 = vadd.f32 %v2105, %v2193
        %v2195 = vpop.f32.mrf.mxu0
        %v2196 = vadd.f32 %v2107, %v2195
        %2197 = vmatmul.bf16.gmra.mxu0 %v1244
        %v2198 = vpop.f32.mrf.mxu0
        %v2199 = vadd.f32 %v2110, %v2198
        %v2200 = vpop.f32.mrf.mxu0
        %v2201 = vadd.f32 %v2112, %v2200
        %2202 = vmatmul.bf16.gmra.mxu0 %v1256
        %v2203 = vpop.f32.mrf.mxu0
        %v2204 = vadd.f32 %v2115, %v2203
        %v2205 = vpop.f32.mrf.mxu0
        %v2206 = vadd.f32 %v2117, %v2205
        %2207 = vmatmul.bf16.gmra.mxu0 %v1268
        %v2208 = vpop.f32.mrf.mxu0
        %v2209 = vadd.f32 %v2120, %v2208
        %v2210 = vpop.f32.mrf.mxu0
        %v2211 = vadd.f32 %v2122, %v2210
        %2212 = vmatmul.bf16.gmra.mxu0 %v1280
        %v2213 = vpop.f32.mrf.mxu0
        %v2214 = vadd.f32 %v2125, %v2213
        %v2215 = vpop.f32.mrf.mxu0
        %v2216 = vadd.f32 %v2127, %v2215
        %2217 = vmatmul.bf16.gmra.mxu0 %v1292
        %v2218 = vpop.f32.mrf.mxu0
        %v2219 = vadd.f32 %v2130, %v2218
        %v2220 = vpop.f32.mrf.mxu0
        %v2221 = vadd.f32 %v2132, %v2220
        %2222 = vmatmul.bf16.gmra.mxu0 %v1304
        %v2223 = vpop.f32.mrf.mxu0
        %v2224 = vadd.f32 %v2135, %v2223
        %v2225 = vpop.f32.mrf.mxu0
        %v2226 = vadd.f32 %v2137, %v2225
        %2227 = vmatmul.bf16.gmra.mxu0 %v1316
        %v2228 = vpop.f32.mrf.mxu0
        %v2229 = vadd.f32 %v2140, %v2228
        %v2230 = vpop.f32.mrf.mxu0
        %v2231 = vadd.f32 %v2142, %v2230
        %2232 = vmatmul.bf16.gmra.mxu0 %v1328
        %v2233 = vpop.f32.mrf.mxu0
        %v2234 = vadd.f32 %v2145, %v2233
        %v2235 = vpop.f32.mrf.mxu0
        %v2236 = vadd.f32 %v2147, %v2235
        %2237 = vdwg.mxu0
        %2238 = vmatpush.bf16.msra.mxu0 %v1939
        %2239 = vmatpush.bf16.msra.mxu0 %v1938
        %2240 = vmatpush.bf16.msra.mxu0 %v1937
        %2241 = vmatpush.bf16.msra.mxu0 %v1936
        %2242 = vmatpush.bf16.msra.mxu0 %v1935
        %2243 = vmatpush.bf16.msra.mxu0 %v1934
        %2244 = vmatpush.bf16.msra.mxu0 %v1933
        %2245 = vmatpush.bf16.msra.mxu0 %v1932
        %2246 = vmatmul.bf16.gmra.mxu0 %v1380
        %v2247 = vpop.f32.mrf.mxu0
        %v2248 = vadd.f32 %v2159, %v2247
        %v2249 = vpop.f32.mrf.mxu0
        %v2250 = vadd.f32 %v2161, %v2249
        %2251 = vmatmul.bf16.gmra.mxu0 %v1383
        %v2252 = vpop.f32.mrf.mxu0
        %v2253 = vadd.f32 %v2164, %v2252
        %v2254 = vpop.f32.mrf.mxu0
        %v2255 = vadd.f32 %v2166, %v2254
        %2256 = vmatmul.bf16.gmra.mxu0 %v1386
        %v2257 = vpop.f32.mrf.mxu0
        %v2258 = vadd.f32 %v2169, %v2257
        %v2259 = vpop.f32.mrf.mxu0
        %v2260 = vadd.f32 %v2171, %v2259
        %2261 = vmatmul.bf16.gmra.mxu0 %v1389
        %v2262 = vpop.f32.mrf.mxu0
        %v2263 = vadd.f32 %v2174, %v2262
        %v2264 = vpop.f32.mrf.mxu0
        %v2265 = vadd.f32 %v2176, %v2264
        %2266 = vmatmul.bf16.gmra.mxu0 %v1392
        %v2267 = vpop.f32.mrf.mxu0
        %v2268 = vadd.f32 %v2179, %v2267
        %v2269 = vpop.f32.mrf.mxu0
        %v2270 = vadd.f32 %v2181, %v2269
        %2271 = vmatmul.bf16.gmra.mxu0 %v1395
        %v2272 = vpop.f32.mrf.mxu0
        %v2273 = vadd.f32 %v2184, %v2272
        %v2274 = vpop.f32.mrf.mxu0
        %v2275 = vadd.f32 %v2186, %v2274
        %2276 = vmatmul.bf16.gmra.mxu0 %v1398
        %v2277 = vpop.f32.mrf.mxu0
        %v2278 = vadd.f32 %v2189, %v2277
        %v2279 = vpop.f32.mrf.mxu0
        %v2280 = vadd.f32 %v2191, %v2279
        %2281 = vmatmul.bf16.gmra.mxu0 %v1401
        %v2282 = vpop.f32.mrf.mxu0
        %v2283 = vadd.f32 %v2194, %v2282
        %v2284 = vpop.f32.mrf.mxu0
        %v2285 = vadd.f32 %v2196, %v2284
        %2286 = vmatmul.bf16.gmra.mxu0 %v1404
        %v2287 = vpop.f32.mrf.mxu0
        %v2288 = vadd.f32 %v2199, %v2287
        %v2289 = vpop.f32.mrf.mxu0
        %v2290 = vadd.f32 %v2201, %v2289
        %2291 = vmatmul.bf16.gmra.mxu0 %v1407
        %v2292 = vpop.f32.mrf.mxu0
        %v2293 = vadd.f32 %v2204, %v2292
        %v2294 = vpop.f32.mrf.mxu0
        %v2295 = vadd.f32 %v2206, %v2294
        %2296 = vmatmul.bf16.gmra.mxu0 %v1410
        %v2297 = vpop.f32.mrf.mxu0
        %v2298 = vadd.f32 %v2209, %v2297
        %v2299 = vpop.f32.mrf.mxu0
        %v2300 = vadd.f32 %v2211, %v2299
        %2301 = vmatmul.bf16.gmra.mxu0 %v1413
        %v2302 = vpop.f32.mrf.mxu0
        %v2303 = vadd.f32 %v2214, %v2302
        %v2304 = vpop.f32.mrf.mxu0
        %v2305 = vadd.f32 %v2216, %v2304
        %2306 = vmatmul.bf16.gmra.mxu0 %v1416
        %v2307 = vpop.f32.mrf.mxu0
        %v2308 = vadd.f32 %v2219, %v2307
        %v2309 = vpop.f32.mrf.mxu0
        %v2310 = vadd.f32 %v2221, %v2309
        %2311 = vmatmul.bf16.gmra.mxu0 %v1419
        %v2312 = vpop.f32.mrf.mxu0
        %v2313 = vadd.f32 %v2224, %v2312
        %v2314 = vpop.f32.mrf.mxu0
        %v2315 = vadd.f32 %v2226, %v2314
        %2316 = vmatmul.bf16.gmra.mxu0 %v1422
        %v2317 = vpop.f32.mrf.mxu0
        %v2318 = vadd.f32 %v2229, %v2317
        %v2319 = vpop.f32.mrf.mxu0
        %v2320 = vadd.f32 %v2231, %v2319
        %2321 = vmatmul.bf16.gmra.mxu0 %v1425
        %v2322 = vpop.f32.mrf.mxu0
        %v2323 = vadd.f32 %v2234, %v2322
        %v2324 = vpop.f32.mrf.mxu0
        %v2325 = vadd.f32 %v2236, %v2324
        %2326 = vdwg.mxu0
        %2327 = vmatpush.bf16.msra.mxu0 %v1947
        %2328 = vmatpush.bf16.msra.mxu0 %v1946
        %2329 = vmatpush.bf16.msra.mxu0 %v1945
        %2330 = vmatpush.bf16.msra.mxu0 %v1944
        %2331 = vmatpush.bf16.msra.mxu0 %v1943
        %2332 = vmatpush.bf16.msra.mxu0 %v1942
        %2333 = vmatpush.bf16.msra.mxu0 %v1941
        %2334 = vmatpush.bf16.msra.mxu0 %v1940
        %2335 = vmatmul.bf16.gmra.mxu0 %v1101
        %v2336 = vpop.f32.mrf.mxu0
        %v2337 = vadd.f32 %v2248, %v2336
        %v2338 = vpop.f32.mrf.mxu0
        %v2339 = vadd.f32 %v2250, %v2338
        %2340 = vmatmul.bf16.gmra.mxu0 %v1102
        %v2341 = vpop.f32.mrf.mxu0
        %v2342 = vadd.f32 %v2253, %v2341
        %v2343 = vpop.f32.mrf.mxu0
        %v2344 = vadd.f32 %v2255, %v2343
        %2345 = vmatmul.bf16.gmra.mxu0 %v1103
        %v2346 = vpop.f32.mrf.mxu0
        %v2347 = vadd.f32 %v2258, %v2346
        %v2348 = vpop.f32.mrf.mxu0
        %v2349 = vadd.f32 %v2260, %v2348
        %2350 = vmatmul.bf16.gmra.mxu0 %v1104
        %v2351 = vpop.f32.mrf.mxu0
        %v2352 = vadd.f32 %v2263, %v2351
        %v2353 = vpop.f32.mrf.mxu0
        %v2354 = vadd.f32 %v2265, %v2353
        %2355 = vmatmul.bf16.gmra.mxu0 %v1105
        %v2356 = vpop.f32.mrf.mxu0
        %v2357 = vadd.f32 %v2268, %v2356
        %v2358 = vpop.f32.mrf.mxu0
        %v2359 = vadd.f32 %v2270, %v2358
        %2360 = vmatmul.bf16.gmra.mxu0 %v1106
        %v2361 = vpop.f32.mrf.mxu0
        %v2362 = vadd.f32 %v2273, %v2361
        %v2363 = vpop.f32.mrf.mxu0
        %v2364 = vadd.f32 %v2275, %v2363
        %2365 = vmatmul.bf16.gmra.mxu0 %v1107
        %v2366 = vpop.f32.mrf.mxu0
        %v2367 = vadd.f32 %v2278, %v2366
        %v2368 = vpop.f32.mrf.mxu0
        %v2369 = vadd.f32 %v2280, %v2368
        %2370 = vmatmul.bf16.gmra.mxu0 %v1108
        %v2371 = vpop.f32.mrf.mxu0
        %v2372 = vadd.f32 %v2283, %v2371
        %v2373 = vpop.f32.mrf.mxu0
        %v2374 = vadd.f32 %v2285, %v2373
        %2375 = vmatmul.bf16.gmra.mxu0 %v1109
        %v2376 = vpop.f32.mrf.mxu0
        %v2377 = vadd.f32 %v2288, %v2376
        %v2378 = vpop.f32.mrf.mxu0
        %v2379 = vadd.f32 %v2290, %v2378
        %2380 = vmatmul.bf16.gmra.mxu0 %v1110
        %v2381 = vpop.f32.mrf.mxu0
        %v2382 = vadd.f32 %v2293, %v2381
        %v2383 = vpop.f32.mrf.mxu0
        %v2384 = vadd.f32 %v2295, %v2383
        %2385 = vmatmul.bf16.gmra.mxu0 %v1111
        %v2386 = vpop.f32.mrf.mxu0
        %v2387 = vadd.f32 %v2298, %v2386
        %v2388 = vpop.f32.mrf.mxu0
        %v2389 = vadd.f32 %v2300, %v2388
        %2390 = vmatmul.bf16.gmra.mxu0 %v1112
        %v2391 = vpop.f32.mrf.mxu0
        %v2392 = vadd.f32 %v2303, %v2391
        %v2393 = vpop.f32.mrf.mxu0
        %v2394 = vadd.f32 %v2305, %v2393
        %2395 = vmatmul.bf16.gmra.mxu0 %v1113
        %v2396 = vpop.f32.mrf.mxu0
        %v2397 = vadd.f32 %v2308, %v2396
        %v2398 = vpop.f32.mrf.mxu0
        %v2399 = vadd.f32 %v2310, %v2398
        %2400 = vmatmul.bf16.gmra.mxu0 %v1114
        %v2401 = vpop.f32.mrf.mxu0
        %v2402 = vadd.f32 %v2313, %v2401
        %v2403 = vpop.f32.mrf.mxu0
        %v2404 = vadd.f32 %v2315, %v2403
        %2405 = vmatmul.bf16.gmra.mxu0 %v1115
        %v2406 = vpop.f32.mrf.mxu0
        %v2407 = vadd.f32 %v2318, %v2406
        %v2408 = vpop.f32.mrf.mxu0
        %v2409 = vadd.f32 %v2320, %v2408
        %2410 = vmatmul.bf16.gmra.mxu0 %v1116
        %v2411 = vpop.f32.mrf.mxu0
        %v2412 = vadd.f32 %v2323, %v2411
        %v2413 = vpop.f32.mrf.mxu0
        %v2414 = vadd.f32 %v2325, %v2413
        %2415 = vdwg.mxu0
        %2416 = vmatpush.bf16.msra.mxu0 %v1955
        %2417 = vmatpush.bf16.msra.mxu0 %v1954
        %2418 = vmatpush.bf16.msra.mxu0 %v1953
        %2419 = vmatpush.bf16.msra.mxu0 %v1952
        %2420 = vmatpush.bf16.msra.mxu0 %v1951
        %2421 = vmatpush.bf16.msra.mxu0 %v1950
        %2422 = vmatpush.bf16.msra.mxu0 %v1949
        %2423 = vmatpush.bf16.msra.mxu0 %v1948
        %2424 = vmatmul.bf16.gmra.mxu0 %v1160
        %v2425 = vpop.f32.mrf.mxu0
        %v2426 = vadd.f32 %v2337, %v2425
        %v2427 = vpop.f32.mrf.mxu0
        %v2428 = vadd.f32 %v2339, %v2427
        %2429 = vmatmul.bf16.gmra.mxu0 %v1172
        %v2430 = vpop.f32.mrf.mxu0
        %v2431 = vadd.f32 %v2342, %v2430
        %v2432 = vpop.f32.mrf.mxu0
        %v2433 = vadd.f32 %v2344, %v2432
        %2434 = vmatmul.bf16.gmra.mxu0 %v1184
        %v2435 = vpop.f32.mrf.mxu0
        %v2436 = vadd.f32 %v2347, %v2435
        %v2437 = vpop.f32.mrf.mxu0
        %v2438 = vadd.f32 %v2349, %v2437
        %2439 = vmatmul.bf16.gmra.mxu0 %v1196
        %v2440 = vpop.f32.mrf.mxu0
        %v2441 = vadd.f32 %v2352, %v2440
        %v2442 = vpop.f32.mrf.mxu0
        %v2443 = vadd.f32 %v2354, %v2442
        %2444 = vmatmul.bf16.gmra.mxu0 %v1208
        %v2445 = vpop.f32.mrf.mxu0
        %v2446 = vadd.f32 %v2357, %v2445
        %v2447 = vpop.f32.mrf.mxu0
        %v2448 = vadd.f32 %v2359, %v2447
        %2449 = vmatmul.bf16.gmra.mxu0 %v1220
        %v2450 = vpop.f32.mrf.mxu0
        %v2451 = vadd.f32 %v2362, %v2450
        %v2452 = vpop.f32.mrf.mxu0
        %v2453 = vadd.f32 %v2364, %v2452
        %2454 = vmatmul.bf16.gmra.mxu0 %v1232
        %v2455 = vpop.f32.mrf.mxu0
        %v2456 = vadd.f32 %v2367, %v2455
        %v2457 = vpop.f32.mrf.mxu0
        %v2458 = vadd.f32 %v2369, %v2457
        %2459 = vmatmul.bf16.gmra.mxu0 %v1244
        %v2460 = vpop.f32.mrf.mxu0
        %v2461 = vadd.f32 %v2372, %v2460
        %v2462 = vpop.f32.mrf.mxu0
        %v2463 = vadd.f32 %v2374, %v2462
        %2464 = vmatmul.bf16.gmra.mxu0 %v1256
        %v2465 = vpop.f32.mrf.mxu0
        %v2466 = vadd.f32 %v2377, %v2465
        %v2467 = vpop.f32.mrf.mxu0
        %v2468 = vadd.f32 %v2379, %v2467
        %2469 = vmatmul.bf16.gmra.mxu0 %v1268
        %v2470 = vpop.f32.mrf.mxu0
        %v2471 = vadd.f32 %v2382, %v2470
        %v2472 = vpop.f32.mrf.mxu0
        %v2473 = vadd.f32 %v2384, %v2472
        %2474 = vmatmul.bf16.gmra.mxu0 %v1280
        %v2475 = vpop.f32.mrf.mxu0
        %v2476 = vadd.f32 %v2387, %v2475
        %v2477 = vpop.f32.mrf.mxu0
        %v2478 = vadd.f32 %v2389, %v2477
        %2479 = vmatmul.bf16.gmra.mxu0 %v1292
        %v2480 = vpop.f32.mrf.mxu0
        %v2481 = vadd.f32 %v2392, %v2480
        %v2482 = vpop.f32.mrf.mxu0
        %v2483 = vadd.f32 %v2394, %v2482
        %2484 = vmatmul.bf16.gmra.mxu0 %v1304
        %v2485 = vpop.f32.mrf.mxu0
        %v2486 = vadd.f32 %v2397, %v2485
        %v2487 = vpop.f32.mrf.mxu0
        %v2488 = vadd.f32 %v2399, %v2487
        %2489 = vmatmul.bf16.gmra.mxu0 %v1316
        %v2490 = vpop.f32.mrf.mxu0
        %v2491 = vadd.f32 %v2402, %v2490
        %v2492 = vpop.f32.mrf.mxu0
        %v2493 = vadd.f32 %v2404, %v2492
        %2494 = vmatmul.bf16.gmra.mxu0 %v1328
        %v2495 = vpop.f32.mrf.mxu0
        %v2496 = vadd.f32 %v2407, %v2495
        %v2497 = vpop.f32.mrf.mxu0
        %v2498 = vadd.f32 %v2409, %v2497
        %2499 = vmatmul.bf16.gmra.mxu0 %v1453
        %v2500 = vpop.f32.mrf.mxu0
        %v2501 = vadd.f32 %v2412, %v2500
        %v2502 = vpop.f32.mrf.mxu0
        %v2503 = vadd.f32 %v2414, %v2502
        %2504 = vdwg.mxu0
        %2505 = vmatpush.bf16.msra.mxu0 %v1963
        %2506 = vmatpush.bf16.msra.mxu0 %v1962
        %2507 = vmatpush.bf16.msra.mxu0 %v1961
        %2508 = vmatpush.bf16.msra.mxu0 %v1960
        %2509 = vmatpush.bf16.msra.mxu0 %v1959
        %2510 = vmatpush.bf16.msra.mxu0 %v1958
        %2511 = vmatpush.bf16.msra.mxu0 %v1957
        %2512 = vmatpush.bf16.msra.mxu0 %v1956
        %2513 = vmatmul.bf16.gmra.mxu0 %v1383
        %v2514 = vpop.f32.mrf.mxu0
        %v2515 = vadd.f32 %v2426, %v2514
        %v2516 = vpop.f32.mrf.mxu0
        %v2517 = vadd.f32 %v2428, %v2516
        %2518 = vmatmul.bf16.gmra.mxu0 %v1386
        %v2519 = vpop.f32.mrf.mxu0
        %v2520 = vadd.f32 %v2431, %v2519
        %v2521 = vpop.f32.mrf.mxu0
        %v2522 = vadd.f32 %v2433, %v2521
        %2523 = vmatmul.bf16.gmra.mxu0 %v1389
        %v2524 = vpop.f32.mrf.mxu0
        %v2525 = vadd.f32 %v2436, %v2524
        %v2526 = vpop.f32.mrf.mxu0
        %v2527 = vadd.f32 %v2438, %v2526
        %2528 = vmatmul.bf16.gmra.mxu0 %v1392
        %v2529 = vpop.f32.mrf.mxu0
        %v2530 = vadd.f32 %v2441, %v2529
        %v2531 = vpop.f32.mrf.mxu0
        %v2532 = vadd.f32 %v2443, %v2531
        %2533 = vmatmul.bf16.gmra.mxu0 %v1395
        %v2534 = vpop.f32.mrf.mxu0
        %v2535 = vadd.f32 %v2446, %v2534
        %v2536 = vpop.f32.mrf.mxu0
        %v2537 = vadd.f32 %v2448, %v2536
        %2538 = vmatmul.bf16.gmra.mxu0 %v1398
        %v2539 = vpop.f32.mrf.mxu0
        %v2540 = vadd.f32 %v2451, %v2539
        %v2541 = vpop.f32.mrf.mxu0
        %v2542 = vadd.f32 %v2453, %v2541
        %2543 = vmatmul.bf16.gmra.mxu0 %v1401
        %v2544 = vpop.f32.mrf.mxu0
        %v2545 = vadd.f32 %v2456, %v2544
        %v2546 = vpop.f32.mrf.mxu0
        %v2547 = vadd.f32 %v2458, %v2546
        %2548 = vmatmul.bf16.gmra.mxu0 %v1404
        %v2549 = vpop.f32.mrf.mxu0
        %v2550 = vadd.f32 %v2461, %v2549
        %v2551 = vpop.f32.mrf.mxu0
        %v2552 = vadd.f32 %v2463, %v2551
        %2553 = vmatmul.bf16.gmra.mxu0 %v1407
        %v2554 = vpop.f32.mrf.mxu0
        %v2555 = vadd.f32 %v2466, %v2554
        %v2556 = vpop.f32.mrf.mxu0
        %v2557 = vadd.f32 %v2468, %v2556
        %2558 = vmatmul.bf16.gmra.mxu0 %v1410
        %v2559 = vpop.f32.mrf.mxu0
        %v2560 = vadd.f32 %v2471, %v2559
        %v2561 = vpop.f32.mrf.mxu0
        %v2562 = vadd.f32 %v2473, %v2561
        %2563 = vmatmul.bf16.gmra.mxu0 %v1413
        %v2564 = vpop.f32.mrf.mxu0
        %v2565 = vadd.f32 %v2476, %v2564
        %v2566 = vpop.f32.mrf.mxu0
        %v2567 = vadd.f32 %v2478, %v2566
        %2568 = vmatmul.bf16.gmra.mxu0 %v1416
        %v2569 = vpop.f32.mrf.mxu0
        %v2570 = vadd.f32 %v2481, %v2569
        %v2571 = vpop.f32.mrf.mxu0
        %v2572 = vadd.f32 %v2483, %v2571
        %2573 = vmatmul.bf16.gmra.mxu0 %v1419
        %v2574 = vpop.f32.mrf.mxu0
        %v2575 = vadd.f32 %v2486, %v2574
        %v2576 = vpop.f32.mrf.mxu0
        %v2577 = vadd.f32 %v2488, %v2576
        %2578 = vmatmul.bf16.gmra.mxu0 %v1422
        %v2579 = vpop.f32.mrf.mxu0
        %v2580 = vadd.f32 %v2491, %v2579
        %v2581 = vpop.f32.mrf.mxu0
        %v2582 = vadd.f32 %v2493, %v2581
        %2583 = vmatmul.bf16.gmra.mxu0 %v1425
        %v2584 = vpop.f32.mrf.mxu0
        %v2585 = vadd.f32 %v2496, %v2584
        %v2586 = vpop.f32.mrf.mxu0
        %v2587 = vadd.f32 %v2498, %v2586
        %2588 = vmatmul.bf16.gmra.mxu0 %v1459
        %v2589 = vpop.f32.mrf.mxu0
        %v2590 = vadd.f32 %v2501, %v2589
        %v2591 = vpop.f32.mrf.mxu0
        %v2592 = vadd.f32 %v2503, %v2591
        %2593 = vdwg.mxu0
        %2594 = vmatpush.bf16.msra.mxu0 %v1971
        %2595 = vmatpush.bf16.msra.mxu0 %v1970
        %2596 = vmatpush.bf16.msra.mxu0 %v1969
        %2597 = vmatpush.bf16.msra.mxu0 %v1968
        %2598 = vmatpush.bf16.msra.mxu0 %v1967
        %2599 = vmatpush.bf16.msra.mxu0 %v1966
        %2600 = vmatpush.bf16.msra.mxu0 %v1965
        %2601 = vmatpush.bf16.msra.mxu0 %v1964
        %2602 = vmatmul.bf16.gmra.mxu0 %v1102
        %v2603 = vpop.f32.mrf.mxu0
        %v2604 = vadd.f32 %v2515, %v2603
        %v2605 = vpop.f32.mrf.mxu0
        %v2606 = vadd.f32 %v2517, %v2605
        %2607 = vmatmul.bf16.gmra.mxu0 %v1103
        %v2608 = vpop.f32.mrf.mxu0
        %v2609 = vadd.f32 %v2520, %v2608
        %v2610 = vpop.f32.mrf.mxu0
        %v2611 = vadd.f32 %v2522, %v2610
        %2612 = vmatmul.bf16.gmra.mxu0 %v1104
        %v2613 = vpop.f32.mrf.mxu0
        %v2614 = vadd.f32 %v2525, %v2613
        %v2615 = vpop.f32.mrf.mxu0
        %v2616 = vadd.f32 %v2527, %v2615
        %2617 = vmatmul.bf16.gmra.mxu0 %v1105
        %v2618 = vpop.f32.mrf.mxu0
        %v2619 = vadd.f32 %v2530, %v2618
        %v2620 = vpop.f32.mrf.mxu0
        %v2621 = vadd.f32 %v2532, %v2620
        %2622 = vmatmul.bf16.gmra.mxu0 %v1106
        %v2623 = vpop.f32.mrf.mxu0
        %v2624 = vadd.f32 %v2535, %v2623
        %v2625 = vpop.f32.mrf.mxu0
        %v2626 = vadd.f32 %v2537, %v2625
        %2627 = vmatmul.bf16.gmra.mxu0 %v1107
        %v2628 = vpop.f32.mrf.mxu0
        %v2629 = vadd.f32 %v2540, %v2628
        %v2630 = vpop.f32.mrf.mxu0
        %v2631 = vadd.f32 %v2542, %v2630
        %2632 = vmatmul.bf16.gmra.mxu0 %v1108
        %v2633 = vpop.f32.mrf.mxu0
        %v2634 = vadd.f32 %v2545, %v2633
        %v2635 = vpop.f32.mrf.mxu0
        %v2636 = vadd.f32 %v2547, %v2635
        %2637 = vmatmul.bf16.gmra.mxu0 %v1109
        %v2638 = vpop.f32.mrf.mxu0
        %v2639 = vadd.f32 %v2550, %v2638
        %v2640 = vpop.f32.mrf.mxu0
        %v2641 = vadd.f32 %v2552, %v2640
        %2642 = vmatmul.bf16.gmra.mxu0 %v1110
        %v2643 = vpop.f32.mrf.mxu0
        %v2644 = vadd.f32 %v2555, %v2643
        %v2645 = vpop.f32.mrf.mxu0
        %v2646 = vadd.f32 %v2557, %v2645
        %2647 = vmatmul.bf16.gmra.mxu0 %v1111
        %v2648 = vpop.f32.mrf.mxu0
        %v2649 = vadd.f32 %v2560, %v2648
        %v2650 = vpop.f32.mrf.mxu0
        %v2651 = vadd.f32 %v2562, %v2650
        %2652 = vmatmul.bf16.gmra.mxu0 %v1112
        %v2653 = vpop.f32.mrf.mxu0
        %v2654 = vadd.f32 %v2565, %v2653
        %v2655 = vpop.f32.mrf.mxu0
        %v2656 = vadd.f32 %v2567, %v2655
        %2657 = vmatmul.bf16.gmra.mxu0 %v1113
        %v2658 = vpop.f32.mrf.mxu0
        %v2659 = vadd.f32 %v2570, %v2658
        %v2660 = vpop.f32.mrf.mxu0
        %v2661 = vadd.f32 %v2572, %v2660
        %2662 = vmatmul.bf16.gmra.mxu0 %v1114
        %v2663 = vpop.f32.mrf.mxu0
        %v2664 = vadd.f32 %v2575, %v2663
        %v2665 = vpop.f32.mrf.mxu0
        %v2666 = vadd.f32 %v2577, %v2665
        %2667 = vmatmul.bf16.gmra.mxu0 %v1115
        %v2668 = vpop.f32.mrf.mxu0
        %v2669 = vadd.f32 %v2580, %v2668
        %v2670 = vpop.f32.mrf.mxu0
        %v2671 = vadd.f32 %v2582, %v2670
        %2672 = vmatmul.bf16.gmra.mxu0 %v1116
        %v2673 = vpop.f32.mrf.mxu0
        %v2674 = vadd.f32 %v2585, %v2673
        %v2675 = vpop.f32.mrf.mxu0
        %v2676 = vadd.f32 %v2587, %v2675
        %2677 = vmatmul.bf16.gmra.mxu0 %v1117
        %v2678 = vpop.f32.mrf.mxu0
        %v2679 = vadd.f32 %v2590, %v2678
        %v2680 = vpop.f32.mrf.mxu0
        %v2681 = vadd.f32 %v2592, %v2680
        %2682 = vdwg.mxu0
        %2683 = vmatpush.bf16.msra.mxu0 %v1979
        %2684 = vmatpush.bf16.msra.mxu0 %v1978
        %2685 = vmatpush.bf16.msra.mxu0 %v1977
        %2686 = vmatpush.bf16.msra.mxu0 %v1976
        %2687 = vmatpush.bf16.msra.mxu0 %v1975
        %2688 = vmatpush.bf16.msra.mxu0 %v1974
        %2689 = vmatpush.bf16.msra.mxu0 %v1973
        %2690 = vmatpush.bf16.msra.mxu0 %v1972
        %2691 = vmatmul.bf16.gmra.mxu0 %v1172
        %v2692 = vpop.f32.mrf.mxu0
        %v2693 = vadd.f32 %v2604, %v2692
        %v2694 = vpop.f32.mrf.mxu0
        %v2695 = vadd.f32 %v2606, %v2694
        %2696 = vmatmul.bf16.gmra.mxu0 %v1184
        %v2697 = vpop.f32.mrf.mxu0
        %v2698 = vadd.f32 %v2609, %v2697
        %v2699 = vpop.f32.mrf.mxu0
        %v2700 = vadd.f32 %v2611, %v2699
        %2701 = vmatmul.bf16.gmra.mxu0 %v1196
        %v2702 = vpop.f32.mrf.mxu0
        %v2703 = vadd.f32 %v2614, %v2702
        %v2704 = vpop.f32.mrf.mxu0
        %v2705 = vadd.f32 %v2616, %v2704
        %2706 = vmatmul.bf16.gmra.mxu0 %v1208
        %v2707 = vpop.f32.mrf.mxu0
        %v2708 = vadd.f32 %v2619, %v2707
        %v2709 = vpop.f32.mrf.mxu0
        %v2710 = vadd.f32 %v2621, %v2709
        %2711 = vmatmul.bf16.gmra.mxu0 %v1220
        %v2712 = vpop.f32.mrf.mxu0
        %v2713 = vadd.f32 %v2624, %v2712
        %v2714 = vpop.f32.mrf.mxu0
        %v2715 = vadd.f32 %v2626, %v2714
        %2716 = vmatmul.bf16.gmra.mxu0 %v1232
        %v2717 = vpop.f32.mrf.mxu0
        %v2718 = vadd.f32 %v2629, %v2717
        %v2719 = vpop.f32.mrf.mxu0
        %v2720 = vadd.f32 %v2631, %v2719
        %2721 = vmatmul.bf16.gmra.mxu0 %v1244
        %v2722 = vpop.f32.mrf.mxu0
        %v2723 = vadd.f32 %v2634, %v2722
        %v2724 = vpop.f32.mrf.mxu0
        %v2725 = vadd.f32 %v2636, %v2724
        %2726 = vmatmul.bf16.gmra.mxu0 %v1256
        %v2727 = vpop.f32.mrf.mxu0
        %v2728 = vadd.f32 %v2639, %v2727
        %v2729 = vpop.f32.mrf.mxu0
        %v2730 = vadd.f32 %v2641, %v2729
        %2731 = vmatmul.bf16.gmra.mxu0 %v1268
        %v2732 = vpop.f32.mrf.mxu0
        %v2733 = vadd.f32 %v2644, %v2732
        %v2734 = vpop.f32.mrf.mxu0
        %v2735 = vadd.f32 %v2646, %v2734
        %2736 = vmatmul.bf16.gmra.mxu0 %v1280
        %v2737 = vpop.f32.mrf.mxu0
        %v2738 = vadd.f32 %v2649, %v2737
        %v2739 = vpop.f32.mrf.mxu0
        %v2740 = vadd.f32 %v2651, %v2739
        %2741 = vmatmul.bf16.gmra.mxu0 %v1292
        %v2742 = vpop.f32.mrf.mxu0
        %v2743 = vadd.f32 %v2654, %v2742
        %v2744 = vpop.f32.mrf.mxu0
        %v2745 = vadd.f32 %v2656, %v2744
        %2746 = vmatmul.bf16.gmra.mxu0 %v1304
        %v2747 = vpop.f32.mrf.mxu0
        %v2748 = vadd.f32 %v2659, %v2747
        %v2749 = vpop.f32.mrf.mxu0
        %v2750 = vadd.f32 %v2661, %v2749
        %2751 = vmatmul.bf16.gmra.mxu0 %v1316
        %v2752 = vpop.f32.mrf.mxu0
        %v2753 = vadd.f32 %v2664, %v2752
        %v2754 = vpop.f32.mrf.mxu0
        %v2755 = vadd.f32 %v2666, %v2754
        %2756 = vmatmul.bf16.gmra.mxu0 %v1328
        %v2757 = vpop.f32.mrf.mxu0
        %v2758 = vadd.f32 %v2669, %v2757
        %v2759 = vpop.f32.mrf.mxu0
        %v2760 = vadd.f32 %v2671, %v2759
        %2761 = vmatmul.bf16.gmra.mxu0 %v1453
        %v2762 = vpop.f32.mrf.mxu0
        %v2763 = vadd.f32 %v2674, %v2762
        %v2764 = vpop.f32.mrf.mxu0
        %v2765 = vadd.f32 %v2676, %v2764
        %2766 = vmatmul.bf16.gmra.mxu0 %v1472
        %v2767 = vpop.f32.mrf.mxu0
        %v2768 = vadd.f32 %v2679, %v2767
        %v2769 = vpop.f32.mrf.mxu0
        %v2770 = vadd.f32 %v2681, %v2769
        %2771 = vdwg.mxu0
        %2772 = vmatpush.bf16.msra.mxu0 %v1987
        %2773 = vmatpush.bf16.msra.mxu0 %v1986
        %2774 = vmatpush.bf16.msra.mxu0 %v1985
        %2775 = vmatpush.bf16.msra.mxu0 %v1984
        %2776 = vmatpush.bf16.msra.mxu0 %v1983
        %2777 = vmatpush.bf16.msra.mxu0 %v1982
        %2778 = vmatpush.bf16.msra.mxu0 %v1981
        %2779 = vmatpush.bf16.msra.mxu0 %v1980
        %2780 = vmatmul.bf16.gmra.mxu0 %v1386
        %v2781 = vpop.f32.mrf.mxu0
        %v2782 = vadd.f32 %v2693, %v2781
        %v2783 = vpop.f32.mrf.mxu0
        %v2784 = vadd.f32 %v2695, %v2783
        %2785 = vmatmul.bf16.gmra.mxu0 %v1389
        %v2786 = vpop.f32.mrf.mxu0
        %v2787 = vadd.f32 %v2698, %v2786
        %v2788 = vpop.f32.mrf.mxu0
        %v2789 = vadd.f32 %v2700, %v2788
        %2790 = vmatmul.bf16.gmra.mxu0 %v1392
        %v2791 = vpop.f32.mrf.mxu0
        %v2792 = vadd.f32 %v2703, %v2791
        %v2793 = vpop.f32.mrf.mxu0
        %v2794 = vadd.f32 %v2705, %v2793
        %2795 = vmatmul.bf16.gmra.mxu0 %v1395
        %v2796 = vpop.f32.mrf.mxu0
        %v2797 = vadd.f32 %v2708, %v2796
        %v2798 = vpop.f32.mrf.mxu0
        %v2799 = vadd.f32 %v2710, %v2798
        %2800 = vmatmul.bf16.gmra.mxu0 %v1398
        %v2801 = vpop.f32.mrf.mxu0
        %v2802 = vadd.f32 %v2713, %v2801
        %v2803 = vpop.f32.mrf.mxu0
        %v2804 = vadd.f32 %v2715, %v2803
        %2805 = vmatmul.bf16.gmra.mxu0 %v1401
        %v2806 = vpop.f32.mrf.mxu0
        %v2807 = vadd.f32 %v2718, %v2806
        %v2808 = vpop.f32.mrf.mxu0
        %v2809 = vadd.f32 %v2720, %v2808
        %2810 = vmatmul.bf16.gmra.mxu0 %v1404
        %v2811 = vpop.f32.mrf.mxu0
        %v2812 = vadd.f32 %v2723, %v2811
        %v2813 = vpop.f32.mrf.mxu0
        %v2814 = vadd.f32 %v2725, %v2813
        %2815 = vmatmul.bf16.gmra.mxu0 %v1407
        %v2816 = vpop.f32.mrf.mxu0
        %v2817 = vadd.f32 %v2728, %v2816
        %v2818 = vpop.f32.mrf.mxu0
        %v2819 = vadd.f32 %v2730, %v2818
        %2820 = vmatmul.bf16.gmra.mxu0 %v1410
        %v2821 = vpop.f32.mrf.mxu0
        %v2822 = vadd.f32 %v2733, %v2821
        %v2823 = vpop.f32.mrf.mxu0
        %v2824 = vadd.f32 %v2735, %v2823
        %2825 = vmatmul.bf16.gmra.mxu0 %v1413
        %v2826 = vpop.f32.mrf.mxu0
        %v2827 = vadd.f32 %v2738, %v2826
        %v2828 = vpop.f32.mrf.mxu0
        %v2829 = vadd.f32 %v2740, %v2828
        %2830 = vmatmul.bf16.gmra.mxu0 %v1416
        %v2831 = vpop.f32.mrf.mxu0
        %v2832 = vadd.f32 %v2743, %v2831
        %v2833 = vpop.f32.mrf.mxu0
        %v2834 = vadd.f32 %v2745, %v2833
        %2835 = vmatmul.bf16.gmra.mxu0 %v1419
        %v2836 = vpop.f32.mrf.mxu0
        %v2837 = vadd.f32 %v2748, %v2836
        %v2838 = vpop.f32.mrf.mxu0
        %v2839 = vadd.f32 %v2750, %v2838
        %2840 = vmatmul.bf16.gmra.mxu0 %v1422
        %v2841 = vpop.f32.mrf.mxu0
        %v2842 = vadd.f32 %v2753, %v2841
        %v2843 = vpop.f32.mrf.mxu0
        %v2844 = vadd.f32 %v2755, %v2843
        %2845 = vmatmul.bf16.gmra.mxu0 %v1425
        %v2846 = vpop.f32.mrf.mxu0
        %v2847 = vadd.f32 %v2758, %v2846
        %v2848 = vpop.f32.mrf.mxu0
        %v2849 = vadd.f32 %v2760, %v2848
        %2850 = vmatmul.bf16.gmra.mxu0 %v1459
        %v2851 = vpop.f32.mrf.mxu0
        %v2852 = vadd.f32 %v2763, %v2851
        %v2853 = vpop.f32.mrf.mxu0
        %v2854 = vadd.f32 %v2765, %v2853
        %2855 = vmatmul.bf16.gmra.mxu0 %v1478
        %v2856 = vpop.f32.mrf.mxu0
        %v2857 = vadd.f32 %v2768, %v2856
        %v2858 = vpop.f32.mrf.mxu0
        %v2859 = vadd.f32 %v2770, %v2858
        %2860 = vdwg.mxu0
        %v2861 = vmax.f32 %v2782, 0.0
        %v2862 = vmax.f32 %v2784, 0.0
        %v2863 = vmax.f32 %v2787, 0.0
        %v2864 = vmax.f32 %v2789, 0.0
        %v2865 = vmax.f32 %v2792, 0.0
        %v2866 = vmax.f32 %v2794, 0.0
        %v2867 = vmax.f32 %v2797, 0.0
        %v2868 = vmax.f32 %v2799, 0.0
        %v2869 = vmax.f32 %v2802, 0.0
        %v2870 = vmax.f32 %v2804, 0.0
        %v2871 = vmax.f32 %v2807, 0.0
        %v2872 = vmax.f32 %v2809, 0.0
        %v2873 = vmax.f32 %v2812, 0.0
        %v2874 = vmax.f32 %v2814, 0.0
        %v2875 = vmax.f32 %v2817, 0.0
        %v2876 = vmax.f32 %v2819, 0.0
        %v2877 = vmax.f32 %v2822, 0.0
        %v2878 = vmax.f32 %v2824, 0.0
        %v2879 = vmax.f32 %v2827, 0.0
        %v2880 = vmax.f32 %v2829, 0.0
        %v2881 = vmax.f32 %v2832, 0.0
        %v2882 = vmax.f32 %v2834, 0.0
        %v2883 = vmax.f32 %v2837, 0.0
        %v2884 = vmax.f32 %v2839, 0.0
        %v2885 = vmax.f32 %v2842, 0.0
        %v2886 = vmax.f32 %v2844, 0.0
        %v2887 = vmax.f32 %v2847, 0.0
        %v2888 = vmax.f32 %v2849, 0.0
        %v2889 = vmax.f32 %v2852, 0.0
        %v2890 = vmax.f32 %v2854, 0.0
        %v2891 = vmax.f32 %v2857, 0.0
        %v2892 = vmax.f32 %v2859, 0.0
        %v2893 = vpack.c.bf16 %v2862, %v2861
        %v2894 = vpack.c.bf16 %v2864, %v2863
        %v2895 = vpack.c.bf16 %v2866, %v2865
        %v2896 = vpack.c.bf16 %v2868, %v2867
        %v2897 = vpack.c.bf16 %v2870, %v2869
        %v2898 = vpack.c.bf16 %v2872, %v2871
        %v2899 = vpack.c.bf16 %v2874, %v2873
        %v2900 = vpack.c.bf16 %v2876, %v2875
        %v2901 = vpack.c.bf16 %v2878, %v2877
        %v2902 = vpack.c.bf16 %v2880, %v2879
        %v2903 = vpack.c.bf16 %v2882, %v2881
        %v2904 = vpack.c.bf16 %v2884, %v2883
        %v2905 = vpack.c.bf16 %v2886, %v2885
        %v2906 = vpack.c.bf16 %v2888, %v2887
        %v2907 = vpack.c.bf16 %v2890, %v2889
        %v2908 = vpack.c.bf16 %v2892, %v2891
        %v2909 = vld [vmem:[#allocation9] sm:$0xf]
        %v2910 = vld [vmem:[#allocation9 + $0x4] sm:$0xf]
        %v2911 = vld [vmem:[#allocation9 + $0x8] sm:$0xf]
        %v2912 = vld [vmem:[#allocation9 + $0xc] sm:$0xf]
        %v2913 = vld [vmem:[#allocation9 + $0x10] sm:$0xf]
        %v2914 = vld [vmem:[#allocation9 + $0x14] sm:$0xf]
        %v2915 = vld [vmem:[#allocation9 + $0x18] sm:$0xf]
        %v2916 = vld [vmem:[#allocation9 + $0x1c] sm:$0xf]
        %v2917 = vld [vmem:[#allocation9 + $0x20] sm:$0xf]
        %v2918 = vld [vmem:[#allocation9 + $0x24] sm:$0xf]
        %v2919 = vld [vmem:[#allocation9 + $0x28] sm:$0xf]
        %v2920 = vld [vmem:[#allocation9 + $0x2c] sm:$0xf]
        %v2921 = vld [vmem:[#allocation9 + $0x30] sm:$0xf]
        %v2922 = vld [vmem:[#allocation9 + $0x34] sm:$0xf]
        %v2923 = vld [vmem:[#allocation9 + $0x38] sm:$0xf]
        %v2924 = vld [vmem:[#allocation9 + $0x3c] sm:$0xf]
        %v2925 = vld [vmem:[%s6] sm:$0x1]
        %v2927 = vperm.slane %v2925, 0
        %v2945 = vunpack.c.l.b16 %v2909
        %v2946 = vunpack.c.l.b16 %v2910
        %v2947 = vunpack.c.l.b16 %v2911
        %v2948 = vunpack.c.l.b16 %v2912
        %v2949 = vunpack.c.l.b16 %v2913
        %v2950 = vunpack.c.l.b16 %v2914
        %v2951 = vunpack.c.l.b16 %v2915
        %v2952 = vunpack.c.l.b16 %v2916
        %v2953 = vunpack.c.l.b16 %v2917
        %v2954 = vunpack.c.l.b16 %v2918
        %v2955 = vunpack.c.l.b16 %v2919
        %v2956 = vunpack.c.l.b16 %v2920
        %v2957 = vunpack.c.l.b16 %v2921
        %v2958 = vunpack.c.l.b16 %v2922
        %v2959 = vunpack.c.l.b16 %v2923
        %v2960 = vunpack.c.l.b16 %v2924
        %v2961 = vpack.c.b16 %v2946, %v2945
        %v2962 = vpack.c.b16 %v2948, %v2947
        %v2963 = vpack.c.b16 %v2950, %v2949
        %v2964 = vpack.c.b16 %v2952, %v2951
        %v2965 = vpack.c.b16 %v2954, %v2953
        %v2966 = vpack.c.b16 %v2956, %v2955
        %v2967 = vpack.c.b16 %v2958, %v2957
        %v2968 = vpack.c.b16 %v2960, %v2959
        %2977 = vmatpush.bf16.msra.mxu0 %v2968
        %2978 = vmatpush.bf16.msra.mxu0 %v2967
        %2979 = vmatpush.bf16.msra.mxu0 %v2966
        %2980 = vmatpush.bf16.msra.mxu0 %v2965
        %2981 = vmatpush.bf16.msra.mxu0 %v2964
        %2982 = vmatpush.bf16.msra.mxu0 %v2963
        %2983 = vmatpush.bf16.msra.mxu0 %v2962
        %2984 = vmatpush.bf16.msra.mxu0 %v2961
        %2985 = vmatmul.bf16.gmra.mxu0 %v2893
        %v2986 = vpop.f32.mrf.mxu0
        %v2987 = vadd.f32 %v2927, %v2986
        %v2988 = vpop.f32.mrf.mxu0
        %v2989 = vadd.f32 %v2927, %v2988
        %2990 = vmatmul.bf16.gmra.mxu0 %v2894
        %v2991 = vpop.f32.mrf.mxu0
        %v2992 = vadd.f32 %v2927, %v2991
        %v2993 = vpop.f32.mrf.mxu0
        %v2994 = vadd.f32 %v2927, %v2993
        %2995 = vmatmul.bf16.gmra.mxu0 %v2895
        %v2996 = vpop.f32.mrf.mxu0
        %v2997 = vadd.f32 %v2927, %v2996
        %v2998 = vpop.f32.mrf.mxu0
        %v2999 = vadd.f32 %v2927, %v2998
        %3000 = vmatmul.bf16.gmra.mxu0 %v2896
        %v3001 = vpop.f32.mrf.mxu0
        %v3002 = vadd.f32 %v2927, %v3001
        %v3003 = vpop.f32.mrf.mxu0
        %v3004 = vadd.f32 %v2927, %v3003
        %3005 = vmatmul.bf16.gmra.mxu0 %v2897
        %v3006 = vpop.f32.mrf.mxu0
        %v3007 = vadd.f32 %v2927, %v3006
        %v3008 = vpop.f32.mrf.mxu0
        %v3009 = vadd.f32 %v2927, %v3008
        %3010 = vmatmul.bf16.gmra.mxu0 %v2898
        %v3011 = vpop.f32.mrf.mxu0
        %v3012 = vadd.f32 %v2927, %v3011
        %v3013 = vpop.f32.mrf.mxu0
        %v3014 = vadd.f32 %v2927, %v3013
        %3015 = vmatmul.bf16.gmra.mxu0 %v2899
        %v3016 = vpop.f32.mrf.mxu0
        %v3017 = vadd.f32 %v2927, %v3016
        %v3018 = vpop.f32.mrf.mxu0
        %v3019 = vadd.f32 %v2927, %v3018
        %3020 = vmatmul.bf16.gmra.mxu0 %v2900
        %v3021 = vpop.f32.mrf.mxu0
        %v3022 = vadd.f32 %v2927, %v3021
        %v3023 = vpop.f32.mrf.mxu0
        %v3024 = vadd.f32 %v2927, %v3023
        %3025 = vmatmul.bf16.gmra.mxu0 %v2901
        %v3026 = vpop.f32.mrf.mxu0
        %v3027 = vadd.f32 %v2927, %v3026
        %v3028 = vpop.f32.mrf.mxu0
        %v3029 = vadd.f32 %v2927, %v3028
        %3030 = vmatmul.bf16.gmra.mxu0 %v2902
        %v3031 = vpop.f32.mrf.mxu0
        %v3032 = vadd.f32 %v2927, %v3031
        %v3033 = vpop.f32.mrf.mxu0
        %v3034 = vadd.f32 %v2927, %v3033
        %3035 = vmatmul.bf16.gmra.mxu0 %v2903
        %v3036 = vpop.f32.mrf.mxu0
        %v3037 = vadd.f32 %v2927, %v3036
        %v3038 = vpop.f32.mrf.mxu0
        %v3039 = vadd.f32 %v2927, %v3038
        %3040 = vmatmul.bf16.gmra.mxu0 %v2904
        %v3041 = vpop.f32.mrf.mxu0
        %v3042 = vadd.f32 %v2927, %v3041
        %v3043 = vpop.f32.mrf.mxu0
        %v3044 = vadd.f32 %v2927, %v3043
        %3045 = vmatmul.bf16.gmra.mxu0 %v2905
        %v3046 = vpop.f32.mrf.mxu0
        %v3047 = vadd.f32 %v2927, %v3046
        %v3048 = vpop.f32.mrf.mxu0
        %v3049 = vadd.f32 %v2927, %v3048
        %3050 = vmatmul.bf16.gmra.mxu0 %v2906
        %v3051 = vpop.f32.mrf.mxu0
        %v3052 = vadd.f32 %v2927, %v3051
        %v3053 = vpop.f32.mrf.mxu0
        %v3054 = vadd.f32 %v2927, %v3053
        %3055 = vmatmul.bf16.gmra.mxu0 %v2907
        %v3056 = vpop.f32.mrf.mxu0
        %v3057 = vadd.f32 %v2927, %v3056
        %v3058 = vpop.f32.mrf.mxu0
        %v3059 = vadd.f32 %v2927, %v3058
        %3060 = vmatmul.bf16.gmra.mxu0 %v2908
        %v3061 = vpop.f32.mrf.mxu0
        %v3062 = vadd.f32 %v2927, %v3061
        %v3063 = vpop.f32.mrf.mxu0
        %v3064 = vadd.f32 %v2927, %v3063
        %3065 = vdwg.mxu0
        %v3066 = vunpack.c.l.bf16 %v375
        %v3067 = vunpack.c.l.bf16 %v376
        %v3068 = vunpack.c.l.bf16 %v377
        %v3069 = vunpack.c.l.bf16 %v378
        %v3070 = vunpack.c.l.bf16 %v379
        %v3071 = vunpack.c.l.bf16 %v380
        %v3072 = vunpack.c.l.bf16 %v381
        %v3073 = vunpack.c.l.bf16 %v382
        %v3074 = vunpack.c.l.bf16 %v383
        %v3075 = vunpack.c.l.bf16 %v384
        %v3076 = vunpack.c.l.bf16 %v385
        %v3077 = vunpack.c.l.bf16 %v386
        %v3078 = vunpack.c.l.bf16 %v387
        %v3079 = vunpack.c.l.bf16 %v388
        %v3080 = vunpack.c.l.bf16 %v389
        %v3081 = vunpack.c.l.bf16 %v390
        %v3082 = vunpack.c.l.bf16 %v391
        %v3083 = vunpack.c.l.bf16 %v392
        %v3084 = vunpack.c.l.bf16 %v393
        %v3085 = vunpack.c.l.bf16 %v394
        %v3086 = vunpack.c.l.bf16 %v395
        %v3087 = vunpack.c.l.bf16 %v396
        %v3088 = vunpack.c.l.bf16 %v397
        %v3089 = vunpack.c.l.bf16 %v398
        %v3090 = vunpack.c.l.bf16 %v399
        %v3091 = vunpack.c.l.bf16 %v400
        %v3092 = vunpack.c.l.bf16 %v401
        %v3093 = vunpack.c.l.bf16 %v402
        %v3094 = vunpack.c.l.bf16 %v403
        %v3095 = vunpack.c.l.bf16 %v404
        %v3096 = vunpack.c.l.bf16 %v405
        %v3097 = vunpack.c.l.bf16 %v406
        %v3098 = vadd.f32 %v2987, %v3066
        %v3099 = vadd.f32 %v2989, %v3067
        %v3100 = vadd.f32 %v2992, %v3068
        %v3101 = vadd.f32 %v2994, %v3069
        %v3102 = vadd.f32 %v2997, %v3070
        %v3103 = vadd.f32 %v2999, %v3071
        %v3104 = vadd.f32 %v3002, %v3072
        %v3105 = vadd.f32 %v3004, %v3073
        %v3106 = vadd.f32 %v3007, %v3074
        %v3107 = vadd.f32 %v3009, %v3075
        %v3108 = vadd.f32 %v3012, %v3076
        %v3109 = vadd.f32 %v3014, %v3077
        %v3110 = vadd.f32 %v3017, %v3078
        %v3111 = vadd.f32 %v3019, %v3079
        %v3112 = vadd.f32 %v3022, %v3080
        %v3113 = vadd.f32 %v3024, %v3081
        %v3114 = vadd.f32 %v3027, %v3082
        %v3115 = vadd.f32 %v3029, %v3083
        %v3116 = vadd.f32 %v3032, %v3084
        %v3117 = vadd.f32 %v3034, %v3085
        %v3118 = vadd.f32 %v3037, %v3086
        %v3119 = vadd.f32 %v3039, %v3087
        %v3120 = vadd.f32 %v3042, %v3088
        %v3121 = vadd.f32 %v3044, %v3089
        %v3122 = vadd.f32 %v3047, %v3090
        %v3123 = vadd.f32 %v3049, %v3091
        %v3124 = vadd.f32 %v3052, %v3092
        %v3125 = vadd.f32 %v3054, %v3093
        %v3126 = vadd.f32 %v3057, %v3094
        %v3127 = vadd.f32 %v3059, %v3095
        %v3128 = vadd.f32 %v3062, %v3096
        %v3129 = vadd.f32 %v3064, %v3097
        %v3130 = vmax.f32 %v3098, 0.0
        %v3131 = vmax.f32 %v3099, 0.0
        %v3132 = vmax.f32 %v3100, 0.0
        %v3133 = vmax.f32 %v3101, 0.0
        %v3134 = vmax.f32 %v3102, 0.0
        %v3135 = vmax.f32 %v3103, 0.0
        %v3136 = vmax.f32 %v3104, 0.0
        %v3137 = vmax.f32 %v3105, 0.0
        %v3138 = vmax.f32 %v3106, 0.0
        %v3139 = vmax.f32 %v3107, 0.0
        %v3140 = vmax.f32 %v3108, 0.0
        %v3141 = vmax.f32 %v3109, 0.0
        %v3142 = vmax.f32 %v3110, 0.0
        %v3143 = vmax.f32 %v3111, 0.0
        %v3144 = vmax.f32 %v3112, 0.0
        %v3145 = vmax.f32 %v3113, 0.0
        %v3146 = vmax.f32 %v3114, 0.0
        %v3147 = vmax.f32 %v3115, 0.0
        %v3148 = vmax.f32 %v3116, 0.0
        %v3149 = vmax.f32 %v3117, 0.0
        %v3150 = vmax.f32 %v3118, 0.0
        %v3151 = vmax.f32 %v3119, 0.0
        %v3152 = vmax.f32 %v3120, 0.0
        %v3153 = vmax.f32 %v3121, 0.0
        %v3154 = vmax.f32 %v3122, 0.0
        %v3155 = vmax.f32 %v3123, 0.0
        %v3156 = vmax.f32 %v3124, 0.0
        %v3157 = vmax.f32 %v3125, 0.0
        %v3158 = vmax.f32 %v3126, 0.0
        %v3159 = vmax.f32 %v3127, 0.0
        %v3160 = vmax.f32 %v3128, 0.0
        %v3161 = vmax.f32 %v3129, 0.0
        %v3162 = vpack.c.bf16 %v3130, %v3130
        %v3163 = vpack.c.bf16 %v3131, %v3131
        %v3164 = vpack.c.bf16 %v3132, %v3132
        %v3165 = vpack.c.bf16 %v3133, %v3133
        %v3166 = vpack.c.bf16 %v3134, %v3134
        %v3167 = vpack.c.bf16 %v3135, %v3135
        %v3168 = vpack.c.bf16 %v3136, %v3136
        %v3169 = vpack.c.bf16 %v3137, %v3137
        %v3170 = vpack.c.bf16 %v3138, %v3138
        %v3171 = vpack.c.bf16 %v3139, %v3139
        %v3172 = vpack.c.bf16 %v3140, %v3140
        %v3173 = vpack.c.bf16 %v3141, %v3141
        %v3174 = vpack.c.bf16 %v3142, %v3142
        %v3175 = vpack.c.bf16 %v3143, %v3143
        %v3176 = vpack.c.bf16 %v3144, %v3144
        %v3177 = vpack.c.bf16 %v3145, %v3145
        %v3178 = vpack.c.bf16 %v3146, %v3146
        %v3179 = vpack.c.bf16 %v3147, %v3147
        %v3180 = vpack.c.bf16 %v3148, %v3148
        %v3181 = vpack.c.bf16 %v3149, %v3149
        %v3182 = vpack.c.bf16 %v3150, %v3150
        %v3183 = vpack.c.bf16 %v3151, %v3151
        %v3184 = vpack.c.bf16 %v3152, %v3152
        %v3185 = vpack.c.bf16 %v3153, %v3153
        %v3186 = vpack.c.bf16 %v3154, %v3154
        %v3187 = vpack.c.bf16 %v3155, %v3155
        %v3188 = vpack.c.bf16 %v3156, %v3156
        %v3189 = vpack.c.bf16 %v3157, %v3157
        %v3190 = vpack.c.bf16 %v3158, %v3158
        %v3191 = vpack.c.bf16 %v3159, %v3159
        %v3192 = vpack.c.bf16 %v3160, %v3160
        %v3193 = vpack.c.bf16 %v3161, %v3161
        %3194 = vst [vmem:[%s362] sm:$0xf] %v3162
        %3195 = vst [vmem:[%s362 + $0x4] sm:$0xf] %v3163
        %3196 = vst [vmem:[%s362 + $0x8] sm:$0xf] %v3164
        %3197 = vst [vmem:[%s362 + $0xc] sm:$0xf] %v3165
        %3198 = vst [vmem:[%s362 + $0x10] sm:$0xf] %v3166
        %3199 = vst [vmem:[%s362 + $0x14] sm:$0xf] %v3167
        %3200 = vst [vmem:[%s362 + $0x18] sm:$0xf] %v3168
        %3201 = vst [vmem:[%s362 + $0x1c] sm:$0xf] %v3169
        %3202 = vst [vmem:[%s362 + $0x20] sm:$0xf] %v3170
        %3203 = vst [vmem:[%s362 + $0x24] sm:$0xf] %v3171
        %3204 = vst [vmem:[%s362 + $0x28] sm:$0xf] %v3172
        %3205 = vst [vmem:[%s362 + $0x2c] sm:$0xf] %v3173
        %3206 = vst [vmem:[%s362 + $0x30] sm:$0xf] %v3174
        %3207 = vst [vmem:[%s362 + $0x34] sm:$0xf] %v3175
        %3208 = vst [vmem:[%s362 + $0x38] sm:$0xf] %v3176
        %3209 = vst [vmem:[%s362 + $0x3c] sm:$0xf] %v3177
        %3210 = vst [vmem:[%s362 + $0x40] sm:$0xf] %v3178
        %3211 = vst [vmem:[%s362 + $0x44] sm:$0xf] %v3179
        %3212 = vst [vmem:[%s362 + $0x48] sm:$0xf] %v3180
        %3213 = vst [vmem:[%s362 + $0x4c] sm:$0xf] %v3181
        %3214 = vst [vmem:[%s362 + $0x50] sm:$0xf] %v3182
        %3215 = vst [vmem:[%s362 + $0x54] sm:$0xf] %v3183
        %3216 = vst [vmem:[%s362 + $0x58] sm:$0xf] %v3184
        %3217 = vst [vmem:[%s362 + $0x5c] sm:$0xf] %v3185
        %3218 = vst [vmem:[%s362 + $0x60] sm:$0xf] %v3186
        %3219 = vst [vmem:[%s362 + $0x64] sm:$0xf] %v3187
        %3220 = vst [vmem:[%s362 + $0x68] sm:$0xf] %v3188
        %3221 = vst [vmem:[%s362 + $0x6c] sm:$0xf] %v3189
        %3222 = vst [vmem:[%s362 + $0x70] sm:$0xf] %v3190
        %3223 = vst [vmem:[%s362 + $0x74] sm:$0xf] %v3191
        %3224 = vst [vmem:[%s362 + $0x78] sm:$0xf] %v3192
        %3225 = vst [vmem:[%s362 + $0x7c] sm:$0xf] %v3193
        %s3226 = sand.u32 %s200, 1
        %s3227 = scalar_lea.sflag [#allocation5], %s3226
        %s3228 = sand.u32 %s200, 1
        %s3229 = smul.addr %s3228, 128
        %s3230 = scalar_lea.vmem [#allocation11], %s3229
        // Predicated region
        $region69: #{tpu_custom_call.1} parent=47 // pred_check
          %p3231 = pneg %p210
        $region70: #{tpu_custom_call.1} parent=47 // pred_check_branch
          %3233 = sbr.rel (%p3231) target = $region72
        $region71: #{tpu_custom_call.1} parent=47 // pred_region
          %s3234 = smul.u32 16, %s31
          %3236 = vsyncadd %s3227, 0
          %s3237 = smul.addr %s3234, 2
          %s3238 = smul.addr %s30, 32
          %s3239 = sadd.s32 %s3237, %s3238
          %s3240 = smul.addr %s3239, 4
          %s3241 = scalar_lea.hbm %s7, %s3240
          %s3242 = sshll.u32 %s3230, 4
          %s3243 = int_to_ptr.vmem [resolvable:$true] %s3242
          %s3244 = sshll.u32 %s3241, 4
          %s3245 = int_to_ptr.hbm [resolvable:$true] %s3244
          %3250 = dma.vmem_to_hbm [thread:$0]  %s3243, 2048, %s3245, %s3227, 64, 64, 4
        $region72: #{tpu_custom_call.1} parent=47 // pred_fallthru
          _
      $region48: #{tpu_custom_call.1} parent=5 // pred_fallthru
        _
      %p3251 = scmp.le.s32.totalorder 2, %s21
      // Predicated region
      $region73: #{tpu_custom_call.1} parent=5 // pred_check
        %p3252 = pneg %p3251
      $region74: #{tpu_custom_call.1} parent=5 // pred_check_branch
        %3254 = sbr.rel (%p3252) target = $region76
      $region75: #{tpu_custom_call.1} parent=5 // pred_region
        %s3255 = ssub.s32 %s21, 2
        // Predicated region
        $region77: #{tpu_custom_call.1} parent=75 // pred_check
          %p3256 = pneg %p216
        $region78: #{tpu_custom_call.1} parent=75 // pred_check_branch
          %3258 = sbr.rel (%p3256) target = $region80
        $region79: #{tpu_custom_call.1} parent=75 // pred_region
          %s3259 = sand.u32 %s201, 1
          %s3260 = scalar_lea.sflag [#allocation5], %s3259
          %s3261 = sand.u32 %s201, 1
          %s3262 = smul.addr %s3261, 128
          %s3263 = scalar_lea.vmem [#allocation11], %s3262
          %3265 = dma.done %s3260, 2048
        $region80: #{tpu_custom_call.1} parent=75 // pred_fallthru
          _
      $region76: #{tpu_custom_call.1} parent=5 // pred_fallthru
        _
    $region6: #{tpu_custom_call.1} parent=1 // loop_footer
      %s25 = sadd.s32 1, %s21
    $region7: #{tpu_custom_call.1} parent=1 // loop_footer_branch
      %20 = sbr.rel target = $region3
    $region8: #{tpu_custom_call.1} parent=1 // loop_exit
      _
    %3266 = vsyncpa [#allocation4], 1
    %s3267 = scalar_lea.sflag [#allocation4], 1
    %3268 = vsyncpa %s3267, 1
    %3269 = vsyncpa [#allocation7], 1
    %3270 = vsyncpa [#allocation10], 1
    %3271 = vsyncpa [#allocation5], 1
    %s3272 = scalar_lea.sflag [#allocation5], 1
    %3273 = vsyncpa %s3272, 1

</llo_original>
